<compile_context>
chip_gen: v7x
topology: tpu7x:2x2x1
jax: 0.10.0
libtpu: 0.0.40
codegen_flags: <defaults>
</compile_context>

<pallas_src>
import functools

import jax
import jax.numpy as jnp
from jax import lax
from jax.experimental import pallas as pl
from jax.experimental.pallas import tpu as pltpu

EPS = 1e-5
_VMEM_LIMIT = 32 * 1024 * 1024  # safe on v5e/v6e/v7x


# ------------------------------------------------------------------ kernels --

def _accumulate_stats(stats_ref, o, first):
    """stats_ref is a (2, C) accumulator: row 0 = sum, row 1 = sum of squares."""
    @pl.when(first)
    def _():
        stats_ref[...] = jnp.zeros_like(stats_ref)
    stats_ref[...] += jnp.concatenate(
        [jnp.sum(o, axis=0, keepdims=True),
         jnp.sum(o * o, axis=0, keepdims=True)], axis=0)


def _conv1x1_stats_kernel(x_ref, w_ref, o_ref, stats_ref, *, compute_dtype):
    """o = x @ w (1x1 conv); accumulate per-channel sum / sumsq of o."""
    b = pl.program_id(0)
    _, H, W, C = x_ref.shape
    x2 = x_ref[...].reshape(H * W, C)
    o = jnp.dot(x2.astype(compute_dtype), w_ref[...].astype(compute_dtype),
                preferred_element_type=jnp.float32)
    _accumulate_stats(stats_ref, o, b == 0)
    o_ref[...] = o.reshape(1, H, W, -1)


def _act_conv1x1_stats_kernel(y_ref, scale_ref, shift_ref, w_ref,
                              o_ref, stats_ref, *, compute_dtype):
    """o = relu(y*scale + shift) @ w; accumulate per-channel sum / sumsq of o."""
    b = pl.program_id(0)
    _, H, W, C = y_ref.shape
    y2 = y_ref[...].reshape(H * W, C)
    z = jnp.maximum(y2 * scale_ref[...] + shift_ref[...], 0.0)   # BN apply: fused FMA
    o = jnp.dot(z.astype(compute_dtype), w_ref[...].astype(compute_dtype),
                preferred_element_type=jnp.float32)
    _accumulate_stats(stats_ref, o, b == 0)
    o_ref[...] = o.reshape(1, H, W, -1)


def _act_conv3x3_stats_kernel(y_ref, scale_ref, shift_ref, w_ref,
                              o_ref, stats_ref, zpad_ref, *, compute_dtype):
    """z = relu(y*scale+shift); o = conv3x3(z, pad=1) as ONE im2col MXU dot
    (K = 9*C) built from a padded VMEM scratch; accumulate sum / sumsq of o."""
    b = pl.program_id(0)
    _, H, W, C = y_ref.shape
    z = jnp.maximum(y_ref[...].reshape(H * W, C) * scale_ref[...] + shift_ref[...], 0.0)

    # Zero the pad border once (scratch persists across grid steps; grid axis is
    # "arbitrary" => sequential), then overwrite the interior every step.
    @pl.when(b == 0)
    def _():
        zpad_ref[...] = jnp.zeros_like(zpad_ref)
    zpad_ref[1:H + 1, 1:W + 1, :] = z.reshape(H, W, C)

    zp = zpad_ref[...]                                   # (H+2, W+2, C), one load
    patches = jnp.concatenate(                            # im2col: (H, W, 9*C)
        [zp[dy:dy + H, dx:dx + W, :] for dy in range(3) for dx in range(3)],
        axis=-1).reshape(H * W, 9 * C)
    o = jnp.dot(patches.astype(compute_dtype), w_ref[...].astype(compute_dtype),
                preferred_element_type=jnp.float32)       # single dot, K = 9*C
    _accumulate_stats(stats_ref, o, b == 0)
    o_ref[...] = o.reshape(1, H, W, -1)


def _bn_add_relu_kernel(o_ref, x_ref, scale_ref, shift_ref, out_ref):
    """out = relu(o*scale + shift + identity)."""
    _, H, W, C = o_ref.shape
    o = o_ref[...].reshape(H * W, C)
    x = x_ref[...].reshape(H * W, C)
    out = jnp.maximum(o * scale_ref[...] + shift_ref[...] + x, 0.0)
    out_ref[...] = out.reshape(1, H, W, C)


# ------------------------------------------------------------------ wrapper --

def bottleneck_forward_nhwc(x, p, compute_dtype=jnp.float32):
    """x: (N, H, W, Cin) float32, NHWC (native layout; avoids transpose passes)."""
    N, H, W, Cin = x.shape
    w1 = p['w1'].astype(jnp.float32)                       # (Cin, width)
    w2 = p['w2'].astype(jnp.float32)                       # (3, 3, width, width) HWIO
    w3 = p['w3'].astype(jnp.float32)                       # (width, cout)
    width, cout = w1.shape[1], w3.shape[1]
    w2_flat = w2.reshape(9 * width, width)                 # (dy, dx, cin) flattened once
    count = N * H * W

    def img_spec(C):
        return pl.BlockSpec((1, H, W, C), lambda b: (b, 0, 0, 0))

    def full(arr):
        return pl.BlockSpec(arr.shape, lambda b, _nd=arr.ndim: (0,) * _nd)

    def stats_spec(C):                                     # accumulator block
        return pl.BlockSpec((2, C), lambda b: (0, 0))

    def cost(flops, nbytes):
        return pl.CostEstimate(flops=int(flops), transcendentals=0,
                               bytes_accessed=int(nbytes))

    # Stats accumulation forces sequential grid traversal on stages 1-3.
    seq = pltpu.CompilerParams(dimension_semantics=("arbitrary",),
                               vmem_limit_bytes=_VMEM_LIMIT)
    par = pltpu.CompilerParams(dimension_semantics=("parallel",),
                               vmem_limit_bytes=_VMEM_LIMIT)

    def affine(stats, gamma, beta):
        # single-pass stats -> per-channel scale/shift (biased variance, train-mode BN)
        mean = stats[0] / count
        var = stats[1] / count - mean * mean
        inv = gamma.reshape(-1).astype(jnp.float32) * lax.rsqrt(var + EPS)
        shift = beta.reshape(-1).astype(jnp.float32) - mean * inv
        return inv.reshape(1, -1), shift.reshape(1, -1)

    x = x.astype(jnp.float32)

    # --- stage 1: conv1 (1x1) + stats of o1 ---------------------------------
    o1, st1 = pl.pallas_call(
        functools.partial(_conv1x1_stats_kernel, compute_dtype=compute_dtype),
        grid=(N,),
        in_specs=[img_spec(Cin), full(w1)],
        out_specs=(img_spec(width), stats_spec(width)),
        out_shape=(jax.ShapeDtypeStruct((N, H, W, width), jnp.float32),
                   jax.ShapeDtypeStruct((2, width), jnp.float32)),
        compiler_params=seq,
        cost_estimate=cost(2 * count * Cin * width,
                           4 * (count * (Cin + width) + w1.size)),
    )(x, w1)
    s1, t1 = affine(st1, p['g1'], p['b1'])

    # --- stage 2: bn1+relu -> conv3x3 (fused im2col dot) + stats of o2 ------
    o2, st2 = pl.pallas_call(
        functools.partial(_act_conv3x3_stats_kernel, compute_dtype=compute_dtype),
        grid=(N,),
        in_specs=[img_spec(width), full(s1), full(t1), full(w2_flat)],
        out_specs=(img_spec(width), stats_spec(width)),
        out_shape=(jax.ShapeDtypeStruct((N, H, W, width), jnp.float32),
                   jax.ShapeDtypeStruct((2, width), jnp.float32)),
        scratch_shapes=[pltpu.VMEM((H + 2, W + 2, width), jnp.float32)],
        compiler_params=seq,
        cost_estimate=cost(2 * count * 9 * width * width,
                           4 * (2 * count * width + w2_flat.size)),
    )(o1, s1, t1, w2_flat)
    s2, t2 = affine(st2, p['g2'], p['b2'])

    # --- stage 3: bn2+relu -> conv3 (1x1) + stats of o3 ----------------------
    o3, st3 = pl.pallas_call(
        functools.partial(_act_conv1x1_stats_kernel, compute_dtype=compute_dtype),
        grid=(N,),
        in_specs=[img_spec(width), full(s2), full(t2), full(w3)],
        out_specs=(img_spec(cout), stats_spec(cout)),
        out_shape=(jax.ShapeDtypeStruct((N, H, W, cout), jnp.float32),
                   jax.ShapeDtypeStruct((2, cout), jnp.float32)),
        compiler_params=seq,
        cost_estimate=cost(2 * count * width * cout,
                           4 * (count * (width + cout) + w3.size)),
    )(o2, s2, t2, w3)
    s3, t3 = affine(st3, p['g3'], p['b3'])

    # --- stage 4: bn3 -> residual add -> relu --------------------------------
    out = pl.pallas_call(
        _bn_add_relu_kernel,
        grid=(N,),
        in_specs=[img_spec(cout), img_spec(cout), full(s3), full(t3)],
        out_specs=img_spec(cout),
        out_shape=jax.ShapeDtypeStruct((N, H, W, cout), jnp.float32),
        compiler_params=par,
        cost_estimate=cost(3 * count * cout, 4 * 3 * count * cout),
    )(o3, x, s3, t3)
    return out


@functools.partial(jax.jit, static_argnames=("compute_dtype",))
def bottleneck_forward(x_nchw, p, compute_dtype=jnp.float32):
    # Compatibility shim for PyTorch's NCHW convention.  Real deployments should
    # keep activations NHWC end-to-end and call bottleneck_forward_nhwc directly
    # (these two transposes are each a full HBM read+write pass).
    x = jnp.transpose(x_nchw, (0, 2, 3, 1))
    out = bottleneck_forward_nhwc(x, p, compute_dtype=compute_dtype)
    return jnp.transpose(out, (0, 3, 1, 2))


# ---------------------------------------------------------------- reference --

def bottleneck_reference(x_nchw, p):
    """Pure-JAX reference (same math, XLA convs) for verification. NCHW in/out."""
    x = jnp.transpose(x_nchw, (0, 2, 3, 1))

    def bn(y, g, b):
        m = y.mean(axis=(0, 1, 2), keepdims=True)
        v = ((y - m) ** 2).mean(axis=(0, 1, 2), keepdims=True)
        return (y - m) / jnp.sqrt(v + EPS) * g.reshape(1, 1, 1, -1) \
            + b.reshape(1, 1, 1, -1)

    o = jnp.einsum('nhwc,co->nhwo', x, p['w1'])
    o = jax.nn.relu(bn(o, p['g1'], p['b1']))
    o = lax.conv_general_dilated(o, p['w2'], (1, 1), ((1, 1), (1, 1)),
                                 dimension_numbers=('NHWC', 'HWIO', 'NHWC'))
    o = jax.nn.relu(bn(o, p['g2'], p['b2']))
    o = jnp.einsum('nhwc,co->nhwo', o, p['w3'])
    o = bn(o, p['g3'], p['b3'])
    out = jax.nn.relu(o + x)
    return jnp.transpose(out, (0, 3, 1, 2))


if __name__ == "__main__":
    # Bottleneck(inplanes=16, planes=4): width = 4, out channels = 16,
    # stride=1, groups=1, dilation=1, downsample=None (identity path valid since
    # inplanes == planes * expansion).  Real ResNet widths (64/256) are lane-dense;
    # the kernels handle either.
    inplanes, planes = 16, 4
    width = planes                    # int(planes * (64 / 64.0)) * 1
    cout = planes * 4

    key = jax.random.PRNGKey(0)
    ks = jax.random.split(key, 10)
    params = dict(
        w1=jax.random.normal(ks[0], (inplanes, width), jnp.float32) * 0.1,
        g1=jax.random.uniform(ks[1], (width,), jnp.float32, 0.5, 1.5),
        b1=jax.random.normal(ks[2], (width,), jnp.float32) * 0.1,
        w2=jax.random.normal(ks[3], (3, 3, width, width), jnp.float32) * 0.1,  # HWIO
        g2=jax.random.uniform(ks[4], (width,), jnp.float32, 0.5, 1.5),
        b2=jax.random.normal(ks[5], (width,), jnp.float32) * 0.1,
        w3=jax.random.normal(ks[6], (width, cout), jnp.float32) * 0.1,
        g3=jax.random.uniform(ks[7], (cout,), jnp.float32, 0.5, 1.5),
        b3=jax.random.normal(ks[8], (cout,), jnp.float32) * 0.1,
    )
    x = jax.random.normal(ks[9], (2, inplanes, 16, 16), jnp.float32)  # NCHW

    ref = jax.block_until_ready(bottleneck_reference(x, params))

    # f32 path: tight tolerance vs reference.
    out = jax.block_until_ready(bottleneck_forward(x, params))
    assert out.shape == x.shape, (out.shape, x.shape)
    assert bool(jnp.allclose(out, ref, atol=2e-3, rtol=2e-3)), \
        float(jnp.max(jnp.abs(out - ref)))

    # bf16 MXU-operand path (recommended on v6e/v7x); f32 accumulation + f32 BN.
    out_bf16 = jax.block_until_ready(
        bottleneck_forward(x, params, compute_dtype=jnp.bfloat16))
    assert bool(jnp.allclose(out_bf16, ref, atol=5e-2, rtol=5e-2)), \
        float(jnp.max(jnp.abs(out_bf16 - ref)))

    print("KERNEL_OK")
</pallas_src>

<mosaic_0001>
module attributes {stable_mosaic.version = 11 : i64} {
  func.func @_conv1x1_stats_kernel(%arg0: i32, %arg1: memref<1x16x16x16xf32, #tpu.memory_space<vmem>>, %arg2: memref<16x4xf32, #tpu.memory_space<vmem>>, %arg3: memref<1x16x16x4xf32, #tpu.memory_space<vmem>>, %arg4: memref<2x4xf32, #tpu.memory_space<vmem>>) attributes {dimension_semantics = [#tpu.dimension_semantics<arbitrary>], iteration_bounds = array<i64: 2>, scalar_prefetch = 0 : i64, scratch_operands = 0 : i64, tpu.core_type = #tpu.core_type<tc>, window_params = [{transform_indices = @transform_0, window_bounds = array<i64: 1, 16, 16, 16>}, {pipeline_mode = #tpu.pipeline_mode<synchronous>, transform_indices = @transform_1, window_bounds = array<i64: 16, 4>}, {transform_indices = @transform_2, window_bounds = array<i64: 1, 16, 16, 4>}, {pipeline_mode = #tpu.pipeline_mode<synchronous>, transform_indices = @transform_3, window_bounds = array<i64: 2, 4>}]} {
    %c0 = arith.constant 0 : index
    %c0_0 = arith.constant 0 : index
    %c0_1 = arith.constant 0 : index
    %c0_2 = arith.constant 0 : index
    %0 = vector.load %arg1[%c0, %c0_0, %c0_1, %c0_2] : memref<1x16x16x16xf32, #tpu.memory_space<vmem>>, vector<1x16x16x16xf32>
    %1 = vector.shape_cast %0 : vector<1x16x16x16xf32> to vector<256x16xf32>
    %c0_3 = arith.constant 0 : index
    %c0_4 = arith.constant 0 : index
    %2 = vector.load %arg2[%c0_3, %c0_4] : memref<16x4xf32, #tpu.memory_space<vmem>>, vector<16x4xf32>
    %cst = arith.constant dense<0.000000e+00> : vector<256x4xf32>
    %3 = tpu.matmul %1, %2, %cst {dimension_numbers = #tpu.dot_dimension_numbers<[1], [0], [0], [1], [0, 0, 1, 1], [], []>} : vector<256x16xf32>, vector<16x4xf32>, vector<256x4xf32> -> vector<256x4xf32>
    %c0_i32 = arith.constant 0 : i32
    %4 = arith.cmpi eq, %arg0, %c0_i32 : i32
    %5 = arith.extui %4 : i1 to i32
    %c0_i32_5 = arith.constant 0 : i32
    %6 = arith.cmpi ne, %5, %c0_i32_5 : i32
    scf.if %6 {
      %cst_16 = arith.constant 0.000000e+00 : f32
      %18 = vector.broadcast %cst_16 : f32 to vector<2x4xf32>
      %c0_17 = arith.constant 0 : index
      %c0_18 = arith.constant 0 : index
      %19 = vector.load %arg4[%c0_17, %c0_18] : memref<2x4xf32, #tpu.memory_space<vmem>>, vector<2x4xf32>
      tpu.vector_store %arg4[%c0_17, %c0_18], %18 {strides = array<i32>} : memref<2x4xf32, #tpu.memory_space<vmem>>, vector<2x4xf32>,
    } else {
    }
    %c0_6 = arith.constant 0 : index
    %c0_7 = arith.constant 0 : index
    %7 = vector.load %arg4[%c0_6, %c0_7] : memref<2x4xf32, #tpu.memory_space<vmem>>, vector<2x4xf32>
    %cst_8 = arith.constant dense<0.000000e+00> : vector<4xf32>
    %8 = vector.multi_reduction <add>, %3, %cst_8 [0] : vector<256x4xf32> to vector<4xf32>
    %9 = vector.shape_cast %8 : vector<4xf32> to vector<1x4xf32>
    %10 = arith.mulf %3, %3 : vector<256x4xf32>
    %cst_9 = arith.constant dense<0.000000e+00> : vector<4xf32>
    %11 = vector.multi_reduction <add>, %10, %cst_9 [0] : vector<256x4xf32> to vector<4xf32>
    %12 = vector.shape_cast %11 : vector<4xf32> to vector<1x4xf32>
    %13 = tpu.concatenate %9, %12 in 0 : vector<1x4xf32>, vector<1x4xf32> -> vector<2x4xf32>
    %14 = arith.addf %7, %13 : vector<2x4xf32>
    %c0_10 = arith.constant 0 : index
    %c0_11 = arith.constant 0 : index
    %15 = vector.load %arg4[%c0_10, %c0_11] : memref<2x4xf32, #tpu.memory_space<vmem>>, vector<2x4xf32>
    tpu.vector_store %arg4[%c0_10, %c0_11], %14 {strides = array<i32>} : memref<2x4xf32, #tpu.memory_space<vmem>>, vector<2x4xf32>,
    %16 = vector.shape_cast %3 : vector<256x4xf32> to vector<1x16x16x4xf32>
    %c0_12 = arith.constant 0 : index
    %c0_13 = arith.constant 0 : index
    %c0_14 = arith.constant 0 : index
    %c0_15 = arith.constant 0 : index
    %17 = vector.load %arg3[%c0_12, %c0_13, %c0_14, %c0_15] : memref<1x16x16x4xf32, #tpu.memory_space<vmem>>, vector<1x16x16x4xf32>
    tpu.vector_store %arg3[%c0_12, %c0_13, %c0_14, %c0_15], %16 {strides = array<i32>} : memref<1x16x16x4xf32, #tpu.memory_space<vmem>>, vector<1x16x16x4xf32>,
    return
  }
  func.func @transform_0(%arg0: i32) -> (i32, i32, i32, i32) {
    %c0_i32 = arith.constant 0 : i32
    %c0_i32_0 = arith.constant 0 : i32
    %c0_i32_1 = arith.constant 0 : i32
    %c0_i32_2 = arith.constant 0 : i32
    return %arg0, %c0_i32, %c0_i32_0, %c0_i32_1 : i32, i32, i32, i32
  }
  func.func @transform_1(%arg0: i32) -> (i32, i32) {
    %c0_i32 = arith.constant 0 : i32
    %c0_i32_0 = arith.constant 0 : i32
    %c0_i32_1 = arith.constant 0 : i32
    return %c0_i32, %c0_i32_0 : i32, i32
  }
  func.func @transform_2(%arg0: i32) -> (i32, i32, i32, i32) {
    %c0_i32 = arith.constant 0 : i32
    %c0_i32_0 = arith.constant 0 : i32
    %c0_i32_1 = arith.constant 0 : i32
    %c0_i32_2 = arith.constant 0 : i32
    return %arg0, %c0_i32, %c0_i32_0, %c0_i32_1 : i32, i32, i32, i32
  }
  func.func @transform_3(%arg0: i32) -> (i32, i32) {
    %c0_i32 = arith.constant 0 : i32
    %c0_i32_0 = arith.constant 0 : i32
    %c0_i32_1 = arith.constant 0 : i32
    return %c0_i32, %c0_i32_0 : i32, i32
  }
}

module attributes {stable_mosaic.version = 11 : i64} {
  func.func @_act_conv1x1_stats_kernel(%arg0: i32, %arg1: memref<1x16x16x4xf32, #tpu.memory_space<vmem>>, %arg2: memref<1x4xf32, #tpu.memory_space<vmem>>, %arg3: memref<1x4xf32, #tpu.memory_space<vmem>>, %arg4: memref<4x16xf32, #tpu.memory_space<vmem>>, %arg5: memref<1x16x16x16xf32, #tpu.memory_space<vmem>>, %arg6: memref<2x16xf32, #tpu.memory_space<vmem>>) attributes {dimension_semantics = [#tpu.dimension_semantics<arbitrary>], iteration_bounds = array<i64: 2>, scalar_prefetch = 0 : i64, scratch_operands = 0 : i64, tpu.core_type = #tpu.core_type<tc>, window_params = [{transform_indices = @transform_0, window_bounds = array<i64: 1, 16, 16, 4>}, {pipeline_mode = #tpu.pipeline_mode<synchronous>, transform_indices = @transform_1, window_bounds = array<i64: 1, 4>}, {pipeline_mode = #tpu.pipeline_mode<synchronous>, transform_indices = @transform_2, window_bounds = array<i64: 1, 4>}, {pipeline_mode = #tpu.pipeline_mode<synchronous>, transform_indices = @transform_3, window_bounds = array<i64: 4, 16>}, {transform_indices = @transform_4, window_bounds = array<i64: 1, 16, 16, 16>}, {pipeline_mode = #tpu.pipeline_mode<synchronous>, transform_indices = @transform_5, window_bounds = array<i64: 2, 16>}]} {
    %c0 = arith.constant 0 : index
    %c0_0 = arith.constant 0 : index
    %c0_1 = arith.constant 0 : index
    %c0_2 = arith.constant 0 : index
    %0 = vector.load %arg1[%c0, %c0_0, %c0_1, %c0_2] : memref<1x16x16x4xf32, #tpu.memory_space<vmem>>, vector<1x16x16x4xf32>
    %1 = vector.shape_cast %0 : vector<1x16x16x4xf32> to vector<256x4xf32>
    %c0_3 = arith.constant 0 : index
    %c0_4 = arith.constant 0 : index
    %2 = vector.load %arg2[%c0_3, %c0_4] : memref<1x4xf32, #tpu.memory_space<vmem>>, vector<1x4xf32>
    %3 = vector.broadcast %2 : vector<1x4xf32> to vector<256x4xf32>
    %4 = arith.mulf %1, %3 : vector<256x4xf32>
    %c0_5 = arith.constant 0 : index
    %c0_6 = arith.constant 0 : index
    %5 = vector.load %arg3[%c0_5, %c0_6] : memref<1x4xf32, #tpu.memory_space<vmem>>, vector<1x4xf32>
    %6 = vector.broadcast %5 : vector<1x4xf32> to vector<256x4xf32>
    %7 = arith.addf %4, %6 : vector<256x4xf32>
    %cst = arith.constant 0.000000e+00 : f32
    %8 = vector.broadcast %cst : f32 to vector<256x4xf32>
    %9 = arith.maximumf %7, %8 : vector<256x4xf32>
    %c0_7 = arith.constant 0 : index
    %c0_8 = arith.constant 0 : index
    %10 = vector.load %arg4[%c0_7, %c0_8] : memref<4x16xf32, #tpu.memory_space<vmem>>, vector<4x16xf32>
    %cst_9 = arith.constant dense<0.000000e+00> : vector<256x16xf32>
    %11 = tpu.matmul %9, %10, %cst_9 {dimension_numbers = #tpu.dot_dimension_numbers<[1], [0], [0], [1], [0, 0, 1, 1], [], []>} : vector<256x4xf32>, vector<4x16xf32>, vector<256x16xf32> -> vector<256x16xf32>
    %c0_i32 = arith.constant 0 : i32
    %12 = arith.cmpi eq, %arg0, %c0_i32 : i32
    %13 = arith.extui %12 : i1 to i32
    %c0_i32_10 = arith.constant 0 : i32
    %14 = arith.cmpi ne, %13, %c0_i32_10 : i32
    scf.if %14 {
      %cst_21 = arith.constant 0.000000e+00 : f32
      %26 = vector.broadcast %cst_21 : f32 to vector<2x16xf32>
      %c0_22 = arith.constant 0 : index
      %c0_23 = arith.constant 0 : index
      %27 = vector.load %arg6[%c0_22, %c0_23] : memref<2x16xf32, #tpu.memory_space<vmem>>, vector<2x16xf32>
      tpu.vector_store %arg6[%c0_22, %c0_23], %26 {strides = array<i32>} : memref<2x16xf32, #tpu.memory_space<vmem>>, vector<2x16xf32>,
    } else {
    }
    %c0_11 = arith.constant 0 : index
    %c0_12 = arith.constant 0 : index
    %15 = vector.load %arg6[%c0_11, %c0_12] : memref<2x16xf32, #tpu.memory_space<vmem>>, vector<2x16xf32>
    %cst_13 = arith.constant dense<0.000000e+00> : vector<16xf32>
    %16 = vector.multi_reduction <add>, %11, %cst_13 [0] : vector<256x16xf32> to vector<16xf32>
    %17 = vector.shape_cast %16 : vector<16xf32> to vector<1x16xf32>
    %18 = arith.mulf %11, %11 : vector<256x16xf32>
    %cst_14 = arith.constant dense<0.000000e+00> : vector<16xf32>
    %19 = vector.multi_reduction <add>, %18, %cst_14 [0] : vector<256x16xf32> to vector<16xf32>
    %20 = vector.shape_cast %19 : vector<16xf32> to vector<1x16xf32>
    %21 = tpu.concatenate %17, %20 in 0 : vector<1x16xf32>, vector<1x16xf32> -> vector<2x16xf32>
    %22 = arith.addf %15, %21 : vector<2x16xf32>
    %c0_15 = arith.constant 0 : index
    %c0_16 = arith.constant 0 : index
    %23 = vector.load %arg6[%c0_15, %c0_16] : memref<2x16xf32, #tpu.memory_space<vmem>>, vector<2x16xf32>
    tpu.vector_store %arg6[%c0_15, %c0_16], %22 {strides = array<i32>} : memref<2x16xf32, #tpu.memory_space<vmem>>, vector<2x16xf32>,
    %24 = vector.shape_cast %11 : vector<256x16xf32> to vector<1x16x16x16xf32>
    %c0_17 = arith.constant 0 : index
    %c0_18 = arith.constant 0 : index
    %c0_19 = arith.constant 0 : index
    %c0_20 = arith.constant 0 : index
    %25 = vector.load %arg5[%c0_17, %c0_18, %c0_19, %c0_20] : memref<1x16x16x16xf32, #tpu.memory_space<vmem>>, vector<1x16x16x16xf32>
    tpu.vector_store %arg5[%c0_17, %c0_18, %c0_19, %c0_20], %24 {strides = array<i32>} : memref<1x16x16x16xf32, #tpu.memory_space<vmem>>, vector<1x16x16x16xf32>,
    return
  }
  func.func @transform_0(%arg0: i32) -> (i32, i32, i32, i32) {
    %c0_i32 = arith.constant 0 : i32
    %c0_i32_0 = arith.constant 0 : i32
    %c0_i32_1 = arith.constant 0 : i32
    %c0_i32_2 = arith.constant 0 : i32
    return %arg0, %c0_i32, %c0_i32_0, %c0_i32_1 : i32, i32, i32, i32
  }
  func.func @transform_1(%arg0: i32) -> (i32, i32) {
    %c0_i32 = arith.constant 0 : i32
    %c0_i32_0 = arith.constant 0 : i32
    %c0_i32_1 = arith.constant 0 : i32
    return %c0_i32, %c0_i32_0 : i32, i32
  }
  func.func @transform_2(%arg0: i32) -> (i32, i32) {
    %c0_i32 = arith.constant 0 : i32
    %c0_i32_0 = arith.constant 0 : i32
    %c0_i32_1 = arith.constant 0 : i32
    return %c0_i32, %c0_i32_0 : i32, i32
  }
  func.func @transform_3(%arg0: i32) -> (i32, i32) {
    %c0_i32 = arith.constant 0 : i32
    %c0_i32_0 = arith.constant 0 : i32
    %c0_i32_1 = arith.constant 0 : i32
    return %c0_i32, %c0_i32_0 : i32, i32
  }
  func.func @transform_4(%arg0: i32) -> (i32, i32, i32, i32) {
    %c0_i32 = arith.constant 0 : i32
    %c0_i32_0 = arith.constant 0 : i32
    %c0_i32_1 = arith.constant 0 : i32
    %c0_i32_2 = arith.constant 0 : i32
    return %arg0, %c0_i32, %c0_i32_0, %c0_i32_1 : i32, i32, i32, i32
  }
  func.func @transform_5(%arg0: i32) -> (i32, i32) {
    %c0_i32 = arith.constant 0 : i32
    %c0_i32_0 = arith.constant 0 : i32
    %c0_i32_1 = arith.constant 0 : i32
    return %c0_i32, %c0_i32_0 : i32, i32
  }
}

module attributes {stable_mosaic.version = 11 : i64} {
  func.func @_act_conv3x3_stats_kernel(%arg0: i32, %arg1: memref<1x16x16x4xf32, #tpu.memory_space<vmem>>, %arg2: memref<1x4xf32, #tpu.memory_space<vmem>>, %arg3: memref<1x4xf32, #tpu.memory_space<vmem>>, %arg4: memref<36x4xf32, #tpu.memory_space<vmem>>, %arg5: memref<1x16x16x4xf32, #tpu.memory_space<vmem>>, %arg6: memref<2x4xf32, #tpu.memory_space<vmem>>, %arg7: memref<18x18x4xf32, #tpu.memory_space<vmem>>) attributes {dimension_semantics = [#tpu.dimension_semantics<arbitrary>], iteration_bounds = array<i64: 2>, scalar_prefetch = 0 : i64, scratch_operands = 1 : i64, tpu.core_type = #tpu.core_type<tc>, window_params = [{transform_indices = @transform_0, window_bounds = array<i64: 1, 16, 16, 4>}, {pipeline_mode = #tpu.pipeline_mode<synchronous>, transform_indices = @transform_1, window_bounds = array<i64: 1, 4>}, {pipeline_mode = #tpu.pipeline_mode<synchronous>, transform_indices = @transform_2, window_bounds = array<i64: 1, 4>}, {pipeline_mode = #tpu.pipeline_mode<synchronous>, transform_indices = @transform_3, window_bounds = array<i64: 36, 4>}, {transform_indices = @transform_4, window_bounds = array<i64: 1, 16, 16, 4>}, {pipeline_mode = #tpu.pipeline_mode<synchronous>, transform_indices = @transform_5, window_bounds = array<i64: 2, 4>}]} {
    %c0 = arith.constant 0 : index
    %c0_0 = arith.constant 0 : index
    %c0_1 = arith.constant 0 : index
    %c0_2 = arith.constant 0 : index
    %0 = vector.load %arg1[%c0, %c0_0, %c0_1, %c0_2] : memref<1x16x16x4xf32, #tpu.memory_space<vmem>>, vector<1x16x16x4xf32>
    %1 = vector.shape_cast %0 : vector<1x16x16x4xf32> to vector<256x4xf32>
    %c0_3 = arith.constant 0 : index
    %c0_4 = arith.constant 0 : index
    %2 = vector.load %arg2[%c0_3, %c0_4] : memref<1x4xf32, #tpu.memory_space<vmem>>, vector<1x4xf32>
    %3 = vector.broadcast %2 : vector<1x4xf32> to vector<256x4xf32>
    %4 = arith.mulf %1, %3 : vector<256x4xf32>
    %c0_5 = arith.constant 0 : index
    %c0_6 = arith.constant 0 : index
    %5 = vector.load %arg3[%c0_5, %c0_6] : memref<1x4xf32, #tpu.memory_space<vmem>>, vector<1x4xf32>
    %6 = vector.broadcast %5 : vector<1x4xf32> to vector<256x4xf32>
    %7 = arith.addf %4, %6 : vector<256x4xf32>
    %cst = arith.constant 0.000000e+00 : f32
    %8 = vector.broadcast %cst : f32 to vector<256x4xf32>
    %9 = arith.maximumf %7, %8 : vector<256x4xf32>
    %c0_i32 = arith.constant 0 : i32
    %10 = arith.cmpi eq, %arg0, %c0_i32 : i32
    %11 = arith.extui %10 : i1 to i32
    %c0_i32_7 = arith.constant 0 : i32
    %12 = arith.cmpi ne, %11, %c0_i32_7 : i32
    scf.if %12 {
      %cst_28 = arith.constant 0.000000e+00 : f32
      %43 = vector.broadcast %cst_28 : f32 to vector<18x18x4xf32>
      %c0_29 = arith.constant 0 : index
      %c0_30 = arith.constant 0 : index
      %c0_31 = arith.constant 0 : index
      %44 = vector.load %arg7[%c0_29, %c0_30, %c0_31] : memref<18x18x4xf32, #tpu.memory_space<vmem>>, vector<18x18x4xf32>
      tpu.vector_store %arg7[%c0_29, %c0_30, %c0_31], %43 {strides = array<i32>} : memref<18x18x4xf32, #tpu.memory_space<vmem>>, vector<18x18x4xf32>,
    } else {
    }
    %13 = vector.shape_cast %9 : vector<256x4xf32> to vector<16x16x4xf32>
    %c1 = arith.constant 1 : index
    %c1_8 = arith.constant 1 : index
    %c0_9 = arith.constant 0 : index
    %14 = vector.load %arg7[%c1, %c1_8, %c0_9] : memref<18x18x4xf32, #tpu.memory_space<vmem>>, vector<16x16x4xf32>
    tpu.vector_store %arg7[%c1, %c1_8, %c0_9], %13 {strides = array<i32>} : memref<18x18x4xf32, #tpu.memory_space<vmem>>, vector<16x16x4xf32>,
    %c0_10 = arith.constant 0 : index
    %c0_11 = arith.constant 0 : index
    %c0_12 = arith.constant 0 : index
    %15 = vector.load %arg7[%c0_10, %c0_11, %c0_12] : memref<18x18x4xf32, #tpu.memory_space<vmem>>, vector<18x18x4xf32>
    %16 = vector.extract_strided_slice %15 {offsets = [0, 0, 0], sizes = [16, 16, 4], strides = [1, 1, 1]} : vector<18x18x4xf32> to vector<16x16x4xf32>
    %17 = vector.extract_strided_slice %15 {offsets = [0, 1, 0], sizes = [16, 16, 4], strides = [1, 1, 1]} : vector<18x18x4xf32> to vector<16x16x4xf32>
    %18 = vector.extract_strided_slice %15 {offsets = [0, 2, 0], sizes = [16, 16, 4], strides = [1, 1, 1]} : vector<18x18x4xf32> to vector<16x16x4xf32>
    %19 = vector.extract_strided_slice %15 {offsets = [1, 0, 0], sizes = [16, 16, 4], strides = [1, 1, 1]} : vector<18x18x4xf32> to vector<16x16x4xf32>
    %20 = vector.extract_strided_slice %15 {offsets = [1, 1, 0], sizes = [16, 16, 4], strides = [1, 1, 1]} : vector<18x18x4xf32> to vector<16x16x4xf32>
    %21 = vector.extract_strided_slice %15 {offsets = [1, 2, 0], sizes = [16, 16, 4], strides = [1, 1, 1]} : vector<18x18x4xf32> to vector<16x16x4xf32>
    %22 = vector.extract_strided_slice %15 {offsets = [2, 0, 0], sizes = [16, 16, 4], strides = [1, 1, 1]} : vector<18x18x4xf32> to vector<16x16x4xf32>
    %23 = vector.extract_strided_slice %15 {offsets = [2, 1, 0], sizes = [16, 16, 4], strides = [1, 1, 1]} : vector<18x18x4xf32> to vector<16x16x4xf32>
    %24 = vector.extract_strided_slice %15 {offsets = [2, 2, 0], sizes = [16, 16, 4], strides = [1, 1, 1]} : vector<18x18x4xf32> to vector<16x16x4xf32>
    %25 = tpu.concatenate %16, %17, %18, %19, %20, %21, %22, %23, %24 in 2 : vector<16x16x4xf32>, vector<16x16x4xf32>, vector<16x16x4xf32>, vector<16x16x4xf32>, vector<16x16x4xf32>, vector<16x16x4xf32>, vector<16x16x4xf32>, vector<16x16x4xf32>, vector<16x16x4xf32> -> vector<16x16x36xf32>
    %26 = vector.shape_cast %25 : vector<16x16x36xf32> to vector<256x36xf32>
    %c0_13 = arith.constant 0 : index
    %c0_14 = arith.constant 0 : index
    %27 = vector.load %arg4[%c0_13, %c0_14] : memref<36x4xf32, #tpu.memory_space<vmem>>, vector<36x4xf32>
    %cst_15 = arith.constant dense<0.000000e+00> : vector<256x4xf32>
    %28 = tpu.matmul %26, %27, %cst_15 {dimension_numbers = #tpu.dot_dimension_numbers<[1], [0], [0], [1], [0, 0, 1, 1], [], []>} : vector<256x36xf32>, vector<36x4xf32>, vector<256x4xf32> -> vector<256x4xf32>
    %c0_i32_16 = arith.constant 0 : i32
    %29 = arith.cmpi eq, %arg0, %c0_i32_16 : i32
    %30 = arith.extui %29 : i1 to i32
    %c0_i32_17 = arith.constant 0 : i32
    %31 = arith.cmpi ne, %30, %c0_i32_17 : i32
    scf.if %31 {
      %cst_28 = arith.constant 0.000000e+00 : f32
      %43 = vector.broadcast %cst_28 : f32 to vector<2x4xf32>
      %c0_29 = arith.constant 0 : index
      %c0_30 = arith.constant 0 : index
      %44 = vector.load %arg6[%c0_29, %c0_30] : memref<2x4xf32, #tpu.memory_space<vmem>>, vector<2x4xf32>
      tpu.vector_store %arg6[%c0_29, %c0_30], %43 {strides = array<i32>} : memref<2x4xf32, #tpu.memory_space<vmem>>, vector<2x4xf32>,
    } else {
    }
    %c0_18 = arith.constant 0 : index
    %c0_19 = arith.constant 0 : index
    %32 = vector.load %arg6[%c0_18, %c0_19] : memref<2x4xf32, #tpu.memory_space<vmem>>, vector<2x4xf32>
    %cst_20 = arith.constant dense<0.000000e+00> : vector<4xf32>
    %33 = vector.multi_reduction <add>, %28, %cst_20 [0] : vector<256x4xf32> to vector<4xf32>
    %34 = vector.shape_cast %33 : vector<4xf32> to vector<1x4xf32>
    %35 = arith.mulf %28, %28 : vector<256x4xf32>
    %cst_21 = arith.constant dense<0.000000e+00> : vector<4xf32>
    %36 = vector.multi_reduction <add>, %35, %cst_21 [0] : vector<256x4xf32> to vector<4xf32>
    %37 = vector.shape_cast %36 : vector<4xf32> to vector<1x4xf32>
    %38 = tpu.concatenate %34, %37 in 0 : vector<1x4xf32>, vector<1x4xf32> -> vector<2x4xf32>
    %39 = arith.addf %32, %38 : vector<2x4xf32>
    %c0_22 = arith.constant 0 : index
    %c0_23 = arith.constant 0 : index
    %40 = vector.load %arg6[%c0_22, %c0_23] : memref<2x4xf32, #tpu.memory_space<vmem>>, vector<2x4xf32>
    tpu.vector_store %arg6[%c0_22, %c0_23], %39 {strides = array<i32>} : memref<2x4xf32, #tpu.memory_space<vmem>>, vector<2x4xf32>,
    %41 = vector.shape_cast %28 : vector<256x4xf32> to vector<1x16x16x4xf32>
    %c0_24 = arith.constant 0 : index
    %c0_25 = arith.constant 0 : index
    %c0_26 = arith.constant 0 : index
    %c0_27 = arith.constant 0 : index
    %42 = vector.load %arg5[%c0_24, %c0_25, %c0_26, %c0_27] : memref<1x16x16x4xf32, #tpu.memory_space<vmem>>, vector<1x16x16x4xf32>
    tpu.vector_store %arg5[%c0_24, %c0_25, %c0_26, %c0_27], %41 {strides = array<i32>} : memref<1x16x16x4xf32, #tpu.memory_space<vmem>>, vector<1x16x16x4xf32>,
    return
  }
  func.func @transform_0(%arg0: i32) -> (i32, i32, i32, i32) {
    %c0_i32 = arith.constant 0 : i32
    %c0_i32_0 = arith.constant 0 : i32
    %c0_i32_1 = arith.constant 0 : i32
    %c0_i32_2 = arith.constant 0 : i32
    return %arg0, %c0_i32, %c0_i32_0, %c0_i32_1 : i32, i32, i32, i32
  }
  func.func @transform_1(%arg0: i32) -> (i32, i32) {
    %c0_i32 = arith.constant 0 : i32
    %c0_i32_0 = arith.constant 0 : i32
    %c0_i32_1 = arith.constant 0 : i32
    return %c0_i32, %c0_i32_0 : i32, i32
  }
  func.func @transform_2(%arg0: i32) -> (i32, i32) {
    %c0_i32 = arith.constant 0 : i32
    %c0_i32_0 = arith.constant 0 : i32
    %c0_i32_1 = arith.constant 0 : i32
    return %c0_i32, %c0_i32_0 : i32, i32
  }
  func.func @transform_3(%arg0: i32) -> (i32, i32) {
    %c0_i32 = arith.constant 0 : i32
    %c0_i32_0 = arith.constant 0 : i32
    %c0_i32_1 = arith.constant 0 : i32
    return %c0_i32, %c0_i32_0 : i32, i32
  }
  func.func @transform_4(%arg0: i32) -> (i32, i32, i32, i32) {
    %c0_i32 = arith.constant 0 : i32
    %c0_i32_0 = arith.constant 0 : i32
    %c0_i32_1 = arith.constant 0 : i32
    %c0_i32_2 = arith.constant 0 : i32
    return %arg0, %c0_i32, %c0_i32_0, %c0_i32_1 : i32, i32, i32, i32
  }
  func.func @transform_5(%arg0: i32) -> (i32, i32) {
    %c0_i32 = arith.constant 0 : i32
    %c0_i32_0 = arith.constant 0 : i32
    %c0_i32_1 = arith.constant 0 : i32
    return %c0_i32, %c0_i32_0 : i32, i32
  }
}

module attributes {stable_mosaic.version = 11 : i64} {
  func.func @_bn_add_relu_kernel(%arg0: i32, %arg1: memref<1x16x16x16xf32, #tpu.memory_space<vmem>>, %arg2: memref<1x16x16x16xf32, #tpu.memory_space<vmem>>, %arg3: memref<1x16xf32, #tpu.memory_space<vmem>>, %arg4: memref<1x16xf32, #tpu.memory_space<vmem>>, %arg5: memref<1x16x16x16xf32, #tpu.memory_space<vmem>>) attributes {dimension_semantics = [#tpu.dimension_semantics<parallel>], iteration_bounds = array<i64: 2>, scalar_prefetch = 0 : i64, scratch_operands = 0 : i64, tpu.core_type = #tpu.core_type<tc>, window_params = [{transform_indices = @transform_0, window_bounds = array<i64: 1, 16, 16, 16>}, {transform_indices = @transform_1, window_bounds = array<i64: 1, 16, 16, 16>}, {pipeline_mode = #tpu.pipeline_mode<synchronous>, transform_indices = @transform_2, window_bounds = array<i64: 1, 16>}, {pipeline_mode = #tpu.pipeline_mode<synchronous>, transform_indices = @transform_3, window_bounds = array<i64: 1, 16>}, {transform_indices = @transform_4, window_bounds = array<i64: 1, 16, 16, 16>}]} {
    %c0 = arith.constant 0 : index
    %c0_0 = arith.constant 0 : index
    %c0_1 = arith.constant 0 : index
    %c0_2 = arith.constant 0 : index
    %0 = vector.load %arg1[%c0, %c0_0, %c0_1, %c0_2] : memref<1x16x16x16xf32, #tpu.memory_space<vmem>>, vector<1x16x16x16xf32>
    %1 = vector.shape_cast %0 : vector<1x16x16x16xf32> to vector<256x16xf32>
    %c0_3 = arith.constant 0 : index
    %c0_4 = arith.constant 0 : index
    %c0_5 = arith.constant 0 : index
    %c0_6 = arith.constant 0 : index
    %2 = vector.load %arg2[%c0_3, %c0_4, %c0_5, %c0_6] : memref<1x16x16x16xf32, #tpu.memory_space<vmem>>, vector<1x16x16x16xf32>
    %3 = vector.shape_cast %2 : vector<1x16x16x16xf32> to vector<256x16xf32>
    %c0_7 = arith.constant 0 : index
    %c0_8 = arith.constant 0 : index
    %4 = vector.load %arg3[%c0_7, %c0_8] : memref<1x16xf32, #tpu.memory_space<vmem>>, vector<1x16xf32>
    %5 = vector.broadcast %4 : vector<1x16xf32> to vector<256x16xf32>
    %6 = arith.mulf %1, %5 : vector<256x16xf32>
    %c0_9 = arith.constant 0 : index
    %c0_10 = arith.constant 0 : index
    %7 = vector.load %arg4[%c0_9, %c0_10] : memref<1x16xf32, #tpu.memory_space<vmem>>, vector<1x16xf32>
    %8 = vector.broadcast %7 : vector<1x16xf32> to vector<256x16xf32>
    %9 = arith.addf %6, %8 : vector<256x16xf32>
    %10 = arith.addf %9, %3 : vector<256x16xf32>
    %cst = arith.constant 0.000000e+00 : f32
    %11 = vector.broadcast %cst : f32 to vector<256x16xf32>
    %12 = arith.maximumf %10, %11 : vector<256x16xf32>
    %13 = vector.shape_cast %12 : vector<256x16xf32> to vector<1x16x16x16xf32>
    %c0_11 = arith.constant 0 : index
    %c0_12 = arith.constant 0 : index
    %c0_13 = arith.constant 0 : index
    %c0_14 = arith.constant 0 : index
    %14 = vector.load %arg5[%c0_11, %c0_12, %c0_13, %c0_14] : memref<1x16x16x16xf32, #tpu.memory_space<vmem>>, vector<1x16x16x16xf32>
    tpu.vector_store %arg5[%c0_11, %c0_12, %c0_13, %c0_14], %13 {strides = array<i32>} : memref<1x16x16x16xf32, #tpu.memory_space<vmem>>, vector<1x16x16x16xf32>,
    return
  }
  func.func @transform_0(%arg0: i32) -> (i32, i32, i32, i32) {
    %c0_i32 = arith.constant 0 : i32
    %c0_i32_0 = arith.constant 0 : i32
    %c0_i32_1 = arith.constant 0 : i32
    %c0_i32_2 = arith.constant 0 : i32
    return %arg0, %c0_i32, %c0_i32_0, %c0_i32_1 : i32, i32, i32, i32
  }
  func.func @transform_1(%arg0: i32) -> (i32, i32, i32, i32) {
    %c0_i32 = arith.constant 0 : i32
    %c0_i32_0 = arith.constant 0 : i32
    %c0_i32_1 = arith.constant 0 : i32
    %c0_i32_2 = arith.constant 0 : i32
    return %arg0, %c0_i32, %c0_i32_0, %c0_i32_1 : i32, i32, i32, i32
  }
  func.func @transform_2(%arg0: i32) -> (i32, i32) {
    %c0_i32 = arith.constant 0 : i32
    %c0_i32_0 = arith.constant 0 : i32
    %c0_i32_1 = arith.constant 0 : i32
    return %c0_i32, %c0_i32_0 : i32, i32
  }
  func.func @transform_3(%arg0: i32) -> (i32, i32) {
    %c0_i32 = arith.constant 0 : i32
    %c0_i32_0 = arith.constant 0 : i32
    %c0_i32_1 = arith.constant 0 : i32
    return %c0_i32, %c0_i32_0 : i32, i32
  }
  func.func @transform_4(%arg0: i32) -> (i32, i32, i32, i32) {
    %c0_i32 = arith.constant 0 : i32
    %c0_i32_0 = arith.constant 0 : i32
    %c0_i32_1 = arith.constant 0 : i32
    %c0_i32_2 = arith.constant 0 : i32
    return %arg0, %c0_i32, %c0_i32_0, %c0_i32_1 : i32, i32, i32, i32
  }
}

</mosaic_0001>

<llo_original>
// kernel: bottleneck_forward.4
$region0: #{bottleneck_forward.4}
  #allocation0 [shape = 'u32[]', space=smem, size = 0x4, offset = 0x4, fixed_abs, tag = 'smem constant byte address 0x4 - core index']
  #allocation1 [shape = 'u32[144,128]{1,0:T(1,128)}', space=vmem, size = 0x12000, scoped, tag = 'internal scratch']
  %s0 = inlined_call_operand.vmem [shape: f32[2,16,16,16], index: 0, kind: input, shape index: {}]
  %s1 = inlined_call_operand.vmem [shape: f32[16,4], index: 1, kind: input, shape index: {}]
  %s2 = inlined_call_operand.vmem [shape: f32[2,16,16,4], index: 2, kind: output, shape index: {0}]
  %s3 = inlined_call_operand.vmem [shape: f32[2,4], index: 3, kind: output, shape index: {1}]
  %4 = xla_tuple %s2, %s3
  %s5 = sld [smem:[#allocation0]]
  $region53: #{bottleneck_forward.4} parent=0
    _
  %s7 = ssub.s32 1, %s5
  %s8 = scalar_select 0, %s7, %s5
  loop: start=0, step=1, limit=4
  $region2: #{bottleneck_forward.4} parent=0 // loop_pre_header
    _
  $region3: #{bottleneck_forward.4} parent=0 // loop_header
    %s10 = sphi 0, %s14
    %p11 = scmp.ge.s32.totalorder %s10, 4
    %s20 = sphi 0, %s22
    %s23 = sphi 0, %s20
    %s24 = sphi 0, %s23
    %s40 = sphi 0, %s24
    %s44 = sphi 0, %s44
    %s46 = sphi 0, %s44
    %s47 = sphi 0, %s46
    %s61 = sphi 0, %s47
    %s67 = sphi 0, %s69
    %s70 = sphi 0, %s67
    %s71 = sphi 0, %s70
    %s87 = sphi 0, %s71
    %s91 = sphi 0, %s91
    %s93 = sphi 0, %s91
    %s94 = sphi 0, %s93
    %s108 = sphi 0, %s94
  $region4: #{bottleneck_forward.4} parent=0 // loop_header_branch
    %13 = sbr.rel (%p11) target = $region8
  $region5: #{bottleneck_forward.4} parent=0 // loop_body
    %s15 = ssub.s32 %s10, 1
    %s16 = ssub.s32 %s10, 2
    %s17 = sadd.s32 %s10, 1
    %s18 = ssub.s32 %s10, %s17
    %p19 = scmp.eq.s32.totalorder %s18, 0
    %s21 = sadd.s32 %s20, 1
    %s22 = scalar_select %p19, %s20, %s21
    %p25 = pneg %p19
    %p26 = scmp.eq.s32.totalorder %s10, 1
    %p27 = por %p25, %p26
    %p28 = scmp.ne.s32.totalorder %s20, %s23
    %p29 = scmp.eq.s32.totalorder %s10, 0
    %p30 = por %p28, %p29
    %p31 = scmp.ne.s32.totalorder %s20, %s23
    %p32 = scmp.eq.s32.totalorder %s15, 1
    %p33 = por %p31, %p32
    %p34 = scmp.ne.s32.totalorder %s23, %s24
    %p35 = scmp.eq.s32.totalorder %s15, 0
    %p36 = por %p34, %p35
    %p37 = scmp.ne.s32.totalorder %s23, %s24
    %p38 = scmp.eq.s32.totalorder %s16, 1
    %p39 = por %p37, %p38
    %p41 = scmp.ne.s32.totalorder %s24, %s40
    %p42 = scmp.eq.s32.totalorder %s16, 0
    %p43 = por %p41, %p42
    %s45 = sadd.s32 %s44, 1
    %p48 = scmp.eq.s32.totalorder %s10, 1
    %p49 = scmp.ne.s32.totalorder %s44, %s46
    %p50 = scmp.eq.s32.totalorder %s10, 0
    %p51 = por %p49, %p50
    %p52 = scmp.ne.s32.totalorder %s44, %s46
    %p53 = scmp.eq.s32.totalorder %s15, 1
    %p54 = por %p52, %p53
    %p55 = scmp.ne.s32.totalorder %s46, %s47
    %p56 = scmp.eq.s32.totalorder %s15, 0
    %p57 = por %p55, %p56
    %p58 = scmp.ne.s32.totalorder %s46, %s47
    %p59 = scmp.eq.s32.totalorder %s16, 1
    %p60 = por %p58, %p59
    %p62 = scmp.ne.s32.totalorder %s47, %s61
    %p63 = scmp.eq.s32.totalorder %s16, 0
    %p64 = por %p62, %p63
    %s65 = ssub.s32 %s10, %s17
    %p66 = scmp.eq.s32.totalorder %s65, 0
    %s68 = sadd.s32 %s67, 1
    %s69 = scalar_select %p66, %s67, %s68
    %p72 = pneg %p66
    %p73 = scmp.eq.s32.totalorder %s10, 1
    %p74 = por %p72, %p73
    %p75 = scmp.ne.s32.totalorder %s67, %s70
    %p76 = scmp.eq.s32.totalorder %s10, 0
    %p77 = por %p75, %p76
    %p78 = scmp.ne.s32.totalorder %s67, %s70
    %p79 = scmp.eq.s32.totalorder %s15, 1
    %p80 = por %p78, %p79
    %p81 = scmp.ne.s32.totalorder %s70, %s71
    %p82 = scmp.eq.s32.totalorder %s15, 0
    %p83 = por %p81, %p82
    %p84 = scmp.ne.s32.totalorder %s70, %s71
    %p85 = scmp.eq.s32.totalorder %s16, 1
    %p86 = por %p84, %p85
    %p88 = scmp.ne.s32.totalorder %s71, %s87
    %p89 = scmp.eq.s32.totalorder %s16, 0
    %p90 = por %p88, %p89
    %s92 = sadd.s32 %s91, 1
    %p95 = scmp.eq.s32.totalorder %s10, 1
    %p96 = scmp.ne.s32.totalorder %s91, %s93
    %p97 = scmp.eq.s32.totalorder %s10, 0
    %p98 = por %p96, %p97
    %p99 = scmp.ne.s32.totalorder %s91, %s93
    %p100 = scmp.eq.s32.totalorder %s15, 1
    %p101 = por %p99, %p100
    %p102 = scmp.ne.s32.totalorder %s93, %s94
    %p103 = scmp.eq.s32.totalorder %s15, 0
    %p104 = por %p102, %p103
    %p105 = scmp.ne.s32.totalorder %s93, %s94
    %p106 = scmp.eq.s32.totalorder %s16, 1
    %p107 = por %p105, %p106
    %p109 = scmp.ne.s32.totalorder %s94, %s108
    %p110 = scmp.eq.s32.totalorder %s16, 0
    %p111 = por %p109, %p110
    %p112 = scmp.le.s32.totalorder 1, %s10
    %p113 = scmp.lt.s32.totalorder %s10, 3
    %p114 = pnand %p112, %p113
    %p115 = pneg %p114
    // Predicated region
    $region9: #{bottleneck_forward.4} parent=5 // pred_check
      _
    $region10: #{bottleneck_forward.4} parent=5 // pred_check_branch
      %117 = sbr.rel (%p114) target = $region12
    $region11: #{bottleneck_forward.4} parent=5 // pred_region
      %s118 = ssub.s32 %s10, 1
      // Predicated region
      $region13: #{bottleneck_forward.4} parent=11 // pred_check
        %p119 = pneg %p57
      $region14: #{bottleneck_forward.4} parent=11 // pred_check_branch
        %121 = sbr.rel (%p119) target = $region16
      $region15: #{bottleneck_forward.4} parent=11 // pred_region
        _
      $region16: #{bottleneck_forward.4} parent=11 // pred_fallthru
        _
    $region12: #{bottleneck_forward.4} parent=5 // pred_fallthru
      _
    %p122 = scmp.lt.s32.totalorder %s10, 2
    // Predicated region
    $region17: #{bottleneck_forward.4} parent=5 // pred_check
      %p123 = pneg %p122
    $region18: #{bottleneck_forward.4} parent=5 // pred_check_branch
      %125 = sbr.rel (%p123) target = $region20
    $region19: #{bottleneck_forward.4} parent=5 // pred_region
      // Predicated region
      $region21: #{bottleneck_forward.4} parent=19 // pred_check
        %p126 = pneg %p30
      $region22: #{bottleneck_forward.4} parent=19 // pred_check_branch
        %128 = sbr.rel (%p126) target = $region24
      $region23: #{bottleneck_forward.4} parent=19 // pred_region
        %p129 = scmp.lt.s32.totalorder %s10, 1
        %s130 = scalar_select %p129, %s10, 1
        %s131 = smul.addr %s130, 32
        %s132 = smul.addr %s131, 8
        %s133 = scalar_lea.vmem %s0, %s132
      $region24: #{bottleneck_forward.4} parent=19 // pred_fallthru
        _
    $region20: #{bottleneck_forward.4} parent=5 // pred_fallthru
      _
    %p134 = scmp.le.s32.totalorder 1, %s10
    %p135 = scmp.lt.s32.totalorder %s10, 3
    %p136 = pnand %p134, %p135
    %p137 = pneg %p136
    // Predicated region
    $region25: #{bottleneck_forward.4} parent=5 // pred_check
      _
    $region26: #{bottleneck_forward.4} parent=5 // pred_check_branch
      %139 = sbr.rel (%p136) target = $region28
    $region27: #{bottleneck_forward.4} parent=5 // pred_region
      %s140 = ssub.s32 %s10, 1
      %p141 = scmp.lt.s32.totalorder %s15, 1
      %s142 = scalar_select %p141, %s15, 1
      %s143 = smul.addr %s142, 32
      %s144 = smul.addr %s143, 8
      %s145 = scalar_lea.vmem %s0, %s144
      %p146 = pneg %p36
      %p147 = pneg %p33
      %p148 = pneg %p57
      %p149 = pneg %p54
      %p150 = pneg %p83
      %p151 = pneg %p80
      %p152 = scmp.lt.s32.totalorder %s15, 1
      %s153 = scalar_select %p152, %s15, 1
      %s154 = smul.addr %s153, 32
      %s155 = smul.addr %s154, 8
      %s156 = scalar_lea.vmem %s2, %s155
      %p157 = pneg %p104
      %p158 = pneg %p101
      %p159 = scmp.lt.s32.totalorder %s15, 1
      %s160 = scalar_select %p159, %s15, 1
      %s161 = smul.addr %s160, 32
      %s162 = smul.addr %s161, 8
      %s163 = scalar_lea.vmem %s0, %s162
      %p164 = scmp.lt.s32.totalorder %s15, 1
      %s165 = scalar_select %p164, %s15, 1
      %s166 = smul.addr %s165, 32
      %s167 = smul.addr %s166, 8
      %s168 = scalar_lea.vmem %s2, %s167
      %v169 = vld [vmem:[%s163] sm:$0xff]
      %v170 = vld [vmem:[%s163 + $0x8] sm:$0xff]
      %v171 = vld [vmem:[%s163 + $0x10] sm:$0xff]
      %v172 = vld [vmem:[%s163 + $0x18] sm:$0xff]
      %v173 = vld [vmem:[%s163 + $0x20] sm:$0xff]
      %v174 = vld [vmem:[%s163 + $0x28] sm:$0xff]
      %v175 = vld [vmem:[%s163 + $0x30] sm:$0xff]
      %v176 = vld [vmem:[%s163 + $0x38] sm:$0xff]
      %v177 = vld [vmem:[%s163 + $0x40] sm:$0xff]
      %v178 = vld [vmem:[%s163 + $0x48] sm:$0xff]
      %v179 = vld [vmem:[%s163 + $0x50] sm:$0xff]
      %v180 = vld [vmem:[%s163 + $0x58] sm:$0xff]
      %v181 = vld [vmem:[%s163 + $0x60] sm:$0xff]
      %v182 = vld [vmem:[%s163 + $0x68] sm:$0xff]
      %v183 = vld [vmem:[%s163 + $0x70] sm:$0xff]
      %v184 = vld [vmem:[%s163 + $0x78] sm:$0xff]
      %v185 = vld [vmem:[%s163 + $0x80] sm:$0xff]
      %v186 = vld [vmem:[%s163 + $0x88] sm:$0xff]
      %v187 = vld [vmem:[%s163 + $0x90] sm:$0xff]
      %v188 = vld [vmem:[%s163 + $0x98] sm:$0xff]
      %v189 = vld [vmem:[%s163 + $0xa0] sm:$0xff]
      %v190 = vld [vmem:[%s163 + $0xa8] sm:$0xff]
      %v191 = vld [vmem:[%s163 + $0xb0] sm:$0xff]
      %v192 = vld [vmem:[%s163 + $0xb8] sm:$0xff]
      %v193 = vld [vmem:[%s163 + $0xc0] sm:$0xff]
      %v194 = vld [vmem:[%s163 + $0xc8] sm:$0xff]
      %v195 = vld [vmem:[%s163 + $0xd0] sm:$0xff]
      %v196 = vld [vmem:[%s163 + $0xd8] sm:$0xff]
      %v197 = vld [vmem:[%s163 + $0xe0] sm:$0xff]
      %v198 = vld [vmem:[%s163 + $0xe8] sm:$0xff]
      %v199 = vld [vmem:[%s163 + $0xf0] sm:$0xff]
      %v200 = vld [vmem:[%s163 + $0xf8] sm:$0xff]
      %v201 = vld [vmem:[%s1] sm:$0xff]
      %v202 = vld [vmem:[%s1 + $0x8] sm:$0xff]
      %vm203 = vcmask 130048
      %v205 = vsel %vm203, %v169, 0
      %v208 = vsel %vm203, %v170, 0
      %v211 = vsel %vm203, %v171, 0
      %v214 = vsel %vm203, %v172, 0
      %v217 = vsel %vm203, %v173, 0
      %v220 = vsel %vm203, %v174, 0
      %v223 = vsel %vm203, %v175, 0
      %v226 = vsel %vm203, %v176, 0
      %v229 = vsel %vm203, %v177, 0
      %v232 = vsel %vm203, %v178, 0
      %v235 = vsel %vm203, %v179, 0
      %v238 = vsel %vm203, %v180, 0
      %v241 = vsel %vm203, %v181, 0
      %v244 = vsel %vm203, %v182, 0
      %v247 = vsel %vm203, %v183, 0
      %v250 = vsel %vm203, %v184, 0
      %v253 = vsel %vm203, %v185, 0
      %v256 = vsel %vm203, %v186, 0
      %v259 = vsel %vm203, %v187, 0
      %v262 = vsel %vm203, %v188, 0
      %v265 = vsel %vm203, %v189, 0
      %v268 = vsel %vm203, %v190, 0
      %v271 = vsel %vm203, %v191, 0
      %v274 = vsel %vm203, %v192, 0
      %v277 = vsel %vm203, %v193, 0
      %v280 = vsel %vm203, %v194, 0
      %v283 = vsel %vm203, %v195, 0
      %v286 = vsel %vm203, %v196, 0
      %v289 = vsel %vm203, %v197, 0
      %v292 = vsel %vm203, %v198, 0
      %v295 = vsel %vm203, %v199, 0
      %v298 = vsel %vm203, %v200, 0
      %300 = vmatprep.subr.mxu0 0.0
      %301 = vmatpush1.msra.mxu0 %v201
      %302 = vmatprep.subr.mxu0 0.0
      %303 = vmatpush1.msra.mxu0 %v202
      %304 = vmatprep.subr.mxu0 0.0
      %305 = vmatpush1.msra.mxu0 0.0
      %306 = vmatprep.subr.mxu0 0.0
      %307 = vmatpush1.msra.mxu0 0.0
      %308 = vmatprep.subr.mxu0 0.0
      %309 = vmatpush1.msra.mxu0 0.0
      %310 = vmatprep.subr.mxu0 0.0
      %311 = vmatpush1.msra.mxu0 0.0
      %312 = vmatprep.subr.mxu0 0.0
      %313 = vmatpush1.msra.mxu0 0.0
      %314 = vmatprep.subr.mxu0 0.0
      %315 = vmatpush1.msra.mxu0 0.0
      %316 = vmatprep.subr.mxu0 0.0
      %317 = vmatpush1.msra.mxu0 0.0
      %318 = vmatprep.subr.mxu0 0.0
      %319 = vmatpush1.msra.mxu0 0.0
      %320 = vmatprep.subr.mxu0 0.0
      %321 = vmatpush1.msra.mxu0 0.0
      %322 = vmatprep.subr.mxu0 0.0
      %323 = vmatpush1.msra.mxu0 0.0
      %324 = vmatprep.subr.mxu0 0.0
      %325 = vmatpush1.msra.mxu0 0.0
      %326 = vmatprep.subr.mxu0 0.0
      %327 = vmatpush1.msra.mxu0 0.0
      %328 = vmatprep.subr.mxu0 0.0
      %329 = vmatpush1.msra.mxu0 0.0
      %330 = vmatprep.subr.mxu0 0.0
      %331 = vmatpush1.msra.mxu0 0.0
      %332 = vmatprep.subr.mxu0 0.0
      %333 = vmatpush1.msra.mxu0 0.0
      %334 = vmatprep.subr.mxu0 0.0
      %335 = vmatpush1.msra.mxu0 0.0
      %336 = vmatprep.subr.mxu0 0.0
      %337 = vmatpush1.msra.mxu0 0.0
      %338 = vmatprep.subr.mxu0 0.0
      %339 = vmatpush1.msra.mxu0 0.0
      %340 = vmatprep.subr.mxu0 0.0
      %341 = vmatpush1.msra.mxu0 0.0
      %342 = vmatprep.subr.mxu0 0.0
      %343 = vmatpush1.msra.mxu0 0.0
      %344 = vmatprep.subr.mxu0 0.0
      %345 = vmatpush1.msra.mxu0 0.0
      %346 = vmatprep.subr.mxu0 0.0
      %347 = vmatpush1.msra.mxu0 0.0
      %348 = vmatprep.subr.mxu0 0.0
      %349 = vmatpush1.msra.mxu0 0.0
      %350 = vmatprep.subr.mxu0 0.0
      %351 = vmatpush1.msra.mxu0 0.0
      %352 = vmatprep.subr.mxu0 0.0
      %353 = vmatpush1.msra.mxu0 0.0
      %354 = vmatprep.subr.mxu0 0.0
      %355 = vmatpush1.msra.mxu0 0.0
      %356 = vmatprep.subr.mxu0 0.0
      %357 = vmatpush1.msra.mxu0 0.0
      %358 = vmatprep.subr.mxu0 0.0
      %359 = vmatpush1.msra.mxu0 0.0
      %360 = vmatprep.subr.mxu0 0.0
      %361 = vmatpush1.msra.mxu0 0.0
      %362 = vmatprep.subr.mxu0 0.0
      %363 = vmatpush1.msra.mxu0 0.0
      %364 = vmatprep.mubr.f32.mxu0 0.0
      %365 = vmatmul.mubr.f32.gmra.mrb[0].mxu0 %v205
      %v366 = vpop.f32.mrb[0].mxu0
      %v367 = vadd.f32 0.0, %v366
      %v368 = vpop.f32.mrb[0].mxu0
      %369 = vmatprep.mubr.f32.mxu0 0.0
      %370 = vmatmul.mubr.f32.gmra.mrb[0].mxu0 %v208
      %v371 = vpop.f32.mrb[0].mxu0
      %v372 = vadd.f32 0.0, %v371
      %v373 = vpop.f32.mrb[0].mxu0
      %374 = vmatprep.mubr.f32.mxu0 0.0
      %375 = vmatmul.mubr.f32.gmra.mrb[0].mxu0 %v211
      %v376 = vpop.f32.mrb[0].mxu0
      %v377 = vadd.f32 0.0, %v376
      %v378 = vpop.f32.mrb[0].mxu0
      %379 = vmatprep.mubr.f32.mxu0 0.0
      %380 = vmatmul.mubr.f32.gmra.mrb[0].mxu0 %v214
      %v381 = vpop.f32.mrb[0].mxu0
      %v382 = vadd.f32 0.0, %v381
      %v383 = vpop.f32.mrb[0].mxu0
      %384 = vmatprep.mubr.f32.mxu0 0.0
      %385 = vmatmul.mubr.f32.gmra.mrb[0].mxu0 %v217
      %v386 = vpop.f32.mrb[0].mxu0
      %v387 = vadd.f32 0.0, %v386
      %v388 = vpop.f32.mrb[0].mxu0
      %389 = vmatprep.mubr.f32.mxu0 0.0
      %390 = vmatmul.mubr.f32.gmra.mrb[0].mxu0 %v220
      %v391 = vpop.f32.mrb[0].mxu0
      %v392 = vadd.f32 0.0, %v391
      %v393 = vpop.f32.mrb[0].mxu0
      %394 = vmatprep.mubr.f32.mxu0 0.0
      %395 = vmatmul.mubr.f32.gmra.mrb[0].mxu0 %v223
      %v396 = vpop.f32.mrb[0].mxu0
      %v397 = vadd.f32 0.0, %v396
      %v398 = vpop.f32.mrb[0].mxu0
      %399 = vmatprep.mubr.f32.mxu0 0.0
      %400 = vmatmul.mubr.f32.gmra.mrb[0].mxu0 %v226
      %v401 = vpop.f32.mrb[0].mxu0
      %v402 = vadd.f32 0.0, %v401
      %v403 = vpop.f32.mrb[0].mxu0
      %404 = vmatprep.mubr.f32.mxu0 0.0
      %405 = vmatmul.mubr.f32.gmra.mrb[0].mxu0 %v229
      %v406 = vpop.f32.mrb[0].mxu0
      %v407 = vadd.f32 0.0, %v406
      %v408 = vpop.f32.mrb[0].mxu0
      %409 = vmatprep.mubr.f32.mxu0 0.0
      %410 = vmatmul.mubr.f32.gmra.mrb[0].mxu0 %v232
      %v411 = vpop.f32.mrb[0].mxu0
      %v412 = vadd.f32 0.0, %v411
      %v413 = vpop.f32.mrb[0].mxu0
      %414 = vmatprep.mubr.f32.mxu0 0.0
      %415 = vmatmul.mubr.f32.gmra.mrb[0].mxu0 %v235
      %v416 = vpop.f32.mrb[0].mxu0
      %v417 = vadd.f32 0.0, %v416
      %v418 = vpop.f32.mrb[0].mxu0
      %419 = vmatprep.mubr.f32.mxu0 0.0
      %420 = vmatmul.mubr.f32.gmra.mrb[0].mxu0 %v238
      %v421 = vpop.f32.mrb[0].mxu0
      %v422 = vadd.f32 0.0, %v421
      %v423 = vpop.f32.mrb[0].mxu0
      %424 = vmatprep.mubr.f32.mxu0 0.0
      %425 = vmatmul.mubr.f32.gmra.mrb[0].mxu0 %v241
      %v426 = vpop.f32.mrb[0].mxu0
      %v427 = vadd.f32 0.0, %v426
      %v428 = vpop.f32.mrb[0].mxu0
      %429 = vmatprep.mubr.f32.mxu0 0.0
      %430 = vmatmul.mubr.f32.gmra.mrb[0].mxu0 %v244
      %v431 = vpop.f32.mrb[0].mxu0
      %v432 = vadd.f32 0.0, %v431
      %v433 = vpop.f32.mrb[0].mxu0
      %434 = vmatprep.mubr.f32.mxu0 0.0
      %435 = vmatmul.mubr.f32.gmra.mrb[0].mxu0 %v247
      %v436 = vpop.f32.mrb[0].mxu0
      %v437 = vadd.f32 0.0, %v436
      %v438 = vpop.f32.mrb[0].mxu0
      %439 = vmatprep.mubr.f32.mxu0 0.0
      %440 = vmatmul.mubr.f32.gmra.mrb[0].mxu0 %v250
      %v441 = vpop.f32.mrb[0].mxu0
      %v442 = vadd.f32 0.0, %v441
      %v443 = vpop.f32.mrb[0].mxu0
      %444 = vmatprep.mubr.f32.mxu0 0.0
      %445 = vmatmul.mubr.f32.gmra.mrb[0].mxu0 %v253
      %v446 = vpop.f32.mrb[0].mxu0
      %v447 = vadd.f32 0.0, %v446
      %v448 = vpop.f32.mrb[0].mxu0
      %449 = vmatprep.mubr.f32.mxu0 0.0
      %450 = vmatmul.mubr.f32.gmra.mrb[0].mxu0 %v256
      %v451 = vpop.f32.mrb[0].mxu0
      %v452 = vadd.f32 0.0, %v451
      %v453 = vpop.f32.mrb[0].mxu0
      %454 = vmatprep.mubr.f32.mxu0 0.0
      %455 = vmatmul.mubr.f32.gmra.mrb[0].mxu0 %v259
      %v456 = vpop.f32.mrb[0].mxu0
      %v457 = vadd.f32 0.0, %v456
      %v458 = vpop.f32.mrb[0].mxu0
      %459 = vmatprep.mubr.f32.mxu0 0.0
      %460 = vmatmul.mubr.f32.gmra.mrb[0].mxu0 %v262
      %v461 = vpop.f32.mrb[0].mxu0
      %v462 = vadd.f32 0.0, %v461
      %v463 = vpop.f32.mrb[0].mxu0
      %464 = vmatprep.mubr.f32.mxu0 0.0
      %465 = vmatmul.mubr.f32.gmra.mrb[0].mxu0 %v265
      %v466 = vpop.f32.mrb[0].mxu0
      %v467 = vadd.f32 0.0, %v466
      %v468 = vpop.f32.mrb[0].mxu0
      %469 = vmatprep.mubr.f32.mxu0 0.0
      %470 = vmatmul.mubr.f32.gmra.mrb[0].mxu0 %v268
      %v471 = vpop.f32.mrb[0].mxu0
      %v472 = vadd.f32 0.0, %v471
      %v473 = vpop.f32.mrb[0].mxu0
      %474 = vmatprep.mubr.f32.mxu0 0.0
      %475 = vmatmul.mubr.f32.gmra.mrb[0].mxu0 %v271
      %v476 = vpop.f32.mrb[0].mxu0
      %v477 = vadd.f32 0.0, %v476
      %v478 = vpop.f32.mrb[0].mxu0
      %479 = vmatprep.mubr.f32.mxu0 0.0
      %480 = vmatmul.mubr.f32.gmra.mrb[0].mxu0 %v274
      %v481 = vpop.f32.mrb[0].mxu0
      %v482 = vadd.f32 0.0, %v481
      %v483 = vpop.f32.mrb[0].mxu0
      %484 = vmatprep.mubr.f32.mxu0 0.0
      %485 = vmatmul.mubr.f32.gmra.mrb[0].mxu0 %v277
      %v486 = vpop.f32.mrb[0].mxu0
      %v487 = vadd.f32 0.0, %v486
      %v488 = vpop.f32.mrb[0].mxu0
      %489 = vmatprep.mubr.f32.mxu0 0.0
      %490 = vmatmul.mubr.f32.gmra.mrb[0].mxu0 %v280
      %v491 = vpop.f32.mrb[0].mxu0
      %v492 = vadd.f32 0.0, %v491
      %v493 = vpop.f32.mrb[0].mxu0
      %494 = vmatprep.mubr.f32.mxu0 0.0
      %495 = vmatmul.mubr.f32.gmra.mrb[0].mxu0 %v283
      %v496 = vpop.f32.mrb[0].mxu0
      %v497 = vadd.f32 0.0, %v496
      %v498 = vpop.f32.mrb[0].mxu0
      %499 = vmatprep.mubr.f32.mxu0 0.0
      %500 = vmatmul.mubr.f32.gmra.mrb[0].mxu0 %v286
      %v501 = vpop.f32.mrb[0].mxu0
      %v502 = vadd.f32 0.0, %v501
      %v503 = vpop.f32.mrb[0].mxu0
      %504 = vmatprep.mubr.f32.mxu0 0.0
      %505 = vmatmul.mubr.f32.gmra.mrb[0].mxu0 %v289
      %v506 = vpop.f32.mrb[0].mxu0
      %v507 = vadd.f32 0.0, %v506
      %v508 = vpop.f32.mrb[0].mxu0
      %509 = vmatprep.mubr.f32.mxu0 0.0
      %510 = vmatmul.mubr.f32.gmra.mrb[0].mxu0 %v292
      %v511 = vpop.f32.mrb[0].mxu0
      %v512 = vadd.f32 0.0, %v511
      %v513 = vpop.f32.mrb[0].mxu0
      %514 = vmatprep.mubr.f32.mxu0 0.0
      %515 = vmatmul.mubr.f32.gmra.mrb[0].mxu0 %v295
      %v516 = vpop.f32.mrb[0].mxu0
      %v517 = vadd.f32 0.0, %v516
      %v518 = vpop.f32.mrb[0].mxu0
      %519 = vmatprep.mubr.f32.mxu0 0.0
      %520 = vmatmul.mubr.f32.gmra.mrb[0].mxu0 %v298
      %v521 = vpop.f32.mrb[0].mxu0
      %v522 = vadd.f32 0.0, %v521
      %v523 = vpop.f32.mrb[0].mxu0
      %524 = vdwg.mxu0
      %p525 = scmp.eq.s32.totalorder %s15, 0
      // Predicated region
      $region29: #{bottleneck_forward.4} parent=27 // pred_check
        %p526 = pneg %p525
      $region30: #{bottleneck_forward.4} parent=27 // pred_check_branch
        %528 = sbr.rel (%p526) target = $region32
      $region31: #{bottleneck_forward.4} parent=27 // pred_region
        %vm529 = vcmask 25600
        %530 = vst.msk [vmem:[%s3] sm:$0x3] %vm529, 0.0
      $region32: #{bottleneck_forward.4} parent=27 // pred_fallthru
        _
      %v531 = vld [vmem:[%s3] sm:$0x3]
      %vm532 = vcmask 31744
      %v533 = vsel %vm532, %v367, 0.0
      %v534 = vsel %vm532, %v372, 0.0
      %v535 = vadd.f32 %v533, %v534
      %v536 = vsel %vm532, %v377, 0.0
      %v537 = vadd.f32 %v535, %v536
      %v538 = vsel %vm532, %v382, 0.0
      %v539 = vadd.f32 %v537, %v538
      %v540 = vsel %vm532, %v387, 0.0
      %v541 = vadd.f32 %v539, %v540
      %v542 = vsel %vm532, %v392, 0.0
      %v543 = vadd.f32 %v541, %v542
      %v544 = vsel %vm532, %v397, 0.0
      %v545 = vadd.f32 %v543, %v544
      %v546 = vsel %vm532, %v402, 0.0
      %v547 = vadd.f32 %v545, %v546
      %v548 = vsel %vm532, %v407, 0.0
      %v549 = vadd.f32 %v547, %v548
      %v550 = vsel %vm532, %v412, 0.0
      %v551 = vadd.f32 %v549, %v550
      %v552 = vsel %vm532, %v417, 0.0
      %v553 = vadd.f32 %v551, %v552
      %v554 = vsel %vm532, %v422, 0.0
      %v555 = vadd.f32 %v553, %v554
      %v556 = vsel %vm532, %v427, 0.0
      %v557 = vadd.f32 %v555, %v556
      %v558 = vsel %vm532, %v432, 0.0
      %v559 = vadd.f32 %v557, %v558
      %v560 = vsel %vm532, %v437, 0.0
      %v561 = vadd.f32 %v559, %v560
      %v562 = vsel %vm532, %v442, 0.0
      %v563 = vadd.f32 %v561, %v562
      %v564 = vsel %vm532, %v447, 0.0
      %v565 = vadd.f32 %v563, %v564
      %v566 = vsel %vm532, %v452, 0.0
      %v567 = vadd.f32 %v565, %v566
      %v568 = vsel %vm532, %v457, 0.0
      %v569 = vadd.f32 %v567, %v568
      %v570 = vsel %vm532, %v462, 0.0
      %v571 = vadd.f32 %v569, %v570
      %v572 = vsel %vm532, %v467, 0.0
      %v573 = vadd.f32 %v571, %v572
      %v574 = vsel %vm532, %v472, 0.0
      %v575 = vadd.f32 %v573, %v574
      %v576 = vsel %vm532, %v477, 0.0
      %v577 = vadd.f32 %v575, %v576
      %v578 = vsel %vm532, %v482, 0.0
      %v579 = vadd.f32 %v577, %v578
      %v580 = vsel %vm532, %v487, 0.0
      %v581 = vadd.f32 %v579, %v580
      %v582 = vsel %vm532, %v492, 0.0
      %v583 = vadd.f32 %v581, %v582
      %v584 = vsel %vm532, %v497, 0.0
      %v585 = vadd.f32 %v583, %v584
      %v586 = vsel %vm532, %v502, 0.0
      %v587 = vadd.f32 %v585, %v586
      %v588 = vsel %vm532, %v507, 0.0
      %v589 = vadd.f32 %v587, %v588
      %v590 = vsel %vm532, %v512, 0.0
      %v591 = vadd.f32 %v589, %v590
      %v592 = vsel %vm532, %v517, 0.0
      %v593 = vadd.f32 %v591, %v592
      %v594 = vsel %vm532, %v522, 0.0
      %v595 = vadd.f32 %v593, %v594
      %v596 = vrot.slane %v595, 4
      %v597 = vadd.f32 %v595, %v596
      %v598 = vrot.slane %v597, 2
      %v599 = vadd.f32 %v597, %v598
      %v600 = vrot.slane %v599, 1
      %v601 = vadd.f32 %v599, %v600
      %v602 = vmul.f32 %v367, %v367
      %v603 = vmul.f32 %v372, %v372
      %v604 = vmul.f32 %v377, %v377
      %v605 = vmul.f32 %v382, %v382
      %v606 = vmul.f32 %v387, %v387
      %v607 = vmul.f32 %v392, %v392
      %v608 = vmul.f32 %v397, %v397
      %v609 = vmul.f32 %v402, %v402
      %v610 = vmul.f32 %v407, %v407
      %v611 = vmul.f32 %v412, %v412
      %v612 = vmul.f32 %v417, %v417
      %v613 = vmul.f32 %v422, %v422
      %v614 = vmul.f32 %v427, %v427
      %v615 = vmul.f32 %v432, %v432
      %v616 = vmul.f32 %v437, %v437
      %v617 = vmul.f32 %v442, %v442
      %v618 = vmul.f32 %v447, %v447
      %v619 = vmul.f32 %v452, %v452
      %v620 = vmul.f32 %v457, %v457
      %v621 = vmul.f32 %v462, %v462
      %v622 = vmul.f32 %v467, %v467
      %v623 = vmul.f32 %v472, %v472
      %v624 = vmul.f32 %v477, %v477
      %v625 = vmul.f32 %v482, %v482
      %v626 = vmul.f32 %v487, %v487
      %v627 = vmul.f32 %v492, %v492
      %v628 = vmul.f32 %v497, %v497
      %v629 = vmul.f32 %v502, %v502
      %v630 = vmul.f32 %v507, %v507
      %v631 = vmul.f32 %v512, %v512
      %v632 = vmul.f32 %v517, %v517
      %v633 = vmul.f32 %v522, %v522
      %v634 = vsel %vm532, %v602, 0.0
      %v635 = vsel %vm532, %v603, 0.0
      %v636 = vadd.f32 %v634, %v635
      %v637 = vsel %vm532, %v604, 0.0
      %v638 = vadd.f32 %v636, %v637
      %v639 = vsel %vm532, %v605, 0.0
      %v640 = vadd.f32 %v638, %v639
      %v641 = vsel %vm532, %v606, 0.0
      %v642 = vadd.f32 %v640, %v641
      %v643 = vsel %vm532, %v607, 0.0
      %v644 = vadd.f32 %v642, %v643
      %v645 = vsel %vm532, %v608, 0.0
      %v646 = vadd.f32 %v644, %v645
      %v647 = vsel %vm532, %v609, 0.0
      %v648 = vadd.f32 %v646, %v647
      %v649 = vsel %vm532, %v610, 0.0
      %v650 = vadd.f32 %v648, %v649
      %v651 = vsel %vm532, %v611, 0.0
      %v652 = vadd.f32 %v650, %v651
      %v653 = vsel %vm532, %v612, 0.0
      %v654 = vadd.f32 %v652, %v653
      %v655 = vsel %vm532, %v613, 0.0
      %v656 = vadd.f32 %v654, %v655
      %v657 = vsel %vm532, %v614, 0.0
      %v658 = vadd.f32 %v656, %v657
      %v659 = vsel %vm532, %v615, 0.0
      %v660 = vadd.f32 %v658, %v659
      %v661 = vsel %vm532, %v616, 0.0
      %v662 = vadd.f32 %v660, %v661
      %v663 = vsel %vm532, %v617, 0.0
      %v664 = vadd.f32 %v662, %v663
      %v665 = vsel %vm532, %v618, 0.0
      %v666 = vadd.f32 %v664, %v665
      %v667 = vsel %vm532, %v619, 0.0
      %v668 = vadd.f32 %v666, %v667
      %v669 = vsel %vm532, %v620, 0.0
      %v670 = vadd.f32 %v668, %v669
      %v671 = vsel %vm532, %v621, 0.0
      %v672 = vadd.f32 %v670, %v671
      %v673 = vsel %vm532, %v622, 0.0
      %v674 = vadd.f32 %v672, %v673
      %v675 = vsel %vm532, %v623, 0.0
      %v676 = vadd.f32 %v674, %v675
      %v677 = vsel %vm532, %v624, 0.0
      %v678 = vadd.f32 %v676, %v677
      %v679 = vsel %vm532, %v625, 0.0
      %v680 = vadd.f32 %v678, %v679
      %v681 = vsel %vm532, %v626, 0.0
      %v682 = vadd.f32 %v680, %v681
      %v683 = vsel %vm532, %v627, 0.0
      %v684 = vadd.f32 %v682, %v683
      %v685 = vsel %vm532, %v628, 0.0
      %v686 = vadd.f32 %v684, %v685
      %v687 = vsel %vm532, %v629, 0.0
      %v688 = vadd.f32 %v686, %v687
      %v689 = vsel %vm532, %v630, 0.0
      %v690 = vadd.f32 %v688, %v689
      %v691 = vsel %vm532, %v631, 0.0
      %v692 = vadd.f32 %v690, %v691
      %v693 = vsel %vm532, %v632, 0.0
      %v694 = vadd.f32 %v692, %v693
      %v695 = vsel %vm532, %v633, 0.0
      %v696 = vadd.f32 %v694, %v695
      %v697 = vrot.slane %v696, 4
      %v698 = vadd.f32 %v696, %v697
      %v699 = vrot.slane %v698, 2
      %v700 = vadd.f32 %v698, %v699
      %v701 = vrot.slane %v700, 1
      %v702 = vadd.f32 %v700, %v701
      %vm703 = vcmask 1040384
      %v704 = vsel %vm703, %v601, %v702
      %v705 = vadd.f32 %v531, %v704
      %vm706 = vcmask 25600
      %707 = vst.msk [vmem:[%s3] sm:$0x3] %vm706, %v705
      %708 = vst.msk [vmem:[%s168] sm:$0xff] %vm532, %v367
      %709 = vst.msk [vmem:[%s168 + $0x8] sm:$0xff] %vm532, %v372
      %710 = vst.msk [vmem:[%s168 + $0x10] sm:$0xff] %vm532, %v377
      %711 = vst.msk [vmem:[%s168 + $0x18] sm:$0xff] %vm532, %v382
      %712 = vst.msk [vmem:[%s168 + $0x20] sm:$0xff] %vm532, %v387
      %713 = vst.msk [vmem:[%s168 + $0x28] sm:$0xff] %vm532, %v392
      %714 = vst.msk [vmem:[%s168 + $0x30] sm:$0xff] %vm532, %v397
      %715 = vst.msk [vmem:[%s168 + $0x38] sm:$0xff] %vm532, %v402
      %716 = vst.msk [vmem:[%s168 + $0x40] sm:$0xff] %vm532, %v407
      %717 = vst.msk [vmem:[%s168 + $0x48] sm:$0xff] %vm532, %v412
      %718 = vst.msk [vmem:[%s168 + $0x50] sm:$0xff] %vm532, %v417
      %719 = vst.msk [vmem:[%s168 + $0x58] sm:$0xff] %vm532, %v422
      %720 = vst.msk [vmem:[%s168 + $0x60] sm:$0xff] %vm532, %v427
      %721 = vst.msk [vmem:[%s168 + $0x68] sm:$0xff] %vm532, %v432
      %722 = vst.msk [vmem:[%s168 + $0x70] sm:$0xff] %vm532, %v437
      %723 = vst.msk [vmem:[%s168 + $0x78] sm:$0xff] %vm532, %v442
      %724 = vst.msk [vmem:[%s168 + $0x80] sm:$0xff] %vm532, %v447
      %725 = vst.msk [vmem:[%s168 + $0x88] sm:$0xff] %vm532, %v452
      %726 = vst.msk [vmem:[%s168 + $0x90] sm:$0xff] %vm532, %v457
      %727 = vst.msk [vmem:[%s168 + $0x98] sm:$0xff] %vm532, %v462
      %728 = vst.msk [vmem:[%s168 + $0xa0] sm:$0xff] %vm532, %v467
      %729 = vst.msk [vmem:[%s168 + $0xa8] sm:$0xff] %vm532, %v472
      %730 = vst.msk [vmem:[%s168 + $0xb0] sm:$0xff] %vm532, %v477
      %731 = vst.msk [vmem:[%s168 + $0xb8] sm:$0xff] %vm532, %v482
      %732 = vst.msk [vmem:[%s168 + $0xc0] sm:$0xff] %vm532, %v487
      %733 = vst.msk [vmem:[%s168 + $0xc8] sm:$0xff] %vm532, %v492
      %734 = vst.msk [vmem:[%s168 + $0xd0] sm:$0xff] %vm532, %v497
      %735 = vst.msk [vmem:[%s168 + $0xd8] sm:$0xff] %vm532, %v502
      %736 = vst.msk [vmem:[%s168 + $0xe0] sm:$0xff] %vm532, %v507
      %737 = vst.msk [vmem:[%s168 + $0xe8] sm:$0xff] %vm532, %v512
      %738 = vst.msk [vmem:[%s168 + $0xf0] sm:$0xff] %vm532, %v517
      %739 = vst.msk [vmem:[%s168 + $0xf8] sm:$0xff] %vm532, %v522
      %p740 = scmp.lt.s32.totalorder %s15, 1
      %s741 = scalar_select %p740, %s15, 1
      %s742 = smul.addr %s741, 32
      %s743 = smul.addr %s742, 8
      %s744 = scalar_lea.vmem %s2, %s743
      // Predicated region
      $region33: #{bottleneck_forward.4} parent=27 // pred_check
        %p745 = pneg %p80
      $region34: #{bottleneck_forward.4} parent=27 // pred_check_branch
        %747 = sbr.rel (%p745) target = $region36
      $region35: #{bottleneck_forward.4} parent=27 // pred_region
        _
      $region36: #{bottleneck_forward.4} parent=27 // pred_fallthru
        _
      // Predicated region
      $region37: #{bottleneck_forward.4} parent=27 // pred_check
        %p748 = pneg %p101
      $region38: #{bottleneck_forward.4} parent=27 // pred_check_branch
        %750 = sbr.rel (%p748) target = $region40
      $region39: #{bottleneck_forward.4} parent=27 // pred_region
        _
      $region40: #{bottleneck_forward.4} parent=27 // pred_fallthru
        _
      // Predicated region
      $region41: #{bottleneck_forward.4} parent=27 // pred_check
        %p751 = pneg %p101
      $region42: #{bottleneck_forward.4} parent=27 // pred_check_branch
        %753 = sbr.rel (%p751) target = $region44
      $region43: #{bottleneck_forward.4} parent=27 // pred_region
        _
      $region44: #{bottleneck_forward.4} parent=27 // pred_fallthru
        _
    $region28: #{bottleneck_forward.4} parent=5 // pred_fallthru
      _
    %p754 = scmp.le.s32.totalorder 2, %s10
    // Predicated region
    $region45: #{bottleneck_forward.4} parent=5 // pred_check
      %p755 = pneg %p754
    $region46: #{bottleneck_forward.4} parent=5 // pred_check_branch
      %757 = sbr.rel (%p755) target = $region48
    $region47: #{bottleneck_forward.4} parent=5 // pred_region
      %s758 = ssub.s32 %s10, 2
      // Predicated region
      $region49: #{bottleneck_forward.4} parent=47 // pred_check
        %p759 = pneg %p86
      $region50: #{bottleneck_forward.4} parent=47 // pred_check_branch
        %761 = sbr.rel (%p759) target = $region52
      $region51: #{bottleneck_forward.4} parent=47 // pred_region
        %p762 = scmp.lt.s32.totalorder %s16, 1
        %s763 = scalar_select %p762, %s16, 1
        %s764 = smul.addr %s763, 32
        %s765 = smul.addr %s764, 8
        %s766 = scalar_lea.vmem %s2, %s765
      $region52: #{bottleneck_forward.4} parent=47 // pred_fallthru
        _
    $region48: #{bottleneck_forward.4} parent=5 // pred_fallthru
      _
  $region6: #{bottleneck_forward.4} parent=0 // loop_footer
    %s14 = sadd.s32 1, %s10
  $region7: #{bottleneck_forward.4} parent=0 // loop_footer_branch
    %9 = sbr.rel target = $region3
  $region8: #{bottleneck_forward.4} parent=0 // loop_exit
    _

// kernel: bottleneck_forward.6
$region0: #{bottleneck_forward.6}
  #allocation0 [shape = 'u32[]', space=smem, size = 0x4, offset = 0x4, fixed_abs, tag = 'smem constant byte address 0x4 - core index']
  #allocation1 [shape = 'u32[144,128]{1,0:T(1,128)}', space=vmem, size = 0x12000, scoped, tag = 'internal scratch']
  %s0 = inlined_call_operand.vmem [shape: f32[2,16,16,4], index: 0, kind: input, shape index: {}]
  %s1 = inlined_call_operand.vmem [shape: f32[1,4], index: 1, kind: input, shape index: {}]
  %s2 = inlined_call_operand.vmem [shape: f32[1,4], index: 2, kind: input, shape index: {}]
  %s3 = inlined_call_operand.vmem [shape: f32[4,16], index: 3, kind: input, shape index: {}]
  %s4 = inlined_call_operand.vmem [shape: f32[2,16,16,16], index: 4, kind: output, shape index: {0}]
  %s5 = inlined_call_operand.vmem [shape: f32[2,16], index: 5, kind: output, shape index: {1}]
  %6 = xla_tuple %s4, %s5
  %s7 = sld [smem:[#allocation0]]
  $region61: #{bottleneck_forward.6} parent=0
    _
  %s9 = ssub.s32 1, %s7
  %s10 = scalar_select 0, %s9, %s7
  loop: start=0, step=1, limit=4
  $region2: #{bottleneck_forward.6} parent=0 // loop_pre_header
    _
  $region3: #{bottleneck_forward.6} parent=0 // loop_header
    %s12 = sphi 0, %s16
    %p13 = scmp.ge.s32.totalorder %s12, 4
    %s22 = sphi 0, %s24
    %s25 = sphi 0, %s22
    %s26 = sphi 0, %s25
    %s42 = sphi 0, %s26
    %s46 = sphi 0, %s46
    %s48 = sphi 0, %s46
    %s49 = sphi 0, %s48
    %s63 = sphi 0, %s49
    %s67 = sphi 0, %s67
    %s69 = sphi 0, %s67
    %s70 = sphi 0, %s69
    %s84 = sphi 0, %s70
    %s88 = sphi 0, %s88
    %s90 = sphi 0, %s88
    %s91 = sphi 0, %s90
    %s105 = sphi 0, %s91
    %s111 = sphi 0, %s113
    %s114 = sphi 0, %s111
    %s115 = sphi 0, %s114
    %s131 = sphi 0, %s115
    %s135 = sphi 0, %s135
    %s137 = sphi 0, %s135
    %s138 = sphi 0, %s137
    %s152 = sphi 0, %s138
  $region4: #{bottleneck_forward.6} parent=0 // loop_header_branch
    %15 = sbr.rel (%p13) target = $region8
  $region5: #{bottleneck_forward.6} parent=0 // loop_body
    %s17 = ssub.s32 %s12, 1
    %s18 = ssub.s32 %s12, 2
    %s19 = sadd.s32 %s12, 1
    %s20 = ssub.s32 %s12, %s19
    %p21 = scmp.eq.s32.totalorder %s20, 0
    %s23 = sadd.s32 %s22, 1
    %s24 = scalar_select %p21, %s22, %s23
    %p27 = pneg %p21
    %p28 = scmp.eq.s32.totalorder %s12, 1
    %p29 = por %p27, %p28
    %p30 = scmp.ne.s32.totalorder %s22, %s25
    %p31 = scmp.eq.s32.totalorder %s12, 0
    %p32 = por %p30, %p31
    %p33 = scmp.ne.s32.totalorder %s22, %s25
    %p34 = scmp.eq.s32.totalorder %s17, 1
    %p35 = por %p33, %p34
    %p36 = scmp.ne.s32.totalorder %s25, %s26
    %p37 = scmp.eq.s32.totalorder %s17, 0
    %p38 = por %p36, %p37
    %p39 = scmp.ne.s32.totalorder %s25, %s26
    %p40 = scmp.eq.s32.totalorder %s18, 1
    %p41 = por %p39, %p40
    %p43 = scmp.ne.s32.totalorder %s26, %s42
    %p44 = scmp.eq.s32.totalorder %s18, 0
    %p45 = por %p43, %p44
    %s47 = sadd.s32 %s46, 1
    %p50 = scmp.eq.s32.totalorder %s12, 1
    %p51 = scmp.ne.s32.totalorder %s46, %s48
    %p52 = scmp.eq.s32.totalorder %s12, 0
    %p53 = por %p51, %p52
    %p54 = scmp.ne.s32.totalorder %s46, %s48
    %p55 = scmp.eq.s32.totalorder %s17, 1
    %p56 = por %p54, %p55
    %p57 = scmp.ne.s32.totalorder %s48, %s49
    %p58 = scmp.eq.s32.totalorder %s17, 0
    %p59 = por %p57, %p58
    %p60 = scmp.ne.s32.totalorder %s48, %s49
    %p61 = scmp.eq.s32.totalorder %s18, 1
    %p62 = por %p60, %p61
    %p64 = scmp.ne.s32.totalorder %s49, %s63
    %p65 = scmp.eq.s32.totalorder %s18, 0
    %p66 = por %p64, %p65
    %s68 = sadd.s32 %s67, 1
    %p71 = scmp.eq.s32.totalorder %s12, 1
    %p72 = scmp.ne.s32.totalorder %s67, %s69
    %p73 = scmp.eq.s32.totalorder %s12, 0
    %p74 = por %p72, %p73
    %p75 = scmp.ne.s32.totalorder %s67, %s69
    %p76 = scmp.eq.s32.totalorder %s17, 1
    %p77 = por %p75, %p76
    %p78 = scmp.ne.s32.totalorder %s69, %s70
    %p79 = scmp.eq.s32.totalorder %s17, 0
    %p80 = por %p78, %p79
    %p81 = scmp.ne.s32.totalorder %s69, %s70
    %p82 = scmp.eq.s32.totalorder %s18, 1
    %p83 = por %p81, %p82
    %p85 = scmp.ne.s32.totalorder %s70, %s84
    %p86 = scmp.eq.s32.totalorder %s18, 0
    %p87 = por %p85, %p86
    %s89 = sadd.s32 %s88, 1
    %p92 = scmp.eq.s32.totalorder %s12, 1
    %p93 = scmp.ne.s32.totalorder %s88, %s90
    %p94 = scmp.eq.s32.totalorder %s12, 0
    %p95 = por %p93, %p94
    %p96 = scmp.ne.s32.totalorder %s88, %s90
    %p97 = scmp.eq.s32.totalorder %s17, 1
    %p98 = por %p96, %p97
    %p99 = scmp.ne.s32.totalorder %s90, %s91
    %p100 = scmp.eq.s32.totalorder %s17, 0
    %p101 = por %p99, %p100
    %p102 = scmp.ne.s32.totalorder %s90, %s91
    %p103 = scmp.eq.s32.totalorder %s18, 1
    %p104 = por %p102, %p103
    %p106 = scmp.ne.s32.totalorder %s91, %s105
    %p107 = scmp.eq.s32.totalorder %s18, 0
    %p108 = por %p106, %p107
    %s109 = ssub.s32 %s12, %s19
    %p110 = scmp.eq.s32.totalorder %s109, 0
    %s112 = sadd.s32 %s111, 1
    %s113 = scalar_select %p110, %s111, %s112
    %p116 = pneg %p110
    %p117 = scmp.eq.s32.totalorder %s12, 1
    %p118 = por %p116, %p117
    %p119 = scmp.ne.s32.totalorder %s111, %s114
    %p120 = scmp.eq.s32.totalorder %s12, 0
    %p121 = por %p119, %p120
    %p122 = scmp.ne.s32.totalorder %s111, %s114
    %p123 = scmp.eq.s32.totalorder %s17, 1
    %p124 = por %p122, %p123
    %p125 = scmp.ne.s32.totalorder %s114, %s115
    %p126 = scmp.eq.s32.totalorder %s17, 0
    %p127 = por %p125, %p126
    %p128 = scmp.ne.s32.totalorder %s114, %s115
    %p129 = scmp.eq.s32.totalorder %s18, 1
    %p130 = por %p128, %p129
    %p132 = scmp.ne.s32.totalorder %s115, %s131
    %p133 = scmp.eq.s32.totalorder %s18, 0
    %p134 = por %p132, %p133
    %s136 = sadd.s32 %s135, 1
    %p139 = scmp.eq.s32.totalorder %s12, 1
    %p140 = scmp.ne.s32.totalorder %s135, %s137
    %p141 = scmp.eq.s32.totalorder %s12, 0
    %p142 = por %p140, %p141
    %p143 = scmp.ne.s32.totalorder %s135, %s137
    %p144 = scmp.eq.s32.totalorder %s17, 1
    %p145 = por %p143, %p144
    %p146 = scmp.ne.s32.totalorder %s137, %s138
    %p147 = scmp.eq.s32.totalorder %s17, 0
    %p148 = por %p146, %p147
    %p149 = scmp.ne.s32.totalorder %s137, %s138
    %p150 = scmp.eq.s32.totalorder %s18, 1
    %p151 = por %p149, %p150
    %p153 = scmp.ne.s32.totalorder %s138, %s152
    %p154 = scmp.eq.s32.totalorder %s18, 0
    %p155 = por %p153, %p154
    %p156 = scmp.le.s32.totalorder 1, %s12
    %p157 = scmp.lt.s32.totalorder %s12, 3
    %p158 = pnand %p156, %p157
    %p159 = pneg %p158
    // Predicated region
    $region9: #{bottleneck_forward.6} parent=5 // pred_check
      _
    $region10: #{bottleneck_forward.6} parent=5 // pred_check_branch
      %161 = sbr.rel (%p158) target = $region12
    $region11: #{bottleneck_forward.6} parent=5 // pred_region
      %s162 = ssub.s32 %s12, 1
      // Predicated region
      $region13: #{bottleneck_forward.6} parent=11 // pred_check
        %p163 = pneg %p59
      $region14: #{bottleneck_forward.6} parent=11 // pred_check_branch
        %165 = sbr.rel (%p163) target = $region16
      $region15: #{bottleneck_forward.6} parent=11 // pred_region
        _
      $region16: #{bottleneck_forward.6} parent=11 // pred_fallthru
        _
      // Predicated region
      $region17: #{bottleneck_forward.6} parent=11 // pred_check
        %p166 = pneg %p80
      $region18: #{bottleneck_forward.6} parent=11 // pred_check_branch
        %168 = sbr.rel (%p166) target = $region20
      $region19: #{bottleneck_forward.6} parent=11 // pred_region
        _
      $region20: #{bottleneck_forward.6} parent=11 // pred_fallthru
        _
      // Predicated region
      $region21: #{bottleneck_forward.6} parent=11 // pred_check
        %p169 = pneg %p101
      $region22: #{bottleneck_forward.6} parent=11 // pred_check_branch
        %171 = sbr.rel (%p169) target = $region24
      $region23: #{bottleneck_forward.6} parent=11 // pred_region
        _
      $region24: #{bottleneck_forward.6} parent=11 // pred_fallthru
        _
    $region12: #{bottleneck_forward.6} parent=5 // pred_fallthru
      _
    %p172 = scmp.lt.s32.totalorder %s12, 2
    // Predicated region
    $region25: #{bottleneck_forward.6} parent=5 // pred_check
      %p173 = pneg %p172
    $region26: #{bottleneck_forward.6} parent=5 // pred_check_branch
      %175 = sbr.rel (%p173) target = $region28
    $region27: #{bottleneck_forward.6} parent=5 // pred_region
      // Predicated region
      $region29: #{bottleneck_forward.6} parent=27 // pred_check
        %p176 = pneg %p32
      $region30: #{bottleneck_forward.6} parent=27 // pred_check_branch
        %178 = sbr.rel (%p176) target = $region32
      $region31: #{bottleneck_forward.6} parent=27 // pred_region
        %p179 = scmp.lt.s32.totalorder %s12, 1
        %s180 = scalar_select %p179, %s12, 1
        %s181 = smul.addr %s180, 32
        %s182 = smul.addr %s181, 8
        %s183 = scalar_lea.vmem %s0, %s182
      $region32: #{bottleneck_forward.6} parent=27 // pred_fallthru
        _
    $region28: #{bottleneck_forward.6} parent=5 // pred_fallthru
      _
    %p184 = scmp.le.s32.totalorder 1, %s12
    %p185 = scmp.lt.s32.totalorder %s12, 3
    %p186 = pnand %p184, %p185
    %p187 = pneg %p186
    // Predicated region
    $region33: #{bottleneck_forward.6} parent=5 // pred_check
      _
    $region34: #{bottleneck_forward.6} parent=5 // pred_check_branch
      %189 = sbr.rel (%p186) target = $region36
    $region35: #{bottleneck_forward.6} parent=5 // pred_region
      %s190 = ssub.s32 %s12, 1
      %p191 = scmp.lt.s32.totalorder %s17, 1
      %s192 = scalar_select %p191, %s17, 1
      %s193 = smul.addr %s192, 32
      %s194 = smul.addr %s193, 8
      %s195 = scalar_lea.vmem %s0, %s194
      %p196 = pneg %p38
      %p197 = pneg %p35
      %p198 = pneg %p59
      %p199 = pneg %p56
      %p200 = pneg %p80
      %p201 = pneg %p77
      %p202 = pneg %p101
      %p203 = pneg %p98
      %p204 = pneg %p127
      %p205 = pneg %p124
      %p206 = scmp.lt.s32.totalorder %s17, 1
      %s207 = scalar_select %p206, %s17, 1
      %s208 = smul.addr %s207, 32
      %s209 = smul.addr %s208, 8
      %s210 = scalar_lea.vmem %s4, %s209
      %p211 = pneg %p148
      %p212 = pneg %p145
      %p213 = scmp.lt.s32.totalorder %s17, 1
      %s214 = scalar_select %p213, %s17, 1
      %s215 = smul.addr %s214, 32
      %s216 = smul.addr %s215, 8
      %s217 = scalar_lea.vmem %s0, %s216
      %p218 = scmp.lt.s32.totalorder %s17, 1
      %s219 = scalar_select %p218, %s17, 1
      %s220 = smul.addr %s219, 32
      %s221 = smul.addr %s220, 8
      %s222 = scalar_lea.vmem %s4, %s221
      %v223 = vld [vmem:[%s217] sm:$0xff]
      %v224 = vld [vmem:[%s217 + $0x8] sm:$0xff]
      %v225 = vld [vmem:[%s217 + $0x10] sm:$0xff]
      %v226 = vld [vmem:[%s217 + $0x18] sm:$0xff]
      %v227 = vld [vmem:[%s217 + $0x20] sm:$0xff]
      %v228 = vld [vmem:[%s217 + $0x28] sm:$0xff]
      %v229 = vld [vmem:[%s217 + $0x30] sm:$0xff]
      %v230 = vld [vmem:[%s217 + $0x38] sm:$0xff]
      %v231 = vld [vmem:[%s217 + $0x40] sm:$0xff]
      %v232 = vld [vmem:[%s217 + $0x48] sm:$0xff]
      %v233 = vld [vmem:[%s217 + $0x50] sm:$0xff]
      %v234 = vld [vmem:[%s217 + $0x58] sm:$0xff]
      %v235 = vld [vmem:[%s217 + $0x60] sm:$0xff]
      %v236 = vld [vmem:[%s217 + $0x68] sm:$0xff]
      %v237 = vld [vmem:[%s217 + $0x70] sm:$0xff]
      %v238 = vld [vmem:[%s217 + $0x78] sm:$0xff]
      %v239 = vld [vmem:[%s217 + $0x80] sm:$0xff]
      %v240 = vld [vmem:[%s217 + $0x88] sm:$0xff]
      %v241 = vld [vmem:[%s217 + $0x90] sm:$0xff]
      %v242 = vld [vmem:[%s217 + $0x98] sm:$0xff]
      %v243 = vld [vmem:[%s217 + $0xa0] sm:$0xff]
      %v244 = vld [vmem:[%s217 + $0xa8] sm:$0xff]
      %v245 = vld [vmem:[%s217 + $0xb0] sm:$0xff]
      %v246 = vld [vmem:[%s217 + $0xb8] sm:$0xff]
      %v247 = vld [vmem:[%s217 + $0xc0] sm:$0xff]
      %v248 = vld [vmem:[%s217 + $0xc8] sm:$0xff]
      %v249 = vld [vmem:[%s217 + $0xd0] sm:$0xff]
      %v250 = vld [vmem:[%s217 + $0xd8] sm:$0xff]
      %v251 = vld [vmem:[%s217 + $0xe0] sm:$0xff]
      %v252 = vld [vmem:[%s217 + $0xe8] sm:$0xff]
      %v253 = vld [vmem:[%s217 + $0xf0] sm:$0xff]
      %v254 = vld [vmem:[%s217 + $0xf8] sm:$0xff]
      %v255 = vld [vmem:[%s1] sm:$0x1]
      %v257 = vlaneseq
      %v258 = vshrl.u32 %v257, 7
      %v259 = vsub.s32 0, %v258
      %v260 = vrot.slane %v255, %v259
      %v262 = vmul.f32 %v223, %v260
      %v263 = vmul.f32 %v224, %v260
      %v264 = vmul.f32 %v225, %v260
      %v265 = vmul.f32 %v226, %v260
      %v266 = vmul.f32 %v227, %v260
      %v267 = vmul.f32 %v228, %v260
      %v268 = vmul.f32 %v229, %v260
      %v269 = vmul.f32 %v230, %v260
      %v270 = vmul.f32 %v231, %v260
      %v271 = vmul.f32 %v232, %v260
      %v272 = vmul.f32 %v233, %v260
      %v273 = vmul.f32 %v234, %v260
      %v274 = vmul.f32 %v235, %v260
      %v275 = vmul.f32 %v236, %v260
      %v276 = vmul.f32 %v237, %v260
      %v277 = vmul.f32 %v238, %v260
      %v278 = vmul.f32 %v239, %v260
      %v279 = vmul.f32 %v240, %v260
      %v280 = vmul.f32 %v241, %v260
      %v281 = vmul.f32 %v242, %v260
      %v282 = vmul.f32 %v243, %v260
      %v283 = vmul.f32 %v244, %v260
      %v284 = vmul.f32 %v245, %v260
      %v285 = vmul.f32 %v246, %v260
      %v286 = vmul.f32 %v247, %v260
      %v287 = vmul.f32 %v248, %v260
      %v288 = vmul.f32 %v249, %v260
      %v289 = vmul.f32 %v250, %v260
      %v290 = vmul.f32 %v251, %v260
      %v291 = vmul.f32 %v252, %v260
      %v292 = vmul.f32 %v253, %v260
      %v293 = vmul.f32 %v254, %v260
      %v294 = vld [vmem:[%s2] sm:$0x1]
      %v296 = vlaneseq
      %v297 = vshrl.u32 %v296, 7
      %v298 = vsub.s32 0, %v297
      %v299 = vrot.slane %v294, %v298
      %v301 = vadd.f32 %v262, %v299
      %v302 = vadd.f32 %v263, %v299
      %v303 = vadd.f32 %v264, %v299
      %v304 = vadd.f32 %v265, %v299
      %v305 = vadd.f32 %v266, %v299
      %v306 = vadd.f32 %v267, %v299
      %v307 = vadd.f32 %v268, %v299
      %v308 = vadd.f32 %v269, %v299
      %v309 = vadd.f32 %v270, %v299
      %v310 = vadd.f32 %v271, %v299
      %v311 = vadd.f32 %v272, %v299
      %v312 = vadd.f32 %v273, %v299
      %v313 = vadd.f32 %v274, %v299
      %v314 = vadd.f32 %v275, %v299
      %v315 = vadd.f32 %v276, %v299
      %v316 = vadd.f32 %v277, %v299
      %v317 = vadd.f32 %v278, %v299
      %v318 = vadd.f32 %v279, %v299
      %v319 = vadd.f32 %v280, %v299
      %v320 = vadd.f32 %v281, %v299
      %v321 = vadd.f32 %v282, %v299
      %v322 = vadd.f32 %v283, %v299
      %v323 = vadd.f32 %v284, %v299
      %v324 = vadd.f32 %v285, %v299
      %v325 = vadd.f32 %v286, %v299
      %v326 = vadd.f32 %v287, %v299
      %v327 = vadd.f32 %v288, %v299
      %v328 = vadd.f32 %v289, %v299
      %v329 = vadd.f32 %v290, %v299
      %v330 = vadd.f32 %v291, %v299
      %v331 = vadd.f32 %v292, %v299
      %v332 = vadd.f32 %v293, %v299
      %v333 = vmax.f32 %v301, 0.0
      %v334 = vmax.f32 %v302, 0.0
      %v335 = vmax.f32 %v303, 0.0
      %v336 = vmax.f32 %v304, 0.0
      %v337 = vmax.f32 %v305, 0.0
      %v338 = vmax.f32 %v306, 0.0
      %v339 = vmax.f32 %v307, 0.0
      %v340 = vmax.f32 %v308, 0.0
      %v341 = vmax.f32 %v309, 0.0
      %v342 = vmax.f32 %v310, 0.0
      %v343 = vmax.f32 %v311, 0.0
      %v344 = vmax.f32 %v312, 0.0
      %v345 = vmax.f32 %v313, 0.0
      %v346 = vmax.f32 %v314, 0.0
      %v347 = vmax.f32 %v315, 0.0
      %v348 = vmax.f32 %v316, 0.0
      %v349 = vmax.f32 %v317, 0.0
      %v350 = vmax.f32 %v318, 0.0
      %v351 = vmax.f32 %v319, 0.0
      %v352 = vmax.f32 %v320, 0.0
      %v353 = vmax.f32 %v321, 0.0
      %v354 = vmax.f32 %v322, 0.0
      %v355 = vmax.f32 %v323, 0.0
      %v356 = vmax.f32 %v324, 0.0
      %v357 = vmax.f32 %v325, 0.0
      %v358 = vmax.f32 %v326, 0.0
      %v359 = vmax.f32 %v327, 0.0
      %v360 = vmax.f32 %v328, 0.0
      %v361 = vmax.f32 %v329, 0.0
      %v362 = vmax.f32 %v330, 0.0
      %v363 = vmax.f32 %v331, 0.0
      %v364 = vmax.f32 %v332, 0.0
      %v365 = vld [vmem:[%s3] sm:$0xf]
      %vm366 = vcmask 31744
      %v368 = vsel %vm366, %v333, 0
      %v371 = vsel %vm366, %v334, 0
      %v374 = vsel %vm366, %v335, 0
      %v377 = vsel %vm366, %v336, 0
      %v380 = vsel %vm366, %v337, 0
      %v383 = vsel %vm366, %v338, 0
      %v386 = vsel %vm366, %v339, 0
      %v389 = vsel %vm366, %v340, 0
      %v392 = vsel %vm366, %v341, 0
      %v395 = vsel %vm366, %v342, 0
      %v398 = vsel %vm366, %v343, 0
      %v401 = vsel %vm366, %v344, 0
      %v404 = vsel %vm366, %v345, 0
      %v407 = vsel %vm366, %v346, 0
      %v410 = vsel %vm366, %v347, 0
      %v413 = vsel %vm366, %v348, 0
      %v416 = vsel %vm366, %v349, 0
      %v419 = vsel %vm366, %v350, 0
      %v422 = vsel %vm366, %v351, 0
      %v425 = vsel %vm366, %v352, 0
      %v428 = vsel %vm366, %v353, 0
      %v431 = vsel %vm366, %v354, 0
      %v434 = vsel %vm366, %v355, 0
      %v437 = vsel %vm366, %v356, 0
      %v440 = vsel %vm366, %v357, 0
      %v443 = vsel %vm366, %v358, 0
      %v446 = vsel %vm366, %v359, 0
      %v449 = vsel %vm366, %v360, 0
      %v452 = vsel %vm366, %v361, 0
      %v455 = vsel %vm366, %v362, 0
      %v458 = vsel %vm366, %v363, 0
      %v461 = vsel %vm366, %v364, 0
      %vm463 = vcmask 1043456
      %v465 = vsel %vm463, %v365, 0
      %467 = vmatprep.subr.mxu0 0.0
      %468 = vmatpush1.msra.mxu0 %v465
      %469 = vmatprep.subr.mxu0 0.0
      %470 = vmatpush1.msra.mxu0 0.0
      %471 = vmatprep.subr.mxu0 0.0
      %472 = vmatpush1.msra.mxu0 0.0
      %473 = vmatprep.subr.mxu0 0.0
      %474 = vmatpush1.msra.mxu0 0.0
      %475 = vmatprep.subr.mxu0 0.0
      %476 = vmatpush1.msra.mxu0 0.0
      %477 = vmatprep.subr.mxu0 0.0
      %478 = vmatpush1.msra.mxu0 0.0
      %479 = vmatprep.subr.mxu0 0.0
      %480 = vmatpush1.msra.mxu0 0.0
      %481 = vmatprep.subr.mxu0 0.0
      %482 = vmatpush1.msra.mxu0 0.0
      %483 = vmatprep.subr.mxu0 0.0
      %484 = vmatpush1.msra.mxu0 0.0
      %485 = vmatprep.subr.mxu0 0.0
      %486 = vmatpush1.msra.mxu0 0.0
      %487 = vmatprep.subr.mxu0 0.0
      %488 = vmatpush1.msra.mxu0 0.0
      %489 = vmatprep.subr.mxu0 0.0
      %490 = vmatpush1.msra.mxu0 0.0
      %491 = vmatprep.subr.mxu0 0.0
      %492 = vmatpush1.msra.mxu0 0.0
      %493 = vmatprep.subr.mxu0 0.0
      %494 = vmatpush1.msra.mxu0 0.0
      %495 = vmatprep.subr.mxu0 0.0
      %496 = vmatpush1.msra.mxu0 0.0
      %497 = vmatprep.subr.mxu0 0.0
      %498 = vmatpush1.msra.mxu0 0.0
      %499 = vmatprep.subr.mxu0 0.0
      %500 = vmatpush1.msra.mxu0 0.0
      %501 = vmatprep.subr.mxu0 0.0
      %502 = vmatpush1.msra.mxu0 0.0
      %503 = vmatprep.subr.mxu0 0.0
      %504 = vmatpush1.msra.mxu0 0.0
      %505 = vmatprep.subr.mxu0 0.0
      %506 = vmatpush1.msra.mxu0 0.0
      %507 = vmatprep.subr.mxu0 0.0
      %508 = vmatpush1.msra.mxu0 0.0
      %509 = vmatprep.subr.mxu0 0.0
      %510 = vmatpush1.msra.mxu0 0.0
      %511 = vmatprep.subr.mxu0 0.0
      %512 = vmatpush1.msra.mxu0 0.0
      %513 = vmatprep.subr.mxu0 0.0
      %514 = vmatpush1.msra.mxu0 0.0
      %515 = vmatprep.subr.mxu0 0.0
      %516 = vmatpush1.msra.mxu0 0.0
      %517 = vmatprep.subr.mxu0 0.0
      %518 = vmatpush1.msra.mxu0 0.0
      %519 = vmatprep.subr.mxu0 0.0
      %520 = vmatpush1.msra.mxu0 0.0
      %521 = vmatprep.subr.mxu0 0.0
      %522 = vmatpush1.msra.mxu0 0.0
      %523 = vmatprep.subr.mxu0 0.0
      %524 = vmatpush1.msra.mxu0 0.0
      %525 = vmatprep.subr.mxu0 0.0
      %526 = vmatpush1.msra.mxu0 0.0
      %527 = vmatprep.subr.mxu0 0.0
      %528 = vmatpush1.msra.mxu0 0.0
      %529 = vmatprep.subr.mxu0 0.0
      %530 = vmatpush1.msra.mxu0 0.0
      %531 = vmatprep.mubr.f32.mxu0 0.0
      %532 = vmatmul.mubr.f32.gmra.mrb[0].mxu0 %v368
      %v533 = vpop.f32.mrb[0].mxu0
      %v534 = vadd.f32 0.0, %v533
      %v535 = vpop.f32.mrb[0].mxu0
      %536 = vmatprep.mubr.f32.mxu0 0.0
      %537 = vmatmul.mubr.f32.gmra.mrb[0].mxu0 %v371
      %v538 = vpop.f32.mrb[0].mxu0
      %v539 = vadd.f32 0.0, %v538
      %v540 = vpop.f32.mrb[0].mxu0
      %541 = vmatprep.mubr.f32.mxu0 0.0
      %542 = vmatmul.mubr.f32.gmra.mrb[0].mxu0 %v374
      %v543 = vpop.f32.mrb[0].mxu0
      %v544 = vadd.f32 0.0, %v543
      %v545 = vpop.f32.mrb[0].mxu0
      %546 = vmatprep.mubr.f32.mxu0 0.0
      %547 = vmatmul.mubr.f32.gmra.mrb[0].mxu0 %v377
      %v548 = vpop.f32.mrb[0].mxu0
      %v549 = vadd.f32 0.0, %v548
      %v550 = vpop.f32.mrb[0].mxu0
      %551 = vmatprep.mubr.f32.mxu0 0.0
      %552 = vmatmul.mubr.f32.gmra.mrb[0].mxu0 %v380
      %v553 = vpop.f32.mrb[0].mxu0
      %v554 = vadd.f32 0.0, %v553
      %v555 = vpop.f32.mrb[0].mxu0
      %556 = vmatprep.mubr.f32.mxu0 0.0
      %557 = vmatmul.mubr.f32.gmra.mrb[0].mxu0 %v383
      %v558 = vpop.f32.mrb[0].mxu0
      %v559 = vadd.f32 0.0, %v558
      %v560 = vpop.f32.mrb[0].mxu0
      %561 = vmatprep.mubr.f32.mxu0 0.0
      %562 = vmatmul.mubr.f32.gmra.mrb[0].mxu0 %v386
      %v563 = vpop.f32.mrb[0].mxu0
      %v564 = vadd.f32 0.0, %v563
      %v565 = vpop.f32.mrb[0].mxu0
      %566 = vmatprep.mubr.f32.mxu0 0.0
      %567 = vmatmul.mubr.f32.gmra.mrb[0].mxu0 %v389
      %v568 = vpop.f32.mrb[0].mxu0
      %v569 = vadd.f32 0.0, %v568
      %v570 = vpop.f32.mrb[0].mxu0
      %571 = vmatprep.mubr.f32.mxu0 0.0
      %572 = vmatmul.mubr.f32.gmra.mrb[0].mxu0 %v392
      %v573 = vpop.f32.mrb[0].mxu0
      %v574 = vadd.f32 0.0, %v573
      %v575 = vpop.f32.mrb[0].mxu0
      %576 = vmatprep.mubr.f32.mxu0 0.0
      %577 = vmatmul.mubr.f32.gmra.mrb[0].mxu0 %v395
      %v578 = vpop.f32.mrb[0].mxu0
      %v579 = vadd.f32 0.0, %v578
      %v580 = vpop.f32.mrb[0].mxu0
      %581 = vmatprep.mubr.f32.mxu0 0.0
      %582 = vmatmul.mubr.f32.gmra.mrb[0].mxu0 %v398
      %v583 = vpop.f32.mrb[0].mxu0
      %v584 = vadd.f32 0.0, %v583
      %v585 = vpop.f32.mrb[0].mxu0
      %586 = vmatprep.mubr.f32.mxu0 0.0
      %587 = vmatmul.mubr.f32.gmra.mrb[0].mxu0 %v401
      %v588 = vpop.f32.mrb[0].mxu0
      %v589 = vadd.f32 0.0, %v588
      %v590 = vpop.f32.mrb[0].mxu0
      %591 = vmatprep.mubr.f32.mxu0 0.0
      %592 = vmatmul.mubr.f32.gmra.mrb[0].mxu0 %v404
      %v593 = vpop.f32.mrb[0].mxu0
      %v594 = vadd.f32 0.0, %v593
      %v595 = vpop.f32.mrb[0].mxu0
      %596 = vmatprep.mubr.f32.mxu0 0.0
      %597 = vmatmul.mubr.f32.gmra.mrb[0].mxu0 %v407
      %v598 = vpop.f32.mrb[0].mxu0
      %v599 = vadd.f32 0.0, %v598
      %v600 = vpop.f32.mrb[0].mxu0
      %601 = vmatprep.mubr.f32.mxu0 0.0
      %602 = vmatmul.mubr.f32.gmra.mrb[0].mxu0 %v410
      %v603 = vpop.f32.mrb[0].mxu0
      %v604 = vadd.f32 0.0, %v603
      %v605 = vpop.f32.mrb[0].mxu0
      %606 = vmatprep.mubr.f32.mxu0 0.0
      %607 = vmatmul.mubr.f32.gmra.mrb[0].mxu0 %v413
      %v608 = vpop.f32.mrb[0].mxu0
      %v609 = vadd.f32 0.0, %v608
      %v610 = vpop.f32.mrb[0].mxu0
      %611 = vmatprep.mubr.f32.mxu0 0.0
      %612 = vmatmul.mubr.f32.gmra.mrb[0].mxu0 %v416
      %v613 = vpop.f32.mrb[0].mxu0
      %v614 = vadd.f32 0.0, %v613
      %v615 = vpop.f32.mrb[0].mxu0
      %616 = vmatprep.mubr.f32.mxu0 0.0
      %617 = vmatmul.mubr.f32.gmra.mrb[0].mxu0 %v419
      %v618 = vpop.f32.mrb[0].mxu0
      %v619 = vadd.f32 0.0, %v618
      %v620 = vpop.f32.mrb[0].mxu0
      %621 = vmatprep.mubr.f32.mxu0 0.0
      %622 = vmatmul.mubr.f32.gmra.mrb[0].mxu0 %v422
      %v623 = vpop.f32.mrb[0].mxu0
      %v624 = vadd.f32 0.0, %v623
      %v625 = vpop.f32.mrb[0].mxu0
      %626 = vmatprep.mubr.f32.mxu0 0.0
      %627 = vmatmul.mubr.f32.gmra.mrb[0].mxu0 %v425
      %v628 = vpop.f32.mrb[0].mxu0
      %v629 = vadd.f32 0.0, %v628
      %v630 = vpop.f32.mrb[0].mxu0
      %631 = vmatprep.mubr.f32.mxu0 0.0
      %632 = vmatmul.mubr.f32.gmra.mrb[0].mxu0 %v428
      %v633 = vpop.f32.mrb[0].mxu0
      %v634 = vadd.f32 0.0, %v633
      %v635 = vpop.f32.mrb[0].mxu0
      %636 = vmatprep.mubr.f32.mxu0 0.0
      %637 = vmatmul.mubr.f32.gmra.mrb[0].mxu0 %v431
      %v638 = vpop.f32.mrb[0].mxu0
      %v639 = vadd.f32 0.0, %v638
      %v640 = vpop.f32.mrb[0].mxu0
      %641 = vmatprep.mubr.f32.mxu0 0.0
      %642 = vmatmul.mubr.f32.gmra.mrb[0].mxu0 %v434
      %v643 = vpop.f32.mrb[0].mxu0
      %v644 = vadd.f32 0.0, %v643
      %v645 = vpop.f32.mrb[0].mxu0
      %646 = vmatprep.mubr.f32.mxu0 0.0
      %647 = vmatmul.mubr.f32.gmra.mrb[0].mxu0 %v437
      %v648 = vpop.f32.mrb[0].mxu0
      %v649 = vadd.f32 0.0, %v648
      %v650 = vpop.f32.mrb[0].mxu0
      %651 = vmatprep.mubr.f32.mxu0 0.0
      %652 = vmatmul.mubr.f32.gmra.mrb[0].mxu0 %v440
      %v653 = vpop.f32.mrb[0].mxu0
      %v654 = vadd.f32 0.0, %v653
      %v655 = vpop.f32.mrb[0].mxu0
      %656 = vmatprep.mubr.f32.mxu0 0.0
      %657 = vmatmul.mubr.f32.gmra.mrb[0].mxu0 %v443
      %v658 = vpop.f32.mrb[0].mxu0
      %v659 = vadd.f32 0.0, %v658
      %v660 = vpop.f32.mrb[0].mxu0
      %661 = vmatprep.mubr.f32.mxu0 0.0
      %662 = vmatmul.mubr.f32.gmra.mrb[0].mxu0 %v446
      %v663 = vpop.f32.mrb[0].mxu0
      %v664 = vadd.f32 0.0, %v663
      %v665 = vpop.f32.mrb[0].mxu0
      %666 = vmatprep.mubr.f32.mxu0 0.0
      %667 = vmatmul.mubr.f32.gmra.mrb[0].mxu0 %v449
      %v668 = vpop.f32.mrb[0].mxu0
      %v669 = vadd.f32 0.0, %v668
      %v670 = vpop.f32.mrb[0].mxu0
      %671 = vmatprep.mubr.f32.mxu0 0.0
      %672 = vmatmul.mubr.f32.gmra.mrb[0].mxu0 %v452
      %v673 = vpop.f32.mrb[0].mxu0
      %v674 = vadd.f32 0.0, %v673
      %v675 = vpop.f32.mrb[0].mxu0
      %676 = vmatprep.mubr.f32.mxu0 0.0
      %677 = vmatmul.mubr.f32.gmra.mrb[0].mxu0 %v455
      %v678 = vpop.f32.mrb[0].mxu0
      %v679 = vadd.f32 0.0, %v678
      %v680 = vpop.f32.mrb[0].mxu0
      %681 = vmatprep.mubr.f32.mxu0 0.0
      %682 = vmatmul.mubr.f32.gmra.mrb[0].mxu0 %v458
      %v683 = vpop.f32.mrb[0].mxu0
      %v684 = vadd.f32 0.0, %v683
      %v685 = vpop.f32.mrb[0].mxu0
      %686 = vmatprep.mubr.f32.mxu0 0.0
      %687 = vmatmul.mubr.f32.gmra.mrb[0].mxu0 %v461
      %v688 = vpop.f32.mrb[0].mxu0
      %v689 = vadd.f32 0.0, %v688
      %v690 = vpop.f32.mrb[0].mxu0
      %691 = vdwg.mxu0
      %p692 = scmp.eq.s32.totalorder %s17, 0
      // Predicated region
      $region37: #{bottleneck_forward.6} parent=35 // pred_check
        %p693 = pneg %p692
      $region38: #{bottleneck_forward.6} parent=35 // pred_check_branch
        %695 = sbr.rel (%p693) target = $region40
      $region39: #{bottleneck_forward.6} parent=35 // pred_region
        %vm696 = vcmask 123904
        %697 = vst.msk [vmem:[%s5] sm:$0x3] %vm696, 0.0
      $region40: #{bottleneck_forward.6} parent=35 // pred_fallthru
        _
      %v698 = vld [vmem:[%s5] sm:$0x3]
      %vm699 = vcmask 130048
      %v700 = vsel %vm699, %v534, 0.0
      %v701 = vsel %vm699, %v539, 0.0
      %v702 = vadd.f32 %v700, %v701
      %v703 = vsel %vm699, %v544, 0.0
      %v704 = vadd.f32 %v702, %v703
      %v705 = vsel %vm699, %v549, 0.0
      %v706 = vadd.f32 %v704, %v705
      %v707 = vsel %vm699, %v554, 0.0
      %v708 = vadd.f32 %v706, %v707
      %v709 = vsel %vm699, %v559, 0.0
      %v710 = vadd.f32 %v708, %v709
      %v711 = vsel %vm699, %v564, 0.0
      %v712 = vadd.f32 %v710, %v711
      %v713 = vsel %vm699, %v569, 0.0
      %v714 = vadd.f32 %v712, %v713
      %v715 = vsel %vm699, %v574, 0.0
      %v716 = vadd.f32 %v714, %v715
      %v717 = vsel %vm699, %v579, 0.0
      %v718 = vadd.f32 %v716, %v717
      %v719 = vsel %vm699, %v584, 0.0
      %v720 = vadd.f32 %v718, %v719
      %v721 = vsel %vm699, %v589, 0.0
      %v722 = vadd.f32 %v720, %v721
      %v723 = vsel %vm699, %v594, 0.0
      %v724 = vadd.f32 %v722, %v723
      %v725 = vsel %vm699, %v599, 0.0
      %v726 = vadd.f32 %v724, %v725
      %v727 = vsel %vm699, %v604, 0.0
      %v728 = vadd.f32 %v726, %v727
      %v729 = vsel %vm699, %v609, 0.0
      %v730 = vadd.f32 %v728, %v729
      %v731 = vsel %vm699, %v614, 0.0
      %v732 = vadd.f32 %v730, %v731
      %v733 = vsel %vm699, %v619, 0.0
      %v734 = vadd.f32 %v732, %v733
      %v735 = vsel %vm699, %v624, 0.0
      %v736 = vadd.f32 %v734, %v735
      %v737 = vsel %vm699, %v629, 0.0
      %v738 = vadd.f32 %v736, %v737
      %v739 = vsel %vm699, %v634, 0.0
      %v740 = vadd.f32 %v738, %v739
      %v741 = vsel %vm699, %v639, 0.0
      %v742 = vadd.f32 %v740, %v741
      %v743 = vsel %vm699, %v644, 0.0
      %v744 = vadd.f32 %v742, %v743
      %v745 = vsel %vm699, %v649, 0.0
      %v746 = vadd.f32 %v744, %v745
      %v747 = vsel %vm699, %v654, 0.0
      %v748 = vadd.f32 %v746, %v747
      %v749 = vsel %vm699, %v659, 0.0
      %v750 = vadd.f32 %v748, %v749
      %v751 = vsel %vm699, %v664, 0.0
      %v752 = vadd.f32 %v750, %v751
      %v753 = vsel %vm699, %v669, 0.0
      %v754 = vadd.f32 %v752, %v753
      %v755 = vsel %vm699, %v674, 0.0
      %v756 = vadd.f32 %v754, %v755
      %v757 = vsel %vm699, %v679, 0.0
      %v758 = vadd.f32 %v756, %v757
      %v759 = vsel %vm699, %v684, 0.0
      %v760 = vadd.f32 %v758, %v759
      %v761 = vsel %vm699, %v689, 0.0
      %v762 = vadd.f32 %v760, %v761
      %v763 = vrot.slane %v762, 4
      %v764 = vadd.f32 %v762, %v763
      %v765 = vrot.slane %v764, 2
      %v766 = vadd.f32 %v764, %v765
      %v767 = vrot.slane %v766, 1
      %v768 = vadd.f32 %v766, %v767
      %v769 = vmul.f32 %v534, %v534
      %v770 = vmul.f32 %v539, %v539
      %v771 = vmul.f32 %v544, %v544
      %v772 = vmul.f32 %v549, %v549
      %v773 = vmul.f32 %v554, %v554
      %v774 = vmul.f32 %v559, %v559
      %v775 = vmul.f32 %v564, %v564
      %v776 = vmul.f32 %v569, %v569
      %v777 = vmul.f32 %v574, %v574
      %v778 = vmul.f32 %v579, %v579
      %v779 = vmul.f32 %v584, %v584
      %v780 = vmul.f32 %v589, %v589
      %v781 = vmul.f32 %v594, %v594
      %v782 = vmul.f32 %v599, %v599
      %v783 = vmul.f32 %v604, %v604
      %v784 = vmul.f32 %v609, %v609
      %v785 = vmul.f32 %v614, %v614
      %v786 = vmul.f32 %v619, %v619
      %v787 = vmul.f32 %v624, %v624
      %v788 = vmul.f32 %v629, %v629
      %v789 = vmul.f32 %v634, %v634
      %v790 = vmul.f32 %v639, %v639
      %v791 = vmul.f32 %v644, %v644
      %v792 = vmul.f32 %v649, %v649
      %v793 = vmul.f32 %v654, %v654
      %v794 = vmul.f32 %v659, %v659
      %v795 = vmul.f32 %v664, %v664
      %v796 = vmul.f32 %v669, %v669
      %v797 = vmul.f32 %v674, %v674
      %v798 = vmul.f32 %v679, %v679
      %v799 = vmul.f32 %v684, %v684
      %v800 = vmul.f32 %v689, %v689
      %v801 = vsel %vm699, %v769, 0.0
      %v802 = vsel %vm699, %v770, 0.0
      %v803 = vadd.f32 %v801, %v802
      %v804 = vsel %vm699, %v771, 0.0
      %v805 = vadd.f32 %v803, %v804
      %v806 = vsel %vm699, %v772, 0.0
      %v807 = vadd.f32 %v805, %v806
      %v808 = vsel %vm699, %v773, 0.0
      %v809 = vadd.f32 %v807, %v808
      %v810 = vsel %vm699, %v774, 0.0
      %v811 = vadd.f32 %v809, %v810
      %v812 = vsel %vm699, %v775, 0.0
      %v813 = vadd.f32 %v811, %v812
      %v814 = vsel %vm699, %v776, 0.0
      %v815 = vadd.f32 %v813, %v814
      %v816 = vsel %vm699, %v777, 0.0
      %v817 = vadd.f32 %v815, %v816
      %v818 = vsel %vm699, %v778, 0.0
      %v819 = vadd.f32 %v817, %v818
      %v820 = vsel %vm699, %v779, 0.0
      %v821 = vadd.f32 %v819, %v820
      %v822 = vsel %vm699, %v780, 0.0
      %v823 = vadd.f32 %v821, %v822
      %v824 = vsel %vm699, %v781, 0.0
      %v825 = vadd.f32 %v823, %v824
      %v826 = vsel %vm699, %v782, 0.0
      %v827 = vadd.f32 %v825, %v826
      %v828 = vsel %vm699, %v783, 0.0
      %v829 = vadd.f32 %v827, %v828
      %v830 = vsel %vm699, %v784, 0.0
      %v831 = vadd.f32 %v829, %v830
      %v832 = vsel %vm699, %v785, 0.0
      %v833 = vadd.f32 %v831, %v832
      %v834 = vsel %vm699, %v786, 0.0
      %v835 = vadd.f32 %v833, %v834
      %v836 = vsel %vm699, %v787, 0.0
      %v837 = vadd.f32 %v835, %v836
      %v838 = vsel %vm699, %v788, 0.0
      %v839 = vadd.f32 %v837, %v838
      %v840 = vsel %vm699, %v789, 0.0
      %v841 = vadd.f32 %v839, %v840
      %v842 = vsel %vm699, %v790, 0.0
      %v843 = vadd.f32 %v841, %v842
      %v844 = vsel %vm699, %v791, 0.0
      %v845 = vadd.f32 %v843, %v844
      %v846 = vsel %vm699, %v792, 0.0
      %v847 = vadd.f32 %v845, %v846
      %v848 = vsel %vm699, %v793, 0.0
      %v849 = vadd.f32 %v847, %v848
      %v850 = vsel %vm699, %v794, 0.0
      %v851 = vadd.f32 %v849, %v850
      %v852 = vsel %vm699, %v795, 0.0
      %v853 = vadd.f32 %v851, %v852
      %v854 = vsel %vm699, %v796, 0.0
      %v855 = vadd.f32 %v853, %v854
      %v856 = vsel %vm699, %v797, 0.0
      %v857 = vadd.f32 %v855, %v856
      %v858 = vsel %vm699, %v798, 0.0
      %v859 = vadd.f32 %v857, %v858
      %v860 = vsel %vm699, %v799, 0.0
      %v861 = vadd.f32 %v859, %v860
      %v862 = vsel %vm699, %v800, 0.0
      %v863 = vadd.f32 %v861, %v862
      %v864 = vrot.slane %v863, 4
      %v865 = vadd.f32 %v863, %v864
      %v866 = vrot.slane %v865, 2
      %v867 = vadd.f32 %v865, %v866
      %v868 = vrot.slane %v867, 1
      %v869 = vadd.f32 %v867, %v868
      %vm870 = vcmask 1040384
      %v871 = vsel %vm870, %v768, %v869
      %v872 = vadd.f32 %v698, %v871
      %vm873 = vcmask 123904
      %874 = vst.msk [vmem:[%s5] sm:$0x3] %vm873, %v872
      %875 = vst.msk [vmem:[%s222] sm:$0xff] %vm699, %v534
      %876 = vst.msk [vmem:[%s222 + $0x8] sm:$0xff] %vm699, %v539
      %877 = vst.msk [vmem:[%s222 + $0x10] sm:$0xff] %vm699, %v544
      %878 = vst.msk [vmem:[%s222 + $0x18] sm:$0xff] %vm699, %v549
      %879 = vst.msk [vmem:[%s222 + $0x20] sm:$0xff] %vm699, %v554
      %880 = vst.msk [vmem:[%s222 + $0x28] sm:$0xff] %vm699, %v559
      %881 = vst.msk [vmem:[%s222 + $0x30] sm:$0xff] %vm699, %v564
      %882 = vst.msk [vmem:[%s222 + $0x38] sm:$0xff] %vm699, %v569
      %883 = vst.msk [vmem:[%s222 + $0x40] sm:$0xff] %vm699, %v574
      %884 = vst.msk [vmem:[%s222 + $0x48] sm:$0xff] %vm699, %v579
      %885 = vst.msk [vmem:[%s222 + $0x50] sm:$0xff] %vm699, %v584
      %886 = vst.msk [vmem:[%s222 + $0x58] sm:$0xff] %vm699, %v589
      %887 = vst.msk [vmem:[%s222 + $0x60] sm:$0xff] %vm699, %v594
      %888 = vst.msk [vmem:[%s222 + $0x68] sm:$0xff] %vm699, %v599
      %889 = vst.msk [vmem:[%s222 + $0x70] sm:$0xff] %vm699, %v604
      %890 = vst.msk [vmem:[%s222 + $0x78] sm:$0xff] %vm699, %v609
      %891 = vst.msk [vmem:[%s222 + $0x80] sm:$0xff] %vm699, %v614
      %892 = vst.msk [vmem:[%s222 + $0x88] sm:$0xff] %vm699, %v619
      %893 = vst.msk [vmem:[%s222 + $0x90] sm:$0xff] %vm699, %v624
      %894 = vst.msk [vmem:[%s222 + $0x98] sm:$0xff] %vm699, %v629
      %895 = vst.msk [vmem:[%s222 + $0xa0] sm:$0xff] %vm699, %v634
      %896 = vst.msk [vmem:[%s222 + $0xa8] sm:$0xff] %vm699, %v639
      %897 = vst.msk [vmem:[%s222 + $0xb0] sm:$0xff] %vm699, %v644
      %898 = vst.msk [vmem:[%s222 + $0xb8] sm:$0xff] %vm699, %v649
      %899 = vst.msk [vmem:[%s222 + $0xc0] sm:$0xff] %vm699, %v654
      %900 = vst.msk [vmem:[%s222 + $0xc8] sm:$0xff] %vm699, %v659
      %901 = vst.msk [vmem:[%s222 + $0xd0] sm:$0xff] %vm699, %v664
      %902 = vst.msk [vmem:[%s222 + $0xd8] sm:$0xff] %vm699, %v669
      %903 = vst.msk [vmem:[%s222 + $0xe0] sm:$0xff] %vm699, %v674
      %904 = vst.msk [vmem:[%s222 + $0xe8] sm:$0xff] %vm699, %v679
      %905 = vst.msk [vmem:[%s222 + $0xf0] sm:$0xff] %vm699, %v684
      %906 = vst.msk [vmem:[%s222 + $0xf8] sm:$0xff] %vm699, %v689
      %p907 = scmp.lt.s32.totalorder %s17, 1
      %s908 = scalar_select %p907, %s17, 1
      %s909 = smul.addr %s908, 32
      %s910 = smul.addr %s909, 8
      %s911 = scalar_lea.vmem %s4, %s910
      // Predicated region
      $region41: #{bottleneck_forward.6} parent=35 // pred_check
        %p912 = pneg %p124
      $region42: #{bottleneck_forward.6} parent=35 // pred_check_branch
        %914 = sbr.rel (%p912) target = $region44
      $region43: #{bottleneck_forward.6} parent=35 // pred_region
        _
      $region44: #{bottleneck_forward.6} parent=35 // pred_fallthru
        _
      // Predicated region
      $region45: #{bottleneck_forward.6} parent=35 // pred_check
        %p915 = pneg %p145
      $region46: #{bottleneck_forward.6} parent=35 // pred_check_branch
        %917 = sbr.rel (%p915) target = $region48
      $region47: #{bottleneck_forward.6} parent=35 // pred_region
        _
      $region48: #{bottleneck_forward.6} parent=35 // pred_fallthru
        _
      // Predicated region
      $region49: #{bottleneck_forward.6} parent=35 // pred_check
        %p918 = pneg %p145
      $region50: #{bottleneck_forward.6} parent=35 // pred_check_branch
        %920 = sbr.rel (%p918) target = $region52
      $region51: #{bottleneck_forward.6} parent=35 // pred_region
        _
      $region52: #{bottleneck_forward.6} parent=35 // pred_fallthru
        _
    $region36: #{bottleneck_forward.6} parent=5 // pred_fallthru
      _
    %p921 = scmp.le.s32.totalorder 2, %s12
    // Predicated region
    $region53: #{bottleneck_forward.6} parent=5 // pred_check
      %p922 = pneg %p921
    $region54: #{bottleneck_forward.6} parent=5 // pred_check_branch
      %924 = sbr.rel (%p922) target = $region56
    $region55: #{bottleneck_forward.6} parent=5 // pred_region
      %s925 = ssub.s32 %s12, 2
      // Predicated region
      $region57: #{bottleneck_forward.6} parent=55 // pred_check
        %p926 = pneg %p130
      $region58: #{bottleneck_forward.6} parent=55 // pred_check_branch
        %928 = sbr.rel (%p926) target = $region60
      $region59: #{bottleneck_forward.6} parent=55 // pred_region
        %p929 = scmp.lt.s32.totalorder %s18, 1
        %s930 = scalar_select %p929, %s18, 1
        %s931 = smul.addr %s930, 32
        %s932 = smul.addr %s931, 8
        %s933 = scalar_lea.vmem %s4, %s932
      $region60: #{bottleneck_forward.6} parent=55 // pred_fallthru
        _
    $region56: #{bottleneck_forward.6} parent=5 // pred_fallthru
      _
  $region6: #{bottleneck_forward.6} parent=0 // loop_footer
    %s16 = sadd.s32 1, %s12
  $region7: #{bottleneck_forward.6} parent=0 // loop_footer_branch
    %11 = sbr.rel target = $region3
  $region8: #{bottleneck_forward.6} parent=0 // loop_exit
    _

// kernel: bottleneck_forward.7
$region0: #{bottleneck_forward.7}
  #allocation0 [shape = 'u32[]', space=smem, size = 0x4, offset = 0x4, fixed_abs, tag = 'smem constant byte address 0x4 - core index']
  #allocation1 [shape = 'u32[144,128]{1,0:T(1,128)}', space=vmem, size = 0x12000, scoped, tag = 'internal scratch']
  %s0 = inlined_call_operand.vmem [shape: f32[2,16,16,16], index: 0, kind: input, shape index: {}]
  %s1 = inlined_call_operand.vmem [shape: f32[2,16,16,16], index: 1, kind: input, shape index: {}]
  %s2 = inlined_call_operand.vmem [shape: f32[1,16], index: 2, kind: input, shape index: {}]
  %s3 = inlined_call_operand.vmem [shape: f32[1,16], index: 3, kind: input, shape index: {}]
  %s4 = inlined_call_operand.vmem [shape: f32[2,16,16,16], index: 4, kind: output, shape index: {}]
  %s5 = sld [smem:[#allocation0]]
  $region49: #{bottleneck_forward.7} parent=0
    _
  %s7 = ssub.s32 1, %s5
  %s8 = scalar_select 0, %s7, %s5
  loop: start=0, step=1, limit=4
  $region2: #{bottleneck_forward.7} parent=0 // loop_pre_header
    _
  $region3: #{bottleneck_forward.7} parent=0 // loop_header
    %s10 = sphi 0, %s14
    %p11 = scmp.ge.s32.totalorder %s10, 4
    %s20 = sphi 0, %s22
    %s23 = sphi 0, %s20
    %s24 = sphi 0, %s23
    %s40 = sphi 0, %s24
    %s46 = sphi 0, %s48
    %s49 = sphi 0, %s46
    %s50 = sphi 0, %s49
    %s66 = sphi 0, %s50
    %s70 = sphi 0, %s70
    %s72 = sphi 0, %s70
    %s73 = sphi 0, %s72
    %s87 = sphi 0, %s73
    %s91 = sphi 0, %s91
    %s93 = sphi 0, %s91
    %s94 = sphi 0, %s93
    %s108 = sphi 0, %s94
    %s114 = sphi 0, %s116
    %s117 = sphi 0, %s114
    %s118 = sphi 0, %s117
    %s134 = sphi 0, %s118
  $region4: #{bottleneck_forward.7} parent=0 // loop_header_branch
    %13 = sbr.rel (%p11) target = $region8
  $region5: #{bottleneck_forward.7} parent=0 // loop_body
    %s15 = ssub.s32 %s10, 1
    %s16 = ssub.s32 %s10, 2
    %s17 = sadd.s32 %s10, 1
    %s18 = ssub.s32 %s10, %s17
    %p19 = scmp.eq.s32.totalorder %s18, 0
    %s21 = sadd.s32 %s20, 1
    %s22 = scalar_select %p19, %s20, %s21
    %p25 = pneg %p19
    %p26 = scmp.eq.s32.totalorder %s10, 1
    %p27 = por %p25, %p26
    %p28 = scmp.ne.s32.totalorder %s20, %s23
    %p29 = scmp.eq.s32.totalorder %s10, 0
    %p30 = por %p28, %p29
    %p31 = scmp.ne.s32.totalorder %s20, %s23
    %p32 = scmp.eq.s32.totalorder %s15, 1
    %p33 = por %p31, %p32
    %p34 = scmp.ne.s32.totalorder %s23, %s24
    %p35 = scmp.eq.s32.totalorder %s15, 0
    %p36 = por %p34, %p35
    %p37 = scmp.ne.s32.totalorder %s23, %s24
    %p38 = scmp.eq.s32.totalorder %s16, 1
    %p39 = por %p37, %p38
    %p41 = scmp.ne.s32.totalorder %s24, %s40
    %p42 = scmp.eq.s32.totalorder %s16, 0
    %p43 = por %p41, %p42
    %s44 = ssub.s32 %s10, %s17
    %p45 = scmp.eq.s32.totalorder %s44, 0
    %s47 = sadd.s32 %s46, 1
    %s48 = scalar_select %p45, %s46, %s47
    %p51 = pneg %p45
    %p52 = scmp.eq.s32.totalorder %s10, 1
    %p53 = por %p51, %p52
    %p54 = scmp.ne.s32.totalorder %s46, %s49
    %p55 = scmp.eq.s32.totalorder %s10, 0
    %p56 = por %p54, %p55
    %p57 = scmp.ne.s32.totalorder %s46, %s49
    %p58 = scmp.eq.s32.totalorder %s15, 1
    %p59 = por %p57, %p58
    %p60 = scmp.ne.s32.totalorder %s49, %s50
    %p61 = scmp.eq.s32.totalorder %s15, 0
    %p62 = por %p60, %p61
    %p63 = scmp.ne.s32.totalorder %s49, %s50
    %p64 = scmp.eq.s32.totalorder %s16, 1
    %p65 = por %p63, %p64
    %p67 = scmp.ne.s32.totalorder %s50, %s66
    %p68 = scmp.eq.s32.totalorder %s16, 0
    %p69 = por %p67, %p68
    %s71 = sadd.s32 %s70, 1
    %p74 = scmp.eq.s32.totalorder %s10, 1
    %p75 = scmp.ne.s32.totalorder %s70, %s72
    %p76 = scmp.eq.s32.totalorder %s10, 0
    %p77 = por %p75, %p76
    %p78 = scmp.ne.s32.totalorder %s70, %s72
    %p79 = scmp.eq.s32.totalorder %s15, 1
    %p80 = por %p78, %p79
    %p81 = scmp.ne.s32.totalorder %s72, %s73
    %p82 = scmp.eq.s32.totalorder %s15, 0
    %p83 = por %p81, %p82
    %p84 = scmp.ne.s32.totalorder %s72, %s73
    %p85 = scmp.eq.s32.totalorder %s16, 1
    %p86 = por %p84, %p85
    %p88 = scmp.ne.s32.totalorder %s73, %s87
    %p89 = scmp.eq.s32.totalorder %s16, 0
    %p90 = por %p88, %p89
    %s92 = sadd.s32 %s91, 1
    %p95 = scmp.eq.s32.totalorder %s10, 1
    %p96 = scmp.ne.s32.totalorder %s91, %s93
    %p97 = scmp.eq.s32.totalorder %s10, 0
    %p98 = por %p96, %p97
    %p99 = scmp.ne.s32.totalorder %s91, %s93
    %p100 = scmp.eq.s32.totalorder %s15, 1
    %p101 = por %p99, %p100
    %p102 = scmp.ne.s32.totalorder %s93, %s94
    %p103 = scmp.eq.s32.totalorder %s15, 0
    %p104 = por %p102, %p103
    %p105 = scmp.ne.s32.totalorder %s93, %s94
    %p106 = scmp.eq.s32.totalorder %s16, 1
    %p107 = por %p105, %p106
    %p109 = scmp.ne.s32.totalorder %s94, %s108
    %p110 = scmp.eq.s32.totalorder %s16, 0
    %p111 = por %p109, %p110
    %s112 = ssub.s32 %s10, %s17
    %p113 = scmp.eq.s32.totalorder %s112, 0
    %s115 = sadd.s32 %s114, 1
    %s116 = scalar_select %p113, %s114, %s115
    %p119 = pneg %p113
    %p120 = scmp.eq.s32.totalorder %s10, 1
    %p121 = por %p119, %p120
    %p122 = scmp.ne.s32.totalorder %s114, %s117
    %p123 = scmp.eq.s32.totalorder %s10, 0
    %p124 = por %p122, %p123
    %p125 = scmp.ne.s32.totalorder %s114, %s117
    %p126 = scmp.eq.s32.totalorder %s15, 1
    %p127 = por %p125, %p126
    %p128 = scmp.ne.s32.totalorder %s117, %s118
    %p129 = scmp.eq.s32.totalorder %s15, 0
    %p130 = por %p128, %p129
    %p131 = scmp.ne.s32.totalorder %s117, %s118
    %p132 = scmp.eq.s32.totalorder %s16, 1
    %p133 = por %p131, %p132
    %p135 = scmp.ne.s32.totalorder %s118, %s134
    %p136 = scmp.eq.s32.totalorder %s16, 0
    %p137 = por %p135, %p136
    %p138 = scmp.le.s32.totalorder 1, %s10
    %p139 = scmp.lt.s32.totalorder %s10, 3
    %p140 = pnand %p138, %p139
    %p141 = pneg %p140
    // Predicated region
    $region9: #{bottleneck_forward.7} parent=5 // pred_check
      _
    $region10: #{bottleneck_forward.7} parent=5 // pred_check_branch
      %143 = sbr.rel (%p140) target = $region12
    $region11: #{bottleneck_forward.7} parent=5 // pred_region
      %s144 = ssub.s32 %s10, 1
      // Predicated region
      $region13: #{bottleneck_forward.7} parent=11 // pred_check
        %p145 = pneg %p83
      $region14: #{bottleneck_forward.7} parent=11 // pred_check_branch
        %147 = sbr.rel (%p145) target = $region16
      $region15: #{bottleneck_forward.7} parent=11 // pred_region
        _
      $region16: #{bottleneck_forward.7} parent=11 // pred_fallthru
        _
      // Predicated region
      $region17: #{bottleneck_forward.7} parent=11 // pred_check
        %p148 = pneg %p104
      $region18: #{bottleneck_forward.7} parent=11 // pred_check_branch
        %150 = sbr.rel (%p148) target = $region20
      $region19: #{bottleneck_forward.7} parent=11 // pred_region
        _
      $region20: #{bottleneck_forward.7} parent=11 // pred_fallthru
        _
    $region12: #{bottleneck_forward.7} parent=5 // pred_fallthru
      _
    %p151 = scmp.lt.s32.totalorder %s10, 2
    // Predicated region
    $region21: #{bottleneck_forward.7} parent=5 // pred_check
      %p152 = pneg %p151
    $region22: #{bottleneck_forward.7} parent=5 // pred_check_branch
      %154 = sbr.rel (%p152) target = $region24
    $region23: #{bottleneck_forward.7} parent=5 // pred_region
      // Predicated region
      $region25: #{bottleneck_forward.7} parent=23 // pred_check
        %p155 = pneg %p30
      $region26: #{bottleneck_forward.7} parent=23 // pred_check_branch
        %157 = sbr.rel (%p155) target = $region28
      $region27: #{bottleneck_forward.7} parent=23 // pred_region
        %p158 = scmp.lt.s32.totalorder %s10, 1
        %s159 = scalar_select %p158, %s10, 1
        %s160 = smul.addr %s159, 32
        %s161 = smul.addr %s160, 8
        %s162 = scalar_lea.vmem %s0, %s161
      $region28: #{bottleneck_forward.7} parent=23 // pred_fallthru
        _
      // Predicated region
      $region29: #{bottleneck_forward.7} parent=23 // pred_check
        %p163 = pneg %p56
      $region30: #{bottleneck_forward.7} parent=23 // pred_check_branch
        %165 = sbr.rel (%p163) target = $region32
      $region31: #{bottleneck_forward.7} parent=23 // pred_region
        %p166 = scmp.lt.s32.totalorder %s10, 1
        %s167 = scalar_select %p166, %s10, 1
        %s168 = smul.addr %s167, 32
        %s169 = smul.addr %s168, 8
        %s170 = scalar_lea.vmem %s1, %s169
      $region32: #{bottleneck_forward.7} parent=23 // pred_fallthru
        _
    $region24: #{bottleneck_forward.7} parent=5 // pred_fallthru
      _
    %p171 = scmp.le.s32.totalorder 1, %s10
    %p172 = scmp.lt.s32.totalorder %s10, 3
    %p173 = pnand %p171, %p172
    %p174 = pneg %p173
    // Predicated region
    $region33: #{bottleneck_forward.7} parent=5 // pred_check
      _
    $region34: #{bottleneck_forward.7} parent=5 // pred_check_branch
      %176 = sbr.rel (%p173) target = $region36
    $region35: #{bottleneck_forward.7} parent=5 // pred_region
      %s177 = ssub.s32 %s10, 1
      %p178 = scmp.lt.s32.totalorder %s15, 1
      %s179 = scalar_select %p178, %s15, 1
      %s180 = smul.addr %s179, 32
      %s181 = smul.addr %s180, 8
      %s182 = scalar_lea.vmem %s0, %s181
      %p183 = pneg %p36
      %p184 = pneg %p33
      %p185 = scmp.lt.s32.totalorder %s15, 1
      %s186 = scalar_select %p185, %s15, 1
      %s187 = smul.addr %s186, 32
      %s188 = smul.addr %s187, 8
      %s189 = scalar_lea.vmem %s1, %s188
      %p190 = pneg %p62
      %p191 = pneg %p59
      %p192 = pneg %p83
      %p193 = pneg %p80
      %p194 = pneg %p104
      %p195 = pneg %p101
      %p196 = pneg %p130
      %p197 = pneg %p127
      %p198 = scmp.lt.s32.totalorder %s15, 1
      %s199 = scalar_select %p198, %s15, 1
      %s200 = smul.addr %s199, 32
      %s201 = smul.addr %s200, 8
      %s202 = scalar_lea.vmem %s4, %s201
      %p203 = scmp.lt.s32.totalorder %s15, 1
      %s204 = scalar_select %p203, %s15, 1
      %s205 = smul.addr %s204, 32
      %s206 = smul.addr %s205, 8
      %s207 = scalar_lea.vmem %s0, %s206
      %p208 = scmp.lt.s32.totalorder %s15, 1
      %s209 = scalar_select %p208, %s15, 1
      %s210 = smul.addr %s209, 32
      %s211 = smul.addr %s210, 8
      %s212 = scalar_lea.vmem %s1, %s211
      %p213 = scmp.lt.s32.totalorder %s15, 1
      %s214 = scalar_select %p213, %s15, 1
      %s215 = smul.addr %s214, 32
      %s216 = smul.addr %s215, 8
      %s217 = scalar_lea.vmem %s4, %s216
      %v218 = vld [vmem:[%s207] sm:$0xff]
      %v219 = vld [vmem:[%s207 + $0x8] sm:$0xff]
      %v220 = vld [vmem:[%s207 + $0x10] sm:$0xff]
      %v221 = vld [vmem:[%s207 + $0x18] sm:$0xff]
      %v222 = vld [vmem:[%s207 + $0x20] sm:$0xff]
      %v223 = vld [vmem:[%s207 + $0x28] sm:$0xff]
      %v224 = vld [vmem:[%s207 + $0x30] sm:$0xff]
      %v225 = vld [vmem:[%s207 + $0x38] sm:$0xff]
      %v226 = vld [vmem:[%s207 + $0x40] sm:$0xff]
      %v227 = vld [vmem:[%s207 + $0x48] sm:$0xff]
      %v228 = vld [vmem:[%s207 + $0x50] sm:$0xff]
      %v229 = vld [vmem:[%s207 + $0x58] sm:$0xff]
      %v230 = vld [vmem:[%s207 + $0x60] sm:$0xff]
      %v231 = vld [vmem:[%s207 + $0x68] sm:$0xff]
      %v232 = vld [vmem:[%s207 + $0x70] sm:$0xff]
      %v233 = vld [vmem:[%s207 + $0x78] sm:$0xff]
      %v234 = vld [vmem:[%s207 + $0x80] sm:$0xff]
      %v235 = vld [vmem:[%s207 + $0x88] sm:$0xff]
      %v236 = vld [vmem:[%s207 + $0x90] sm:$0xff]
      %v237 = vld [vmem:[%s207 + $0x98] sm:$0xff]
      %v238 = vld [vmem:[%s207 + $0xa0] sm:$0xff]
      %v239 = vld [vmem:[%s207 + $0xa8] sm:$0xff]
      %v240 = vld [vmem:[%s207 + $0xb0] sm:$0xff]
      %v241 = vld [vmem:[%s207 + $0xb8] sm:$0xff]
      %v242 = vld [vmem:[%s207 + $0xc0] sm:$0xff]
      %v243 = vld [vmem:[%s207 + $0xc8] sm:$0xff]
      %v244 = vld [vmem:[%s207 + $0xd0] sm:$0xff]
      %v245 = vld [vmem:[%s207 + $0xd8] sm:$0xff]
      %v246 = vld [vmem:[%s207 + $0xe0] sm:$0xff]
      %v247 = vld [vmem:[%s207 + $0xe8] sm:$0xff]
      %v248 = vld [vmem:[%s207 + $0xf0] sm:$0xff]
      %v249 = vld [vmem:[%s207 + $0xf8] sm:$0xff]
      %v250 = vld [vmem:[%s212] sm:$0xff]
      %v251 = vld [vmem:[%s212 + $0x8] sm:$0xff]
      %v252 = vld [vmem:[%s212 + $0x10] sm:$0xff]
      %v253 = vld [vmem:[%s212 + $0x18] sm:$0xff]
      %v254 = vld [vmem:[%s212 + $0x20] sm:$0xff]
      %v255 = vld [vmem:[%s212 + $0x28] sm:$0xff]
      %v256 = vld [vmem:[%s212 + $0x30] sm:$0xff]
      %v257 = vld [vmem:[%s212 + $0x38] sm:$0xff]
      %v258 = vld [vmem:[%s212 + $0x40] sm:$0xff]
      %v259 = vld [vmem:[%s212 + $0x48] sm:$0xff]
      %v260 = vld [vmem:[%s212 + $0x50] sm:$0xff]
      %v261 = vld [vmem:[%s212 + $0x58] sm:$0xff]
      %v262 = vld [vmem:[%s212 + $0x60] sm:$0xff]
      %v263 = vld [vmem:[%s212 + $0x68] sm:$0xff]
      %v264 = vld [vmem:[%s212 + $0x70] sm:$0xff]
      %v265 = vld [vmem:[%s212 + $0x78] sm:$0xff]
      %v266 = vld [vmem:[%s212 + $0x80] sm:$0xff]
      %v267 = vld [vmem:[%s212 + $0x88] sm:$0xff]
      %v268 = vld [vmem:[%s212 + $0x90] sm:$0xff]
      %v269 = vld [vmem:[%s212 + $0x98] sm:$0xff]
      %v270 = vld [vmem:[%s212 + $0xa0] sm:$0xff]
      %v271 = vld [vmem:[%s212 + $0xa8] sm:$0xff]
      %v272 = vld [vmem:[%s212 + $0xb0] sm:$0xff]
      %v273 = vld [vmem:[%s212 + $0xb8] sm:$0xff]
      %v274 = vld [vmem:[%s212 + $0xc0] sm:$0xff]
      %v275 = vld [vmem:[%s212 + $0xc8] sm:$0xff]
      %v276 = vld [vmem:[%s212 + $0xd0] sm:$0xff]
      %v277 = vld [vmem:[%s212 + $0xd8] sm:$0xff]
      %v278 = vld [vmem:[%s212 + $0xe0] sm:$0xff]
      %v279 = vld [vmem:[%s212 + $0xe8] sm:$0xff]
      %v280 = vld [vmem:[%s212 + $0xf0] sm:$0xff]
      %v281 = vld [vmem:[%s212 + $0xf8] sm:$0xff]
      %v282 = vld [vmem:[%s2] sm:$0x1]
      %v284 = vlaneseq
      %v285 = vshrl.u32 %v284, 7
      %v286 = vsub.s32 0, %v285
      %v287 = vrot.slane %v282, %v286
      %v289 = vmul.f32 %v218, %v287
      %v290 = vmul.f32 %v219, %v287
      %v291 = vmul.f32 %v220, %v287
      %v292 = vmul.f32 %v221, %v287
      %v293 = vmul.f32 %v222, %v287
      %v294 = vmul.f32 %v223, %v287
      %v295 = vmul.f32 %v224, %v287
      %v296 = vmul.f32 %v225, %v287
      %v297 = vmul.f32 %v226, %v287
      %v298 = vmul.f32 %v227, %v287
      %v299 = vmul.f32 %v228, %v287
      %v300 = vmul.f32 %v229, %v287
      %v301 = vmul.f32 %v230, %v287
      %v302 = vmul.f32 %v231, %v287
      %v303 = vmul.f32 %v232, %v287
      %v304 = vmul.f32 %v233, %v287
      %v305 = vmul.f32 %v234, %v287
      %v306 = vmul.f32 %v235, %v287
      %v307 = vmul.f32 %v236, %v287
      %v308 = vmul.f32 %v237, %v287
      %v309 = vmul.f32 %v238, %v287
      %v310 = vmul.f32 %v239, %v287
      %v311 = vmul.f32 %v240, %v287
      %v312 = vmul.f32 %v241, %v287
      %v313 = vmul.f32 %v242, %v287
      %v314 = vmul.f32 %v243, %v287
      %v315 = vmul.f32 %v244, %v287
      %v316 = vmul.f32 %v245, %v287
      %v317 = vmul.f32 %v246, %v287
      %v318 = vmul.f32 %v247, %v287
      %v319 = vmul.f32 %v248, %v287
      %v320 = vmul.f32 %v249, %v287
      %v321 = vld [vmem:[%s3] sm:$0x1]
      %v323 = vlaneseq
      %v324 = vshrl.u32 %v323, 7
      %v325 = vsub.s32 0, %v324
      %v326 = vrot.slane %v321, %v325
      %v328 = vadd.f32 %v289, %v326
      %v329 = vadd.f32 %v290, %v326
      %v330 = vadd.f32 %v291, %v326
      %v331 = vadd.f32 %v292, %v326
      %v332 = vadd.f32 %v293, %v326
      %v333 = vadd.f32 %v294, %v326
      %v334 = vadd.f32 %v295, %v326
      %v335 = vadd.f32 %v296, %v326
      %v336 = vadd.f32 %v297, %v326
      %v337 = vadd.f32 %v298, %v326
      %v338 = vadd.f32 %v299, %v326
      %v339 = vadd.f32 %v300, %v326
      %v340 = vadd.f32 %v301, %v326
      %v341 = vadd.f32 %v302, %v326
      %v342 = vadd.f32 %v303, %v326
      %v343 = vadd.f32 %v304, %v326
      %v344 = vadd.f32 %v305, %v326
      %v345 = vadd.f32 %v306, %v326
      %v346 = vadd.f32 %v307, %v326
      %v347 = vadd.f32 %v308, %v326
      %v348 = vadd.f32 %v309, %v326
      %v349 = vadd.f32 %v310, %v326
      %v350 = vadd.f32 %v311, %v326
      %v351 = vadd.f32 %v312, %v326
      %v352 = vadd.f32 %v313, %v326
      %v353 = vadd.f32 %v314, %v326
      %v354 = vadd.f32 %v315, %v326
      %v355 = vadd.f32 %v316, %v326
      %v356 = vadd.f32 %v317, %v326
      %v357 = vadd.f32 %v318, %v326
      %v358 = vadd.f32 %v319, %v326
      %v359 = vadd.f32 %v320, %v326
      %v360 = vadd.f32 %v328, %v250
      %v361 = vadd.f32 %v329, %v251
      %v362 = vadd.f32 %v330, %v252
      %v363 = vadd.f32 %v331, %v253
      %v364 = vadd.f32 %v332, %v254
      %v365 = vadd.f32 %v333, %v255
      %v366 = vadd.f32 %v334, %v256
      %v367 = vadd.f32 %v335, %v257
      %v368 = vadd.f32 %v336, %v258
      %v369 = vadd.f32 %v337, %v259
      %v370 = vadd.f32 %v338, %v260
      %v371 = vadd.f32 %v339, %v261
      %v372 = vadd.f32 %v340, %v262
      %v373 = vadd.f32 %v341, %v263
      %v374 = vadd.f32 %v342, %v264
      %v375 = vadd.f32 %v343, %v265
      %v376 = vadd.f32 %v344, %v266
      %v377 = vadd.f32 %v345, %v267
      %v378 = vadd.f32 %v346, %v268
      %v379 = vadd.f32 %v347, %v269
      %v380 = vadd.f32 %v348, %v270
      %v381 = vadd.f32 %v349, %v271
      %v382 = vadd.f32 %v350, %v272
      %v383 = vadd.f32 %v351, %v273
      %v384 = vadd.f32 %v352, %v274
      %v385 = vadd.f32 %v353, %v275
      %v386 = vadd.f32 %v354, %v276
      %v387 = vadd.f32 %v355, %v277
      %v388 = vadd.f32 %v356, %v278
      %v389 = vadd.f32 %v357, %v279
      %v390 = vadd.f32 %v358, %v280
      %v391 = vadd.f32 %v359, %v281
      %v392 = vmax.f32 %v360, 0.0
      %v393 = vmax.f32 %v361, 0.0
      %v394 = vmax.f32 %v362, 0.0
      %v395 = vmax.f32 %v363, 0.0
      %v396 = vmax.f32 %v364, 0.0
      %v397 = vmax.f32 %v365, 0.0
      %v398 = vmax.f32 %v366, 0.0
      %v399 = vmax.f32 %v367, 0.0
      %v400 = vmax.f32 %v368, 0.0
      %v401 = vmax.f32 %v369, 0.0
      %v402 = vmax.f32 %v370, 0.0
      %v403 = vmax.f32 %v371, 0.0
      %v404 = vmax.f32 %v372, 0.0
      %v405 = vmax.f32 %v373, 0.0
      %v406 = vmax.f32 %v374, 0.0
      %v407 = vmax.f32 %v375, 0.0
      %v408 = vmax.f32 %v376, 0.0
      %v409 = vmax.f32 %v377, 0.0
      %v410 = vmax.f32 %v378, 0.0
      %v411 = vmax.f32 %v379, 0.0
      %v412 = vmax.f32 %v380, 0.0
      %v413 = vmax.f32 %v381, 0.0
      %v414 = vmax.f32 %v382, 0.0
      %v415 = vmax.f32 %v383, 0.0
      %v416 = vmax.f32 %v384, 0.0
      %v417 = vmax.f32 %v385, 0.0
      %v418 = vmax.f32 %v386, 0.0
      %v419 = vmax.f32 %v387, 0.0
      %v420 = vmax.f32 %v388, 0.0
      %v421 = vmax.f32 %v389, 0.0
      %v422 = vmax.f32 %v390, 0.0
      %v423 = vmax.f32 %v391, 0.0
      %vm424 = vcmask 130048
      %425 = vst.msk [vmem:[%s217] sm:$0xff] %vm424, %v392
      %426 = vst.msk [vmem:[%s217 + $0x8] sm:$0xff] %vm424, %v393
      %427 = vst.msk [vmem:[%s217 + $0x10] sm:$0xff] %vm424, %v394
      %428 = vst.msk [vmem:[%s217 + $0x18] sm:$0xff] %vm424, %v395
      %429 = vst.msk [vmem:[%s217 + $0x20] sm:$0xff] %vm424, %v396
      %430 = vst.msk [vmem:[%s217 + $0x28] sm:$0xff] %vm424, %v397
      %431 = vst.msk [vmem:[%s217 + $0x30] sm:$0xff] %vm424, %v398
      %432 = vst.msk [vmem:[%s217 + $0x38] sm:$0xff] %vm424, %v399
      %433 = vst.msk [vmem:[%s217 + $0x40] sm:$0xff] %vm424, %v400
      %434 = vst.msk [vmem:[%s217 + $0x48] sm:$0xff] %vm424, %v401
      %435 = vst.msk [vmem:[%s217 + $0x50] sm:$0xff] %vm424, %v402
      %436 = vst.msk [vmem:[%s217 + $0x58] sm:$0xff] %vm424, %v403
      %437 = vst.msk [vmem:[%s217 + $0x60] sm:$0xff] %vm424, %v404
      %438 = vst.msk [vmem:[%s217 + $0x68] sm:$0xff] %vm424, %v405
      %439 = vst.msk [vmem:[%s217 + $0x70] sm:$0xff] %vm424, %v406
      %440 = vst.msk [vmem:[%s217 + $0x78] sm:$0xff] %vm424, %v407
      %441 = vst.msk [vmem:[%s217 + $0x80] sm:$0xff] %vm424, %v408
      %442 = vst.msk [vmem:[%s217 + $0x88] sm:$0xff] %vm424, %v409
      %443 = vst.msk [vmem:[%s217 + $0x90] sm:$0xff] %vm424, %v410
      %444 = vst.msk [vmem:[%s217 + $0x98] sm:$0xff] %vm424, %v411
      %445 = vst.msk [vmem:[%s217 + $0xa0] sm:$0xff] %vm424, %v412
      %446 = vst.msk [vmem:[%s217 + $0xa8] sm:$0xff] %vm424, %v413
      %447 = vst.msk [vmem:[%s217 + $0xb0] sm:$0xff] %vm424, %v414
      %448 = vst.msk [vmem:[%s217 + $0xb8] sm:$0xff] %vm424, %v415
      %449 = vst.msk [vmem:[%s217 + $0xc0] sm:$0xff] %vm424, %v416
      %450 = vst.msk [vmem:[%s217 + $0xc8] sm:$0xff] %vm424, %v417
      %451 = vst.msk [vmem:[%s217 + $0xd0] sm:$0xff] %vm424, %v418
      %452 = vst.msk [vmem:[%s217 + $0xd8] sm:$0xff] %vm424, %v419
      %453 = vst.msk [vmem:[%s217 + $0xe0] sm:$0xff] %vm424, %v420
      %454 = vst.msk [vmem:[%s217 + $0xe8] sm:$0xff] %vm424, %v421
      %455 = vst.msk [vmem:[%s217 + $0xf0] sm:$0xff] %vm424, %v422
      %456 = vst.msk [vmem:[%s217 + $0xf8] sm:$0xff] %vm424, %v423
      %p457 = scmp.lt.s32.totalorder %s15, 1
      %s458 = scalar_select %p457, %s15, 1
      %s459 = smul.addr %s458, 32
      %s460 = smul.addr %s459, 8
      %s461 = scalar_lea.vmem %s4, %s460
      // Predicated region
      $region37: #{bottleneck_forward.7} parent=35 // pred_check
        %p462 = pneg %p127
      $region38: #{bottleneck_forward.7} parent=35 // pred_check_branch
        %464 = sbr.rel (%p462) target = $region40
      $region39: #{bottleneck_forward.7} parent=35 // pred_region
        _
      $region40: #{bottleneck_forward.7} parent=35 // pred_fallthru
        _
    $region36: #{bottleneck_forward.7} parent=5 // pred_fallthru
      _
    %p465 = scmp.le.s32.totalorder 2, %s10
    // Predicated region
    $region41: #{bottleneck_forward.7} parent=5 // pred_check
      %p466 = pneg %p465
    $region42: #{bottleneck_forward.7} parent=5 // pred_check_branch
      %468 = sbr.rel (%p466) target = $region44
    $region43: #{bottleneck_forward.7} parent=5 // pred_region
      %s469 = ssub.s32 %s10, 2
      // Predicated region
      $region45: #{bottleneck_forward.7} parent=43 // pred_check
        %p470 = pneg %p133
      $region46: #{bottleneck_forward.7} parent=43 // pred_check_branch
        %472 = sbr.rel (%p470) target = $region48
      $region47: #{bottleneck_forward.7} parent=43 // pred_region
        %p473 = scmp.lt.s32.totalorder %s16, 1
        %s474 = scalar_select %p473, %s16, 1
        %s475 = smul.addr %s474, 32
        %s476 = smul.addr %s475, 8
        %s477 = scalar_lea.vmem %s4, %s476
      $region48: #{bottleneck_forward.7} parent=43 // pred_fallthru
        _
    $region44: #{bottleneck_forward.7} parent=5 // pred_fallthru
      _
  $region6: #{bottleneck_forward.7} parent=0 // loop_footer
    %s14 = sadd.s32 1, %s10
  $region7: #{bottleneck_forward.7} parent=0 // loop_footer_branch
    %9 = sbr.rel target = $region3
  $region8: #{bottleneck_forward.7} parent=0 // loop_exit
    _

// kernel: bottleneck_forward.5
$region0: #{bottleneck_forward.5}
  #allocation0 [shape = 'u32[]', space=smem, size = 0x4, offset = 0x4, fixed_abs, tag = 'smem constant byte address 0x4 - core index']
  #allocation1 [shape = 'u32[144,128]{1,0:T(1,128)}', space=vmem, size = 0x12000, scoped, tag = 'internal scratch']
  #allocation2 [shape = 'f32[18,18,4]{2,1,0:T(8,128)}', space=vmem, size = 0x36000, scoped, tag = 'scratch operand']
  %s0 = inlined_call_operand.vmem [shape: f32[2,16,16,4], index: 0, kind: input, shape index: {}]
  %s1 = inlined_call_operand.vmem [shape: f32[1,4], index: 1, kind: input, shape index: {}]
  %s2 = inlined_call_operand.vmem [shape: f32[1,4], index: 2, kind: input, shape index: {}]
  %s3 = inlined_call_operand.vmem [shape: f32[36,4], index: 3, kind: input, shape index: {}]
  %s4 = inlined_call_operand.vmem [shape: f32[2,16,16,4], index: 4, kind: output, shape index: {0}]
  %s5 = inlined_call_operand.vmem [shape: f32[2,4], index: 5, kind: output, shape index: {1}]
  %6 = xla_tuple %s4, %s5
  %s7 = sld [smem:[#allocation0]]
  $region65: #{bottleneck_forward.5} parent=0
    _
  %s9 = ssub.s32 1, %s7
  %s10 = scalar_select 0, %s9, %s7
  loop: start=0, step=1, limit=4
  $region2: #{bottleneck_forward.5} parent=0 // loop_pre_header
    _
  $region3: #{bottleneck_forward.5} parent=0 // loop_header
    %s12 = sphi 0, %s16
    %p13 = scmp.ge.s32.totalorder %s12, 4
    %s22 = sphi 0, %s24
    %s25 = sphi 0, %s22
    %s26 = sphi 0, %s25
    %s42 = sphi 0, %s26
    %s46 = sphi 0, %s46
    %s48 = sphi 0, %s46
    %s49 = sphi 0, %s48
    %s63 = sphi 0, %s49
    %s67 = sphi 0, %s67
    %s69 = sphi 0, %s67
    %s70 = sphi 0, %s69
    %s84 = sphi 0, %s70
    %s88 = sphi 0, %s88
    %s90 = sphi 0, %s88
    %s91 = sphi 0, %s90
    %s105 = sphi 0, %s91
    %s111 = sphi 0, %s113
    %s114 = sphi 0, %s111
    %s115 = sphi 0, %s114
    %s131 = sphi 0, %s115
    %s135 = sphi 0, %s135
    %s137 = sphi 0, %s135
    %s138 = sphi 0, %s137
    %s152 = sphi 0, %s138
  $region4: #{bottleneck_forward.5} parent=0 // loop_header_branch
    %15 = sbr.rel (%p13) target = $region8
  $region5: #{bottleneck_forward.5} parent=0 // loop_body
    %s17 = ssub.s32 %s12, 1
    %s18 = ssub.s32 %s12, 2
    %s19 = sadd.s32 %s12, 1
    %s20 = ssub.s32 %s12, %s19
    %p21 = scmp.eq.s32.totalorder %s20, 0
    %s23 = sadd.s32 %s22, 1
    %s24 = scalar_select %p21, %s22, %s23
    %p27 = pneg %p21
    %p28 = scmp.eq.s32.totalorder %s12, 1
    %p29 = por %p27, %p28
    %p30 = scmp.ne.s32.totalorder %s22, %s25
    %p31 = scmp.eq.s32.totalorder %s12, 0
    %p32 = por %p30, %p31
    %p33 = scmp.ne.s32.totalorder %s22, %s25
    %p34 = scmp.eq.s32.totalorder %s17, 1
    %p35 = por %p33, %p34
    %p36 = scmp.ne.s32.totalorder %s25, %s26
    %p37 = scmp.eq.s32.totalorder %s17, 0
    %p38 = por %p36, %p37
    %p39 = scmp.ne.s32.totalorder %s25, %s26
    %p40 = scmp.eq.s32.totalorder %s18, 1
    %p41 = por %p39, %p40
    %p43 = scmp.ne.s32.totalorder %s26, %s42
    %p44 = scmp.eq.s32.totalorder %s18, 0
    %p45 = por %p43, %p44
    %s47 = sadd.s32 %s46, 1
    %p50 = scmp.eq.s32.totalorder %s12, 1
    %p51 = scmp.ne.s32.totalorder %s46, %s48
    %p52 = scmp.eq.s32.totalorder %s12, 0
    %p53 = por %p51, %p52
    %p54 = scmp.ne.s32.totalorder %s46, %s48
    %p55 = scmp.eq.s32.totalorder %s17, 1
    %p56 = por %p54, %p55
    %p57 = scmp.ne.s32.totalorder %s48, %s49
    %p58 = scmp.eq.s32.totalorder %s17, 0
    %p59 = por %p57, %p58
    %p60 = scmp.ne.s32.totalorder %s48, %s49
    %p61 = scmp.eq.s32.totalorder %s18, 1
    %p62 = por %p60, %p61
    %p64 = scmp.ne.s32.totalorder %s49, %s63
    %p65 = scmp.eq.s32.totalorder %s18, 0
    %p66 = por %p64, %p65
    %s68 = sadd.s32 %s67, 1
    %p71 = scmp.eq.s32.totalorder %s12, 1
    %p72 = scmp.ne.s32.totalorder %s67, %s69
    %p73 = scmp.eq.s32.totalorder %s12, 0
    %p74 = por %p72, %p73
    %p75 = scmp.ne.s32.totalorder %s67, %s69
    %p76 = scmp.eq.s32.totalorder %s17, 1
    %p77 = por %p75, %p76
    %p78 = scmp.ne.s32.totalorder %s69, %s70
    %p79 = scmp.eq.s32.totalorder %s17, 0
    %p80 = por %p78, %p79
    %p81 = scmp.ne.s32.totalorder %s69, %s70
    %p82 = scmp.eq.s32.totalorder %s18, 1
    %p83 = por %p81, %p82
    %p85 = scmp.ne.s32.totalorder %s70, %s84
    %p86 = scmp.eq.s32.totalorder %s18, 0
    %p87 = por %p85, %p86
    %s89 = sadd.s32 %s88, 1
    %p92 = scmp.eq.s32.totalorder %s12, 1
    %p93 = scmp.ne.s32.totalorder %s88, %s90
    %p94 = scmp.eq.s32.totalorder %s12, 0
    %p95 = por %p93, %p94
    %p96 = scmp.ne.s32.totalorder %s88, %s90
    %p97 = scmp.eq.s32.totalorder %s17, 1
    %p98 = por %p96, %p97
    %p99 = scmp.ne.s32.totalorder %s90, %s91
    %p100 = scmp.eq.s32.totalorder %s17, 0
    %p101 = por %p99, %p100
    %p102 = scmp.ne.s32.totalorder %s90, %s91
    %p103 = scmp.eq.s32.totalorder %s18, 1
    %p104 = por %p102, %p103
    %p106 = scmp.ne.s32.totalorder %s91, %s105
    %p107 = scmp.eq.s32.totalorder %s18, 0
    %p108 = por %p106, %p107
    %s109 = ssub.s32 %s12, %s19
    %p110 = scmp.eq.s32.totalorder %s109, 0
    %s112 = sadd.s32 %s111, 1
    %s113 = scalar_select %p110, %s111, %s112
    %p116 = pneg %p110
    %p117 = scmp.eq.s32.totalorder %s12, 1
    %p118 = por %p116, %p117
    %p119 = scmp.ne.s32.totalorder %s111, %s114
    %p120 = scmp.eq.s32.totalorder %s12, 0
    %p121 = por %p119, %p120
    %p122 = scmp.ne.s32.totalorder %s111, %s114
    %p123 = scmp.eq.s32.totalorder %s17, 1
    %p124 = por %p122, %p123
    %p125 = scmp.ne.s32.totalorder %s114, %s115
    %p126 = scmp.eq.s32.totalorder %s17, 0
    %p127 = por %p125, %p126
    %p128 = scmp.ne.s32.totalorder %s114, %s115
    %p129 = scmp.eq.s32.totalorder %s18, 1
    %p130 = por %p128, %p129
    %p132 = scmp.ne.s32.totalorder %s115, %s131
    %p133 = scmp.eq.s32.totalorder %s18, 0
    %p134 = por %p132, %p133
    %s136 = sadd.s32 %s135, 1
    %p139 = scmp.eq.s32.totalorder %s12, 1
    %p140 = scmp.ne.s32.totalorder %s135, %s137
    %p141 = scmp.eq.s32.totalorder %s12, 0
    %p142 = por %p140, %p141
    %p143 = scmp.ne.s32.totalorder %s135, %s137
    %p144 = scmp.eq.s32.totalorder %s17, 1
    %p145 = por %p143, %p144
    %p146 = scmp.ne.s32.totalorder %s137, %s138
    %p147 = scmp.eq.s32.totalorder %s17, 0
    %p148 = por %p146, %p147
    %p149 = scmp.ne.s32.totalorder %s137, %s138
    %p150 = scmp.eq.s32.totalorder %s18, 1
    %p151 = por %p149, %p150
    %p153 = scmp.ne.s32.totalorder %s138, %s152
    %p154 = scmp.eq.s32.totalorder %s18, 0
    %p155 = por %p153, %p154
    %p156 = scmp.le.s32.totalorder 1, %s12
    %p157 = scmp.lt.s32.totalorder %s12, 3
    %p158 = pnand %p156, %p157
    %p159 = pneg %p158
    // Predicated region
    $region9: #{bottleneck_forward.5} parent=5 // pred_check
      _
    $region10: #{bottleneck_forward.5} parent=5 // pred_check_branch
      %161 = sbr.rel (%p158) target = $region12
    $region11: #{bottleneck_forward.5} parent=5 // pred_region
      %s162 = ssub.s32 %s12, 1
      // Predicated region
      $region13: #{bottleneck_forward.5} parent=11 // pred_check
        %p163 = pneg %p59
      $region14: #{bottleneck_forward.5} parent=11 // pred_check_branch
        %165 = sbr.rel (%p163) target = $region16
      $region15: #{bottleneck_forward.5} parent=11 // pred_region
        _
      $region16: #{bottleneck_forward.5} parent=11 // pred_fallthru
        _
      // Predicated region
      $region17: #{bottleneck_forward.5} parent=11 // pred_check
        %p166 = pneg %p80
      $region18: #{bottleneck_forward.5} parent=11 // pred_check_branch
        %168 = sbr.rel (%p166) target = $region20
      $region19: #{bottleneck_forward.5} parent=11 // pred_region
        _
      $region20: #{bottleneck_forward.5} parent=11 // pred_fallthru
        _
      // Predicated region
      $region21: #{bottleneck_forward.5} parent=11 // pred_check
        %p169 = pneg %p101
      $region22: #{bottleneck_forward.5} parent=11 // pred_check_branch
        %171 = sbr.rel (%p169) target = $region24
      $region23: #{bottleneck_forward.5} parent=11 // pred_region
        _
      $region24: #{bottleneck_forward.5} parent=11 // pred_fallthru
        _
    $region12: #{bottleneck_forward.5} parent=5 // pred_fallthru
      _
    %p172 = scmp.lt.s32.totalorder %s12, 2
    // Predicated region
    $region25: #{bottleneck_forward.5} parent=5 // pred_check
      %p173 = pneg %p172
    $region26: #{bottleneck_forward.5} parent=5 // pred_check_branch
      %175 = sbr.rel (%p173) target = $region28
    $region27: #{bottleneck_forward.5} parent=5 // pred_region
      // Predicated region
      $region29: #{bottleneck_forward.5} parent=27 // pred_check
        %p176 = pneg %p32
      $region30: #{bottleneck_forward.5} parent=27 // pred_check_branch
        %178 = sbr.rel (%p176) target = $region32
      $region31: #{bottleneck_forward.5} parent=27 // pred_region
        %p179 = scmp.lt.s32.totalorder %s12, 1
        %s180 = scalar_select %p179, %s12, 1
        %s181 = smul.addr %s180, 32
        %s182 = smul.addr %s181, 8
        %s183 = scalar_lea.vmem %s0, %s182
      $region32: #{bottleneck_forward.5} parent=27 // pred_fallthru
        _
    $region28: #{bottleneck_forward.5} parent=5 // pred_fallthru
      _
    %p184 = scmp.le.s32.totalorder 1, %s12
    %p185 = scmp.lt.s32.totalorder %s12, 3
    %p186 = pnand %p184, %p185
    %p187 = pneg %p186
    // Predicated region
    $region33: #{bottleneck_forward.5} parent=5 // pred_check
      _
    $region34: #{bottleneck_forward.5} parent=5 // pred_check_branch
      %189 = sbr.rel (%p186) target = $region36
    $region35: #{bottleneck_forward.5} parent=5 // pred_region
      %s190 = ssub.s32 %s12, 1
      %p191 = scmp.lt.s32.totalorder %s17, 1
      %s192 = scalar_select %p191, %s17, 1
      %s193 = smul.addr %s192, 32
      %s194 = smul.addr %s193, 8
      %s195 = scalar_lea.vmem %s0, %s194
      %p196 = pneg %p38
      %p197 = pneg %p35
      %p198 = pneg %p59
      %p199 = pneg %p56
      %p200 = pneg %p80
      %p201 = pneg %p77
      %p202 = pneg %p101
      %p203 = pneg %p98
      %p204 = pneg %p127
      %p205 = pneg %p124
      %p206 = scmp.lt.s32.totalorder %s17, 1
      %s207 = scalar_select %p206, %s17, 1
      %s208 = smul.addr %s207, 32
      %s209 = smul.addr %s208, 8
      %s210 = scalar_lea.vmem %s4, %s209
      %p211 = pneg %p148
      %p212 = pneg %p145
      %p213 = scmp.lt.s32.totalorder %s17, 1
      %s214 = scalar_select %p213, %s17, 1
      %s215 = smul.addr %s214, 32
      %s216 = smul.addr %s215, 8
      %s217 = scalar_lea.vmem %s0, %s216
      %p218 = scmp.lt.s32.totalorder %s17, 1
      %s219 = scalar_select %p218, %s17, 1
      %s220 = smul.addr %s219, 32
      %s221 = smul.addr %s220, 8
      %s222 = scalar_lea.vmem %s4, %s221
      %v223 = vld [vmem:[%s217] sm:$0xff]
      %v224 = vld [vmem:[%s217 + $0x8] sm:$0xff]
      %v225 = vld [vmem:[%s217 + $0x10] sm:$0xff]
      %v226 = vld [vmem:[%s217 + $0x18] sm:$0xff]
      %v227 = vld [vmem:[%s217 + $0x20] sm:$0xff]
      %v228 = vld [vmem:[%s217 + $0x28] sm:$0xff]
      %v229 = vld [vmem:[%s217 + $0x30] sm:$0xff]
      %v230 = vld [vmem:[%s217 + $0x38] sm:$0xff]
      %v231 = vld [vmem:[%s217 + $0x40] sm:$0xff]
      %v232 = vld [vmem:[%s217 + $0x48] sm:$0xff]
      %v233 = vld [vmem:[%s217 + $0x50] sm:$0xff]
      %v234 = vld [vmem:[%s217 + $0x58] sm:$0xff]
      %v235 = vld [vmem:[%s217 + $0x60] sm:$0xff]
      %v236 = vld [vmem:[%s217 + $0x68] sm:$0xff]
      %v237 = vld [vmem:[%s217 + $0x70] sm:$0xff]
      %v238 = vld [vmem:[%s217 + $0x78] sm:$0xff]
      %v239 = vld [vmem:[%s217 + $0x80] sm:$0xff]
      %v240 = vld [vmem:[%s217 + $0x88] sm:$0xff]
      %v241 = vld [vmem:[%s217 + $0x90] sm:$0xff]
      %v242 = vld [vmem:[%s217 + $0x98] sm:$0xff]
      %v243 = vld [vmem:[%s217 + $0xa0] sm:$0xff]
      %v244 = vld [vmem:[%s217 + $0xa8] sm:$0xff]
      %v245 = vld [vmem:[%s217 + $0xb0] sm:$0xff]
      %v246 = vld [vmem:[%s217 + $0xb8] sm:$0xff]
      %v247 = vld [vmem:[%s217 + $0xc0] sm:$0xff]
      %v248 = vld [vmem:[%s217 + $0xc8] sm:$0xff]
      %v249 = vld [vmem:[%s217 + $0xd0] sm:$0xff]
      %v250 = vld [vmem:[%s217 + $0xd8] sm:$0xff]
      %v251 = vld [vmem:[%s217 + $0xe0] sm:$0xff]
      %v252 = vld [vmem:[%s217 + $0xe8] sm:$0xff]
      %v253 = vld [vmem:[%s217 + $0xf0] sm:$0xff]
      %v254 = vld [vmem:[%s217 + $0xf8] sm:$0xff]
      %v255 = vld [vmem:[%s1] sm:$0x1]
      %v257 = vlaneseq
      %v258 = vshrl.u32 %v257, 7
      %v259 = vsub.s32 0, %v258
      %v260 = vrot.slane %v255, %v259
      %v262 = vmul.f32 %v223, %v260
      %v263 = vmul.f32 %v224, %v260
      %v264 = vmul.f32 %v225, %v260
      %v265 = vmul.f32 %v226, %v260
      %v266 = vmul.f32 %v227, %v260
      %v267 = vmul.f32 %v228, %v260
      %v268 = vmul.f32 %v229, %v260
      %v269 = vmul.f32 %v230, %v260
      %v270 = vmul.f32 %v231, %v260
      %v271 = vmul.f32 %v232, %v260
      %v272 = vmul.f32 %v233, %v260
      %v273 = vmul.f32 %v234, %v260
      %v274 = vmul.f32 %v235, %v260
      %v275 = vmul.f32 %v236, %v260
      %v276 = vmul.f32 %v237, %v260
      %v277 = vmul.f32 %v238, %v260
      %v278 = vmul.f32 %v239, %v260
      %v279 = vmul.f32 %v240, %v260
      %v280 = vmul.f32 %v241, %v260
      %v281 = vmul.f32 %v242, %v260
      %v282 = vmul.f32 %v243, %v260
      %v283 = vmul.f32 %v244, %v260
      %v284 = vmul.f32 %v245, %v260
      %v285 = vmul.f32 %v246, %v260
      %v286 = vmul.f32 %v247, %v260
      %v287 = vmul.f32 %v248, %v260
      %v288 = vmul.f32 %v249, %v260
      %v289 = vmul.f32 %v250, %v260
      %v290 = vmul.f32 %v251, %v260
      %v291 = vmul.f32 %v252, %v260
      %v292 = vmul.f32 %v253, %v260
      %v293 = vmul.f32 %v254, %v260
      %v294 = vld [vmem:[%s2] sm:$0x1]
      %v296 = vlaneseq
      %v297 = vshrl.u32 %v296, 7
      %v298 = vsub.s32 0, %v297
      %v299 = vrot.slane %v294, %v298
      %v301 = vadd.f32 %v262, %v299
      %v302 = vadd.f32 %v263, %v299
      %v303 = vadd.f32 %v264, %v299
      %v304 = vadd.f32 %v265, %v299
      %v305 = vadd.f32 %v266, %v299
      %v306 = vadd.f32 %v267, %v299
      %v307 = vadd.f32 %v268, %v299
      %v308 = vadd.f32 %v269, %v299
      %v309 = vadd.f32 %v270, %v299
      %v310 = vadd.f32 %v271, %v299
      %v311 = vadd.f32 %v272, %v299
      %v312 = vadd.f32 %v273, %v299
      %v313 = vadd.f32 %v274, %v299
      %v314 = vadd.f32 %v275, %v299
      %v315 = vadd.f32 %v276, %v299
      %v316 = vadd.f32 %v277, %v299
      %v317 = vadd.f32 %v278, %v299
      %v318 = vadd.f32 %v279, %v299
      %v319 = vadd.f32 %v280, %v299
      %v320 = vadd.f32 %v281, %v299
      %v321 = vadd.f32 %v282, %v299
      %v322 = vadd.f32 %v283, %v299
      %v323 = vadd.f32 %v284, %v299
      %v324 = vadd.f32 %v285, %v299
      %v325 = vadd.f32 %v286, %v299
      %v326 = vadd.f32 %v287, %v299
      %v327 = vadd.f32 %v288, %v299
      %v328 = vadd.f32 %v289, %v299
      %v329 = vadd.f32 %v290, %v299
      %v330 = vadd.f32 %v291, %v299
      %v331 = vadd.f32 %v292, %v299
      %v332 = vadd.f32 %v293, %v299
      %v333 = vmax.f32 %v301, 0.0
      %v334 = vmax.f32 %v302, 0.0
      %v335 = vmax.f32 %v303, 0.0
      %v336 = vmax.f32 %v304, 0.0
      %v337 = vmax.f32 %v305, 0.0
      %v338 = vmax.f32 %v306, 0.0
      %v339 = vmax.f32 %v307, 0.0
      %v340 = vmax.f32 %v308, 0.0
      %v341 = vmax.f32 %v309, 0.0
      %v342 = vmax.f32 %v310, 0.0
      %v343 = vmax.f32 %v311, 0.0
      %v344 = vmax.f32 %v312, 0.0
      %v345 = vmax.f32 %v313, 0.0
      %v346 = vmax.f32 %v314, 0.0
      %v347 = vmax.f32 %v315, 0.0
      %v348 = vmax.f32 %v316, 0.0
      %v349 = vmax.f32 %v317, 0.0
      %v350 = vmax.f32 %v318, 0.0
      %v351 = vmax.f32 %v319, 0.0
      %v352 = vmax.f32 %v320, 0.0
      %v353 = vmax.f32 %v321, 0.0
      %v354 = vmax.f32 %v322, 0.0
      %v355 = vmax.f32 %v323, 0.0
      %v356 = vmax.f32 %v324, 0.0
      %v357 = vmax.f32 %v325, 0.0
      %v358 = vmax.f32 %v326, 0.0
      %v359 = vmax.f32 %v327, 0.0
      %v360 = vmax.f32 %v328, 0.0
      %v361 = vmax.f32 %v329, 0.0
      %v362 = vmax.f32 %v330, 0.0
      %v363 = vmax.f32 %v331, 0.0
      %v364 = vmax.f32 %v332, 0.0
      %p365 = scmp.eq.s32.totalorder %s17, 0
      // Predicated region
      $region37: #{bottleneck_forward.5} parent=35 // pred_check
        %p366 = pneg %p365
      $region38: #{bottleneck_forward.5} parent=35 // pred_check_branch
        %368 = sbr.rel (%p366) target = $region40
      $region39: #{bottleneck_forward.5} parent=35 // pred_region
        %vm369 = vcmask 31744
        %370 = vst.msk [vmem:[#allocation2] sm:$0xff] %vm369, 0.0
        %371 = vst.msk [vmem:[#allocation2 + $0x8] sm:$0xff] %vm369, 0.0
        %vm372 = vcmask 25600
        %373 = vst.msk [vmem:[#allocation2 + $0x10] sm:$0x3] %vm372, 0.0
        %374 = vst.msk [vmem:[#allocation2 + $0x18] sm:$0xff] %vm369, 0.0
        %375 = vst.msk [vmem:[#allocation2 + $0x20] sm:$0xff] %vm369, 0.0
        %376 = vst.msk [vmem:[#allocation2 + $0x28] sm:$0x3] %vm372, 0.0
        %377 = vst.msk [vmem:[#allocation2 + $0x30] sm:$0xff] %vm369, 0.0
        %378 = vst.msk [vmem:[#allocation2 + $0x38] sm:$0xff] %vm369, 0.0
        %379 = vst.msk [vmem:[#allocation2 + $0x40] sm:$0x3] %vm372, 0.0
        %380 = vst.msk [vmem:[#allocation2 + $0x48] sm:$0xff] %vm369, 0.0
        %381 = vst.msk [vmem:[#allocation2 + $0x50] sm:$0xff] %vm369, 0.0
        %382 = vst.msk [vmem:[#allocation2 + $0x58] sm:$0x3] %vm372, 0.0
        %383 = vst.msk [vmem:[#allocation2 + $0x60] sm:$0xff] %vm369, 0.0
        %384 = vst.msk [vmem:[#allocation2 + $0x68] sm:$0xff] %vm369, 0.0
        %385 = vst.msk [vmem:[#allocation2 + $0x70] sm:$0x3] %vm372, 0.0
        %386 = vst.msk [vmem:[#allocation2 + $0x78] sm:$0xff] %vm369, 0.0
        %387 = vst.msk [vmem:[#allocation2 + $0x80] sm:$0xff] %vm369, 0.0
        %388 = vst.msk [vmem:[#allocation2 + $0x88] sm:$0x3] %vm372, 0.0
        %389 = vst.msk [vmem:[#allocation2 + $0x90] sm:$0xff] %vm369, 0.0
        %390 = vst.msk [vmem:[#allocation2 + $0x98] sm:$0xff] %vm369, 0.0
        %391 = vst.msk [vmem:[#allocation2 + $0xa0] sm:$0x3] %vm372, 0.0
        %392 = vst.msk [vmem:[#allocation2 + $0xa8] sm:$0xff] %vm369, 0.0
        %393 = vst.msk [vmem:[#allocation2 + $0xb0] sm:$0xff] %vm369, 0.0
        %394 = vst.msk [vmem:[#allocation2 + $0xb8] sm:$0x3] %vm372, 0.0
        %395 = vst.msk [vmem:[#allocation2 + $0xc0] sm:$0xff] %vm369, 0.0
        %396 = vst.msk [vmem:[#allocation2 + $0xc8] sm:$0xff] %vm369, 0.0
        %397 = vst.msk [vmem:[#allocation2 + $0xd0] sm:$0x3] %vm372, 0.0
        %398 = vst.msk [vmem:[#allocation2 + $0xd8] sm:$0xff] %vm369, 0.0
        %399 = vst.msk [vmem:[#allocation2 + $0xe0] sm:$0xff] %vm369, 0.0
        %400 = vst.msk [vmem:[#allocation2 + $0xe8] sm:$0x3] %vm372, 0.0
        %401 = vst.msk [vmem:[#allocation2 + $0xf0] sm:$0xff] %vm369, 0.0
        %402 = vst.msk [vmem:[#allocation2 + $0xf8] sm:$0xff] %vm369, 0.0
        %403 = vst.msk [vmem:[#allocation2 + $0x100] sm:$0x3] %vm372, 0.0
        %404 = vst.msk [vmem:[#allocation2 + $0x108] sm:$0xff] %vm369, 0.0
        %405 = vst.msk [vmem:[#allocation2 + $0x110] sm:$0xff] %vm369, 0.0
        %406 = vst.msk [vmem:[#allocation2 + $0x118] sm:$0x3] %vm372, 0.0
        %407 = vst.msk [vmem:[#allocation2 + $0x120] sm:$0xff] %vm369, 0.0
        %408 = vst.msk [vmem:[#allocation2 + $0x128] sm:$0xff] %vm369, 0.0
        %409 = vst.msk [vmem:[#allocation2 + $0x130] sm:$0x3] %vm372, 0.0
        %410 = vst.msk [vmem:[#allocation2 + $0x138] sm:$0xff] %vm369, 0.0
        %411 = vst.msk [vmem:[#allocation2 + $0x140] sm:$0xff] %vm369, 0.0
        %412 = vst.msk [vmem:[#allocation2 + $0x148] sm:$0x3] %vm372, 0.0
        %413 = vst.msk [vmem:[#allocation2 + $0x150] sm:$0xff] %vm369, 0.0
        %414 = vst.msk [vmem:[#allocation2 + $0x158] sm:$0xff] %vm369, 0.0
        %415 = vst.msk [vmem:[#allocation2 + $0x160] sm:$0x3] %vm372, 0.0
        %416 = vst.msk [vmem:[#allocation2 + $0x168] sm:$0xff] %vm369, 0.0
        %417 = vst.msk [vmem:[#allocation2 + $0x170] sm:$0xff] %vm369, 0.0
        %418 = vst.msk [vmem:[#allocation2 + $0x178] sm:$0x3] %vm372, 0.0
        %419 = vst.msk [vmem:[#allocation2 + $0x180] sm:$0xff] %vm369, 0.0
        %420 = vst.msk [vmem:[#allocation2 + $0x188] sm:$0xff] %vm369, 0.0
        %421 = vst.msk [vmem:[#allocation2 + $0x190] sm:$0x3] %vm372, 0.0
        %422 = vst.msk [vmem:[#allocation2 + $0x198] sm:$0xff] %vm369, 0.0
        %423 = vst.msk [vmem:[#allocation2 + $0x1a0] sm:$0xff] %vm369, 0.0
        %424 = vst.msk [vmem:[#allocation2 + $0x1a8] sm:$0x3] %vm372, 0.0
      $region40: #{bottleneck_forward.5} parent=35 // pred_fallthru
        _
      %s425 = scalar_lea.vmem [#allocation2], 24
      %vm426 = vcmask 31744
      %427 = vst.msk [vmem:[%s425 + $0x1] sm:$0xff] %vm426, %v333
      %428 = vst.msk [vmem:[%s425 + $0x9] sm:$0xff] %vm426, %v334
      %429 = vst.msk [vmem:[%s425 + $0x19] sm:$0xff] %vm426, %v335
      %430 = vst.msk [vmem:[%s425 + $0x21] sm:$0xff] %vm426, %v336
      %431 = vst.msk [vmem:[%s425 + $0x31] sm:$0xff] %vm426, %v337
      %432 = vst.msk [vmem:[%s425 + $0x39] sm:$0xff] %vm426, %v338
      %433 = vst.msk [vmem:[%s425 + $0x49] sm:$0xff] %vm426, %v339
      %434 = vst.msk [vmem:[%s425 + $0x51] sm:$0xff] %vm426, %v340
      %435 = vst.msk [vmem:[%s425 + $0x61] sm:$0xff] %vm426, %v341
      %436 = vst.msk [vmem:[%s425 + $0x69] sm:$0xff] %vm426, %v342
      %437 = vst.msk [vmem:[%s425 + $0x79] sm:$0xff] %vm426, %v343
      %438 = vst.msk [vmem:[%s425 + $0x81] sm:$0xff] %vm426, %v344
      %439 = vst.msk [vmem:[%s425 + $0x91] sm:$0xff] %vm426, %v345
      %440 = vst.msk [vmem:[%s425 + $0x99] sm:$0xff] %vm426, %v346
      %441 = vst.msk [vmem:[%s425 + $0xa9] sm:$0xff] %vm426, %v347
      %442 = vst.msk [vmem:[%s425 + $0xb1] sm:$0xff] %vm426, %v348
      %443 = vst.msk [vmem:[%s425 + $0xc1] sm:$0xff] %vm426, %v349
      %444 = vst.msk [vmem:[%s425 + $0xc9] sm:$0xff] %vm426, %v350
      %445 = vst.msk [vmem:[%s425 + $0xd9] sm:$0xff] %vm426, %v351
      %446 = vst.msk [vmem:[%s425 + $0xe1] sm:$0xff] %vm426, %v352
      %447 = vst.msk [vmem:[%s425 + $0xf1] sm:$0xff] %vm426, %v353
      %448 = vst.msk [vmem:[%s425 + $0xf9] sm:$0xff] %vm426, %v354
      %449 = vst.msk [vmem:[%s425 + $0x109] sm:$0xff] %vm426, %v355
      %450 = vst.msk [vmem:[%s425 + $0x111] sm:$0xff] %vm426, %v356
      %451 = vst.msk [vmem:[%s425 + $0x121] sm:$0xff] %vm426, %v357
      %452 = vst.msk [vmem:[%s425 + $0x129] sm:$0xff] %vm426, %v358
      %453 = vst.msk [vmem:[%s425 + $0x139] sm:$0xff] %vm426, %v359
      %454 = vst.msk [vmem:[%s425 + $0x141] sm:$0xff] %vm426, %v360
      %455 = vst.msk [vmem:[%s425 + $0x151] sm:$0xff] %vm426, %v361
      %456 = vst.msk [vmem:[%s425 + $0x159] sm:$0xff] %vm426, %v362
      %457 = vst.msk [vmem:[%s425 + $0x169] sm:$0xff] %vm426, %v363
      %458 = vst.msk [vmem:[%s425 + $0x171] sm:$0xff] %vm426, %v364
      %v459 = vld [vmem:[#allocation2] sm:$0xff]
      %v460 = vld [vmem:[#allocation2 + $0x8] sm:$0xff]
      %v461 = vld [vmem:[#allocation2 + $0x10] sm:$0x3]
      %v462 = vld [vmem:[#allocation2 + $0x18] sm:$0xff]
      %v463 = vld [vmem:[#allocation2 + $0x20] sm:$0xff]
      %v464 = vld [vmem:[#allocation2 + $0x28] sm:$0x3]
      %v465 = vld [vmem:[#allocation2 + $0x30] sm:$0xff]
      %v466 = vld [vmem:[#allocation2 + $0x38] sm:$0xff]
      %v467 = vld [vmem:[#allocation2 + $0x40] sm:$0x3]
      %v468 = vld [vmem:[#allocation2 + $0x48] sm:$0xff]
      %v469 = vld [vmem:[#allocation2 + $0x50] sm:$0xff]
      %v470 = vld [vmem:[#allocation2 + $0x58] sm:$0x3]
      %v471 = vld [vmem:[#allocation2 + $0x60] sm:$0xff]
      %v472 = vld [vmem:[#allocation2 + $0x68] sm:$0xff]
      %v473 = vld [vmem:[#allocation2 + $0x70] sm:$0x3]
      %v474 = vld [vmem:[#allocation2 + $0x78] sm:$0xff]
      %v475 = vld [vmem:[#allocation2 + $0x80] sm:$0xff]
      %v476 = vld [vmem:[#allocation2 + $0x88] sm:$0x3]
      %v477 = vld [vmem:[#allocation2 + $0x90] sm:$0xff]
      %v478 = vld [vmem:[#allocation2 + $0x98] sm:$0xff]
      %v479 = vld [vmem:[#allocation2 + $0xa0] sm:$0x3]
      %v480 = vld [vmem:[#allocation2 + $0xa8] sm:$0xff]
      %v481 = vld [vmem:[#allocation2 + $0xb0] sm:$0xff]
      %v482 = vld [vmem:[#allocation2 + $0xb8] sm:$0x3]
      %v483 = vld [vmem:[#allocation2 + $0xc0] sm:$0xff]
      %v484 = vld [vmem:[#allocation2 + $0xc8] sm:$0xff]
      %v485 = vld [vmem:[#allocation2 + $0xd0] sm:$0x3]
      %v486 = vld [vmem:[#allocation2 + $0xd8] sm:$0xff]
      %v487 = vld [vmem:[#allocation2 + $0xe0] sm:$0xff]
      %v488 = vld [vmem:[#allocation2 + $0xe8] sm:$0x3]
      %v489 = vld [vmem:[#allocation2 + $0xf0] sm:$0xff]
      %v490 = vld [vmem:[#allocation2 + $0xf8] sm:$0xff]
      %v491 = vld [vmem:[#allocation2 + $0x100] sm:$0x3]
      %v492 = vld [vmem:[#allocation2 + $0x108] sm:$0xff]
      %v493 = vld [vmem:[#allocation2 + $0x110] sm:$0xff]
      %v494 = vld [vmem:[#allocation2 + $0x118] sm:$0x3]
      %v495 = vld [vmem:[#allocation2 + $0x120] sm:$0xff]
      %v496 = vld [vmem:[#allocation2 + $0x128] sm:$0xff]
      %v497 = vld [vmem:[#allocation2 + $0x130] sm:$0x3]
      %v498 = vld [vmem:[#allocation2 + $0x138] sm:$0xff]
      %v499 = vld [vmem:[#allocation2 + $0x140] sm:$0xff]
      %v500 = vld [vmem:[#allocation2 + $0x148] sm:$0x3]
      %v501 = vld [vmem:[#allocation2 + $0x150] sm:$0xff]
      %v502 = vld [vmem:[#allocation2 + $0x158] sm:$0xff]
      %v503 = vld [vmem:[#allocation2 + $0x160] sm:$0x3]
      %v504 = vld [vmem:[#allocation2 + $0x168] sm:$0xff]
      %v505 = vld [vmem:[#allocation2 + $0x170] sm:$0xff]
      %v506 = vld [vmem:[#allocation2 + $0x178] sm:$0x3]
      %v507 = vld [vmem:[#allocation2 + $0x180] sm:$0xff]
      %v508 = vld [vmem:[#allocation2 + $0x188] sm:$0xff]
      %v509 = vld [vmem:[#allocation2 + $0x190] sm:$0x3]
      %v510 = vld [vmem:[#allocation2 + $0x198] sm:$0xff]
      %v511 = vld [vmem:[#allocation2 + $0x1a0] sm:$0xff]
      %v512 = vld [vmem:[#allocation2 + $0x1a8] sm:$0x3]
      %vm561 = vcmask 1046528
      %v562 = vrot.slane %v459, 1
      %v563 = vrot.slane %v460, 1
      %v564 = vsel %vm561, %v562, %v563
      %v565 = vrot.slane %v461, 1
      %v566 = vsel %vm561, %v563, %v565
      %v567 = vrot.slane %v462, 1
      %v568 = vrot.slane %v463, 1
      %v569 = vsel %vm561, %v567, %v568
      %v570 = vrot.slane %v464, 1
      %v571 = vsel %vm561, %v568, %v570
      %v572 = vrot.slane %v465, 1
      %v573 = vrot.slane %v466, 1
      %v574 = vsel %vm561, %v572, %v573
      %v575 = vrot.slane %v467, 1
      %v576 = vsel %vm561, %v573, %v575
      %v577 = vrot.slane %v468, 1
      %v578 = vrot.slane %v469, 1
      %v579 = vsel %vm561, %v577, %v578
      %v580 = vrot.slane %v470, 1
      %v581 = vsel %vm561, %v578, %v580
      %v582 = vrot.slane %v471, 1
      %v583 = vrot.slane %v472, 1
      %v584 = vsel %vm561, %v582, %v583
      %v585 = vrot.slane %v473, 1
      %v586 = vsel %vm561, %v583, %v585
      %v587 = vrot.slane %v474, 1
      %v588 = vrot.slane %v475, 1
      %v589 = vsel %vm561, %v587, %v588
      %v590 = vrot.slane %v476, 1
      %v591 = vsel %vm561, %v588, %v590
      %v592 = vrot.slane %v477, 1
      %v593 = vrot.slane %v478, 1
      %v594 = vsel %vm561, %v592, %v593
      %v595 = vrot.slane %v479, 1
      %v596 = vsel %vm561, %v593, %v595
      %v597 = vrot.slane %v480, 1
      %v598 = vrot.slane %v481, 1
      %v599 = vsel %vm561, %v597, %v598
      %v600 = vrot.slane %v482, 1
      %v601 = vsel %vm561, %v598, %v600
      %v602 = vrot.slane %v483, 1
      %v603 = vrot.slane %v484, 1
      %v604 = vsel %vm561, %v602, %v603
      %v605 = vrot.slane %v485, 1
      %v606 = vsel %vm561, %v603, %v605
      %v607 = vrot.slane %v486, 1
      %v608 = vrot.slane %v487, 1
      %v609 = vsel %vm561, %v607, %v608
      %v610 = vrot.slane %v488, 1
      %v611 = vsel %vm561, %v608, %v610
      %v612 = vrot.slane %v489, 1
      %v613 = vrot.slane %v490, 1
      %v614 = vsel %vm561, %v612, %v613
      %v615 = vrot.slane %v491, 1
      %v616 = vsel %vm561, %v613, %v615
      %v617 = vrot.slane %v492, 1
      %v618 = vrot.slane %v493, 1
      %v619 = vsel %vm561, %v617, %v618
      %v620 = vrot.slane %v494, 1
      %v621 = vsel %vm561, %v618, %v620
      %v622 = vrot.slane %v495, 1
      %v623 = vrot.slane %v496, 1
      %v624 = vsel %vm561, %v622, %v623
      %v625 = vrot.slane %v497, 1
      %v626 = vsel %vm561, %v623, %v625
      %v627 = vrot.slane %v498, 1
      %v628 = vrot.slane %v499, 1
      %v629 = vsel %vm561, %v627, %v628
      %v630 = vrot.slane %v500, 1
      %v631 = vsel %vm561, %v628, %v630
      %v632 = vrot.slane %v501, 1
      %v633 = vrot.slane %v502, 1
      %v634 = vsel %vm561, %v632, %v633
      %v635 = vrot.slane %v503, 1
      %v636 = vsel %vm561, %v633, %v635
      %v637 = vrot.slane %v504, 1
      %v638 = vrot.slane %v505, 1
      %v639 = vsel %vm561, %v637, %v638
      %v640 = vrot.slane %v506, 1
      %v641 = vsel %vm561, %v638, %v640
      %642 = vrot.lane.b32.xlu0 %v564, 4
      %v643 = vpop.permute.xlu0 %642
      %644 = vrot.lane.b32.xlu0 %v566, 4
      %v645 = vpop.permute.xlu0 %644
      %646 = vrot.lane.b32.xlu0 %v569, 4
      %v647 = vpop.permute.xlu0 %646
      %648 = vrot.lane.b32.xlu0 %v571, 4
      %v649 = vpop.permute.xlu0 %648
      %650 = vrot.lane.b32.xlu0 %v574, 4
      %v651 = vpop.permute.xlu0 %650
      %652 = vrot.lane.b32.xlu0 %v576, 4
      %v653 = vpop.permute.xlu0 %652
      %654 = vrot.lane.b32.xlu0 %v579, 4
      %v655 = vpop.permute.xlu0 %654
      %656 = vrot.lane.b32.xlu0 %v581, 4
      %v657 = vpop.permute.xlu0 %656
      %658 = vrot.lane.b32.xlu0 %v584, 4
      %v659 = vpop.permute.xlu0 %658
      %660 = vrot.lane.b32.xlu0 %v586, 4
      %v661 = vpop.permute.xlu0 %660
      %662 = vrot.lane.b32.xlu0 %v589, 4
      %v663 = vpop.permute.xlu0 %662
      %664 = vrot.lane.b32.xlu0 %v591, 4
      %v665 = vpop.permute.xlu0 %664
      %666 = vrot.lane.b32.xlu0 %v594, 4
      %v667 = vpop.permute.xlu0 %666
      %668 = vrot.lane.b32.xlu0 %v596, 4
      %v669 = vpop.permute.xlu0 %668
      %670 = vrot.lane.b32.xlu0 %v599, 4
      %v671 = vpop.permute.xlu0 %670
      %672 = vrot.lane.b32.xlu0 %v601, 4
      %v673 = vpop.permute.xlu0 %672
      %674 = vrot.lane.b32.xlu0 %v604, 4
      %v675 = vpop.permute.xlu0 %674
      %676 = vrot.lane.b32.xlu0 %v606, 4
      %v677 = vpop.permute.xlu0 %676
      %678 = vrot.lane.b32.xlu0 %v609, 4
      %v679 = vpop.permute.xlu0 %678
      %680 = vrot.lane.b32.xlu0 %v611, 4
      %v681 = vpop.permute.xlu0 %680
      %682 = vrot.lane.b32.xlu0 %v614, 4
      %v683 = vpop.permute.xlu0 %682
      %684 = vrot.lane.b32.xlu0 %v616, 4
      %v685 = vpop.permute.xlu0 %684
      %686 = vrot.lane.b32.xlu0 %v619, 4
      %v687 = vpop.permute.xlu0 %686
      %688 = vrot.lane.b32.xlu0 %v621, 4
      %v689 = vpop.permute.xlu0 %688
      %690 = vrot.lane.b32.xlu0 %v624, 4
      %v691 = vpop.permute.xlu0 %690
      %692 = vrot.lane.b32.xlu0 %v626, 4
      %v693 = vpop.permute.xlu0 %692
      %694 = vrot.lane.b32.xlu0 %v629, 4
      %v695 = vpop.permute.xlu0 %694
      %696 = vrot.lane.b32.xlu0 %v631, 4
      %v697 = vpop.permute.xlu0 %696
      %698 = vrot.lane.b32.xlu0 %v634, 4
      %v699 = vpop.permute.xlu0 %698
      %700 = vrot.lane.b32.xlu0 %v636, 4
      %v701 = vpop.permute.xlu0 %700
      %702 = vrot.lane.b32.xlu0 %v639, 4
      %v703 = vpop.permute.xlu0 %702
      %704 = vrot.lane.b32.xlu0 %v641, 4
      %v705 = vpop.permute.xlu0 %704
      %vm738 = vcmask 1045504
      %v739 = vrot.slane %v459, 2
      %v740 = vrot.slane %v460, 2
      %v741 = vsel %vm738, %v739, %v740
      %v742 = vrot.slane %v461, 2
      %v743 = vsel %vm738, %v740, %v742
      %v744 = vrot.slane %v462, 2
      %v745 = vrot.slane %v463, 2
      %v746 = vsel %vm738, %v744, %v745
      %v747 = vrot.slane %v464, 2
      %v748 = vsel %vm738, %v745, %v747
      %v749 = vrot.slane %v465, 2
      %v750 = vrot.slane %v466, 2
      %v751 = vsel %vm738, %v749, %v750
      %v752 = vrot.slane %v467, 2
      %v753 = vsel %vm738, %v750, %v752
      %v754 = vrot.slane %v468, 2
      %v755 = vrot.slane %v469, 2
      %v756 = vsel %vm738, %v754, %v755
      %v757 = vrot.slane %v470, 2
      %v758 = vsel %vm738, %v755, %v757
      %v759 = vrot.slane %v471, 2
      %v760 = vrot.slane %v472, 2
      %v761 = vsel %vm738, %v759, %v760
      %v762 = vrot.slane %v473, 2
      %v763 = vsel %vm738, %v760, %v762
      %v764 = vrot.slane %v474, 2
      %v765 = vrot.slane %v475, 2
      %v766 = vsel %vm738, %v764, %v765
      %v767 = vrot.slane %v476, 2
      %v768 = vsel %vm738, %v765, %v767
      %v769 = vrot.slane %v477, 2
      %v770 = vrot.slane %v478, 2
      %v771 = vsel %vm738, %v769, %v770
      %v772 = vrot.slane %v479, 2
      %v773 = vsel %vm738, %v770, %v772
      %v774 = vrot.slane %v480, 2
      %v775 = vrot.slane %v481, 2
      %v776 = vsel %vm738, %v774, %v775
      %v777 = vrot.slane %v482, 2
      %v778 = vsel %vm738, %v775, %v777
      %v779 = vrot.slane %v483, 2
      %v780 = vrot.slane %v484, 2
      %v781 = vsel %vm738, %v779, %v780
      %v782 = vrot.slane %v485, 2
      %v783 = vsel %vm738, %v780, %v782
      %v784 = vrot.slane %v486, 2
      %v785 = vrot.slane %v487, 2
      %v786 = vsel %vm738, %v784, %v785
      %v787 = vrot.slane %v488, 2
      %v788 = vsel %vm738, %v785, %v787
      %v789 = vrot.slane %v489, 2
      %v790 = vrot.slane %v490, 2
      %v791 = vsel %vm738, %v789, %v790
      %v792 = vrot.slane %v491, 2
      %v793 = vsel %vm738, %v790, %v792
      %v794 = vrot.slane %v492, 2
      %v795 = vrot.slane %v493, 2
      %v796 = vsel %vm738, %v794, %v795
      %v797 = vrot.slane %v494, 2
      %v798 = vsel %vm738, %v795, %v797
      %v799 = vrot.slane %v495, 2
      %v800 = vrot.slane %v496, 2
      %v801 = vsel %vm738, %v799, %v800
      %v802 = vrot.slane %v497, 2
      %v803 = vsel %vm738, %v800, %v802
      %v804 = vrot.slane %v498, 2
      %v805 = vrot.slane %v499, 2
      %v806 = vsel %vm738, %v804, %v805
      %v807 = vrot.slane %v500, 2
      %v808 = vsel %vm738, %v805, %v807
      %v809 = vrot.slane %v501, 2
      %v810 = vrot.slane %v502, 2
      %v811 = vsel %vm738, %v809, %v810
      %v812 = vrot.slane %v503, 2
      %v813 = vsel %vm738, %v810, %v812
      %v814 = vrot.slane %v504, 2
      %v815 = vrot.slane %v505, 2
      %v816 = vsel %vm738, %v814, %v815
      %v817 = vrot.slane %v506, 2
      %v818 = vsel %vm738, %v815, %v817
      %819 = vrot.lane.b32.xlu0 %v741, 8
      %v820 = vpop.permute.xlu0 %819
      %821 = vrot.lane.b32.xlu0 %v743, 8
      %v822 = vpop.permute.xlu0 %821
      %823 = vrot.lane.b32.xlu0 %v746, 8
      %v824 = vpop.permute.xlu0 %823
      %825 = vrot.lane.b32.xlu0 %v748, 8
      %v826 = vpop.permute.xlu0 %825
      %827 = vrot.lane.b32.xlu0 %v751, 8
      %v828 = vpop.permute.xlu0 %827
      %829 = vrot.lane.b32.xlu0 %v753, 8
      %v830 = vpop.permute.xlu0 %829
      %831 = vrot.lane.b32.xlu0 %v756, 8
      %v832 = vpop.permute.xlu0 %831
      %833 = vrot.lane.b32.xlu0 %v758, 8
      %v834 = vpop.permute.xlu0 %833
      %835 = vrot.lane.b32.xlu0 %v761, 8
      %v836 = vpop.permute.xlu0 %835
      %837 = vrot.lane.b32.xlu0 %v763, 8
      %v838 = vpop.permute.xlu0 %837
      %839 = vrot.lane.b32.xlu0 %v766, 8
      %v840 = vpop.permute.xlu0 %839
      %841 = vrot.lane.b32.xlu0 %v768, 8
      %v842 = vpop.permute.xlu0 %841
      %843 = vrot.lane.b32.xlu0 %v771, 8
      %v844 = vpop.permute.xlu0 %843
      %845 = vrot.lane.b32.xlu0 %v773, 8
      %v846 = vpop.permute.xlu0 %845
      %847 = vrot.lane.b32.xlu0 %v776, 8
      %v848 = vpop.permute.xlu0 %847
      %849 = vrot.lane.b32.xlu0 %v778, 8
      %v850 = vpop.permute.xlu0 %849
      %851 = vrot.lane.b32.xlu0 %v781, 8
      %v852 = vpop.permute.xlu0 %851
      %853 = vrot.lane.b32.xlu0 %v783, 8
      %v854 = vpop.permute.xlu0 %853
      %855 = vrot.lane.b32.xlu0 %v786, 8
      %v856 = vpop.permute.xlu0 %855
      %857 = vrot.lane.b32.xlu0 %v788, 8
      %v858 = vpop.permute.xlu0 %857
      %859 = vrot.lane.b32.xlu0 %v791, 8
      %v860 = vpop.permute.xlu0 %859
      %861 = vrot.lane.b32.xlu0 %v793, 8
      %v862 = vpop.permute.xlu0 %861
      %863 = vrot.lane.b32.xlu0 %v796, 8
      %v864 = vpop.permute.xlu0 %863
      %865 = vrot.lane.b32.xlu0 %v798, 8
      %v866 = vpop.permute.xlu0 %865
      %867 = vrot.lane.b32.xlu0 %v801, 8
      %v868 = vpop.permute.xlu0 %867
      %869 = vrot.lane.b32.xlu0 %v803, 8
      %v870 = vpop.permute.xlu0 %869
      %871 = vrot.lane.b32.xlu0 %v806, 8
      %v872 = vpop.permute.xlu0 %871
      %873 = vrot.lane.b32.xlu0 %v808, 8
      %v874 = vpop.permute.xlu0 %873
      %875 = vrot.lane.b32.xlu0 %v811, 8
      %v876 = vpop.permute.xlu0 %875
      %877 = vrot.lane.b32.xlu0 %v813, 8
      %v878 = vpop.permute.xlu0 %877
      %879 = vrot.lane.b32.xlu0 %v816, 8
      %v880 = vpop.permute.xlu0 %879
      %881 = vrot.lane.b32.xlu0 %v818, 8
      %v882 = vpop.permute.xlu0 %881
      %917 = vrot.lane.b32.xlu0 %v462, 12
      %v918 = vpop.permute.xlu0 %917
      %919 = vrot.lane.b32.xlu0 %v463, 12
      %v920 = vpop.permute.xlu0 %919
      %921 = vrot.lane.b32.xlu0 %v465, 12
      %v922 = vpop.permute.xlu0 %921
      %923 = vrot.lane.b32.xlu0 %v466, 12
      %v924 = vpop.permute.xlu0 %923
      %925 = vrot.lane.b32.xlu0 %v468, 12
      %v926 = vpop.permute.xlu0 %925
      %927 = vrot.lane.b32.xlu0 %v469, 12
      %v928 = vpop.permute.xlu0 %927
      %929 = vrot.lane.b32.xlu0 %v471, 12
      %v930 = vpop.permute.xlu0 %929
      %931 = vrot.lane.b32.xlu0 %v472, 12
      %v932 = vpop.permute.xlu0 %931
      %933 = vrot.lane.b32.xlu0 %v474, 12
      %v934 = vpop.permute.xlu0 %933
      %935 = vrot.lane.b32.xlu0 %v475, 12
      %v936 = vpop.permute.xlu0 %935
      %937 = vrot.lane.b32.xlu0 %v477, 12
      %v938 = vpop.permute.xlu0 %937
      %939 = vrot.lane.b32.xlu0 %v478, 12
      %v940 = vpop.permute.xlu0 %939
      %941 = vrot.lane.b32.xlu0 %v480, 12
      %v942 = vpop.permute.xlu0 %941
      %943 = vrot.lane.b32.xlu0 %v481, 12
      %v944 = vpop.permute.xlu0 %943
      %945 = vrot.lane.b32.xlu0 %v483, 12
      %v946 = vpop.permute.xlu0 %945
      %947 = vrot.lane.b32.xlu0 %v484, 12
      %v948 = vpop.permute.xlu0 %947
      %949 = vrot.lane.b32.xlu0 %v486, 12
      %v950 = vpop.permute.xlu0 %949
      %951 = vrot.lane.b32.xlu0 %v487, 12
      %v952 = vpop.permute.xlu0 %951
      %953 = vrot.lane.b32.xlu0 %v489, 12
      %v954 = vpop.permute.xlu0 %953
      %955 = vrot.lane.b32.xlu0 %v490, 12
      %v956 = vpop.permute.xlu0 %955
      %957 = vrot.lane.b32.xlu0 %v492, 12
      %v958 = vpop.permute.xlu0 %957
      %959 = vrot.lane.b32.xlu0 %v493, 12
      %v960 = vpop.permute.xlu0 %959
      %961 = vrot.lane.b32.xlu0 %v495, 12
      %v962 = vpop.permute.xlu0 %961
      %963 = vrot.lane.b32.xlu0 %v496, 12
      %v964 = vpop.permute.xlu0 %963
      %965 = vrot.lane.b32.xlu0 %v498, 12
      %v966 = vpop.permute.xlu0 %965
      %967 = vrot.lane.b32.xlu0 %v499, 12
      %v968 = vpop.permute.xlu0 %967
      %969 = vrot.lane.b32.xlu0 %v501, 12
      %v970 = vpop.permute.xlu0 %969
      %971 = vrot.lane.b32.xlu0 %v502, 12
      %v972 = vpop.permute.xlu0 %971
      %973 = vrot.lane.b32.xlu0 %v504, 12
      %v974 = vpop.permute.xlu0 %973
      %975 = vrot.lane.b32.xlu0 %v505, 12
      %v976 = vpop.permute.xlu0 %975
      %977 = vrot.lane.b32.xlu0 %v507, 12
      %v978 = vpop.permute.xlu0 %977
      %979 = vrot.lane.b32.xlu0 %v508, 12
      %v980 = vpop.permute.xlu0 %979
      %v1014 = vrot.slane %v507, 1
      %v1015 = vrot.slane %v508, 1
      %v1016 = vsel %vm561, %v1014, %v1015
      %v1017 = vrot.slane %v509, 1
      %v1018 = vsel %vm561, %v1015, %v1017
      %1019 = vrot.lane.b32.xlu0 %v569, 16
      %v1020 = vpop.permute.xlu0 %1019
      %1021 = vrot.lane.b32.xlu0 %v571, 16
      %v1022 = vpop.permute.xlu0 %1021
      %1023 = vrot.lane.b32.xlu0 %v574, 16
      %v1024 = vpop.permute.xlu0 %1023
      %1025 = vrot.lane.b32.xlu0 %v576, 16
      %v1026 = vpop.permute.xlu0 %1025
      %1027 = vrot.lane.b32.xlu0 %v579, 16
      %v1028 = vpop.permute.xlu0 %1027
      %1029 = vrot.lane.b32.xlu0 %v581, 16
      %v1030 = vpop.permute.xlu0 %1029
      %1031 = vrot.lane.b32.xlu0 %v584, 16
      %v1032 = vpop.permute.xlu0 %1031
      %1033 = vrot.lane.b32.xlu0 %v586, 16
      %v1034 = vpop.permute.xlu0 %1033
      %1035 = vrot.lane.b32.xlu0 %v589, 16
      %v1036 = vpop.permute.xlu0 %1035
      %1037 = vrot.lane.b32.xlu0 %v591, 16
      %v1038 = vpop.permute.xlu0 %1037
      %1039 = vrot.lane.b32.xlu0 %v594, 16
      %v1040 = vpop.permute.xlu0 %1039
      %1041 = vrot.lane.b32.xlu0 %v596, 16
      %v1042 = vpop.permute.xlu0 %1041
      %1043 = vrot.lane.b32.xlu0 %v599, 16
      %v1044 = vpop.permute.xlu0 %1043
      %1045 = vrot.lane.b32.xlu0 %v601, 16
      %v1046 = vpop.permute.xlu0 %1045
      %1047 = vrot.lane.b32.xlu0 %v604, 16
      %v1048 = vpop.permute.xlu0 %1047
      %1049 = vrot.lane.b32.xlu0 %v606, 16
      %v1050 = vpop.permute.xlu0 %1049
      %1051 = vrot.lane.b32.xlu0 %v609, 16
      %v1052 = vpop.permute.xlu0 %1051
      %1053 = vrot.lane.b32.xlu0 %v611, 16
      %v1054 = vpop.permute.xlu0 %1053
      %1055 = vrot.lane.b32.xlu0 %v614, 16
      %v1056 = vpop.permute.xlu0 %1055
      %1057 = vrot.lane.b32.xlu0 %v616, 16
      %v1058 = vpop.permute.xlu0 %1057
      %1059 = vrot.lane.b32.xlu0 %v619, 16
      %v1060 = vpop.permute.xlu0 %1059
      %1061 = vrot.lane.b32.xlu0 %v621, 16
      %v1062 = vpop.permute.xlu0 %1061
      %1063 = vrot.lane.b32.xlu0 %v624, 16
      %v1064 = vpop.permute.xlu0 %1063
      %1065 = vrot.lane.b32.xlu0 %v626, 16
      %v1066 = vpop.permute.xlu0 %1065
      %1067 = vrot.lane.b32.xlu0 %v629, 16
      %v1068 = vpop.permute.xlu0 %1067
      %1069 = vrot.lane.b32.xlu0 %v631, 16
      %v1070 = vpop.permute.xlu0 %1069
      %1071 = vrot.lane.b32.xlu0 %v634, 16
      %v1072 = vpop.permute.xlu0 %1071
      %1073 = vrot.lane.b32.xlu0 %v636, 16
      %v1074 = vpop.permute.xlu0 %1073
      %1075 = vrot.lane.b32.xlu0 %v639, 16
      %v1076 = vpop.permute.xlu0 %1075
      %1077 = vrot.lane.b32.xlu0 %v641, 16
      %v1078 = vpop.permute.xlu0 %1077
      %1079 = vrot.lane.b32.xlu0 %v1016, 16
      %v1080 = vpop.permute.xlu0 %1079
      %1081 = vrot.lane.b32.xlu0 %v1018, 16
      %v1082 = vpop.permute.xlu0 %1081
      %v1115 = vrot.slane %v507, 2
      %v1116 = vrot.slane %v508, 2
      %v1117 = vsel %vm738, %v1115, %v1116
      %v1118 = vrot.slane %v509, 2
      %v1119 = vsel %vm738, %v1116, %v1118
      %1120 = vrot.lane.b32.xlu0 %v746, 20
      %v1121 = vpop.permute.xlu0 %1120
      %1122 = vrot.lane.b32.xlu0 %v748, 20
      %v1123 = vpop.permute.xlu0 %1122
      %1124 = vrot.lane.b32.xlu0 %v751, 20
      %v1125 = vpop.permute.xlu0 %1124
      %1126 = vrot.lane.b32.xlu0 %v753, 20
      %v1127 = vpop.permute.xlu0 %1126
      %1128 = vrot.lane.b32.xlu0 %v756, 20
      %v1129 = vpop.permute.xlu0 %1128
      %1130 = vrot.lane.b32.xlu0 %v758, 20
      %v1131 = vpop.permute.xlu0 %1130
      %1132 = vrot.lane.b32.xlu0 %v761, 20
      %v1133 = vpop.permute.xlu0 %1132
      %1134 = vrot.lane.b32.xlu0 %v763, 20
      %v1135 = vpop.permute.xlu0 %1134
      %1136 = vrot.lane.b32.xlu0 %v766, 20
      %v1137 = vpop.permute.xlu0 %1136
      %1138 = vrot.lane.b32.xlu0 %v768, 20
      %v1139 = vpop.permute.xlu0 %1138
      %1140 = vrot.lane.b32.xlu0 %v771, 20
      %v1141 = vpop.permute.xlu0 %1140
      %1142 = vrot.lane.b32.xlu0 %v773, 20
      %v1143 = vpop.permute.xlu0 %1142
      %1144 = vrot.lane.b32.xlu0 %v776, 20
      %v1145 = vpop.permute.xlu0 %1144
      %1146 = vrot.lane.b32.xlu0 %v778, 20
      %v1147 = vpop.permute.xlu0 %1146
      %1148 = vrot.lane.b32.xlu0 %v781, 20
      %v1149 = vpop.permute.xlu0 %1148
      %1150 = vrot.lane.b32.xlu0 %v783, 20
      %v1151 = vpop.permute.xlu0 %1150
      %1152 = vrot.lane.b32.xlu0 %v786, 20
      %v1153 = vpop.permute.xlu0 %1152
      %1154 = vrot.lane.b32.xlu0 %v788, 20
      %v1155 = vpop.permute.xlu0 %1154
      %1156 = vrot.lane.b32.xlu0 %v791, 20
      %v1157 = vpop.permute.xlu0 %1156
      %1158 = vrot.lane.b32.xlu0 %v793, 20
      %v1159 = vpop.permute.xlu0 %1158
      %1160 = vrot.lane.b32.xlu0 %v796, 20
      %v1161 = vpop.permute.xlu0 %1160
      %1162 = vrot.lane.b32.xlu0 %v798, 20
      %v1163 = vpop.permute.xlu0 %1162
      %1164 = vrot.lane.b32.xlu0 %v801, 20
      %v1165 = vpop.permute.xlu0 %1164
      %1166 = vrot.lane.b32.xlu0 %v803, 20
      %v1167 = vpop.permute.xlu0 %1166
      %1168 = vrot.lane.b32.xlu0 %v806, 20
      %v1169 = vpop.permute.xlu0 %1168
      %1170 = vrot.lane.b32.xlu0 %v808, 20
      %v1171 = vpop.permute.xlu0 %1170
      %1172 = vrot.lane.b32.xlu0 %v811, 20
      %v1173 = vpop.permute.xlu0 %1172
      %1174 = vrot.lane.b32.xlu0 %v813, 20
      %v1175 = vpop.permute.xlu0 %1174
      %1176 = vrot.lane.b32.xlu0 %v816, 20
      %v1177 = vpop.permute.xlu0 %1176
      %1178 = vrot.lane.b32.xlu0 %v818, 20
      %v1179 = vpop.permute.xlu0 %1178
      %1180 = vrot.lane.b32.xlu0 %v1117, 20
      %v1181 = vpop.permute.xlu0 %1180
      %1182 = vrot.lane.b32.xlu0 %v1119, 20
      %v1183 = vpop.permute.xlu0 %1182
      %1218 = vrot.lane.b32.xlu0 %v465, 24
      %v1219 = vpop.permute.xlu0 %1218
      %1220 = vrot.lane.b32.xlu0 %v466, 24
      %v1221 = vpop.permute.xlu0 %1220
      %1222 = vrot.lane.b32.xlu0 %v468, 24
      %v1223 = vpop.permute.xlu0 %1222
      %1224 = vrot.lane.b32.xlu0 %v469, 24
      %v1225 = vpop.permute.xlu0 %1224
      %1226 = vrot.lane.b32.xlu0 %v471, 24
      %v1227 = vpop.permute.xlu0 %1226
      %1228 = vrot.lane.b32.xlu0 %v472, 24
      %v1229 = vpop.permute.xlu0 %1228
      %1230 = vrot.lane.b32.xlu0 %v474, 24
      %v1231 = vpop.permute.xlu0 %1230
      %1232 = vrot.lane.b32.xlu0 %v475, 24
      %v1233 = vpop.permute.xlu0 %1232
      %1234 = vrot.lane.b32.xlu0 %v477, 24
      %v1235 = vpop.permute.xlu0 %1234
      %1236 = vrot.lane.b32.xlu0 %v478, 24
      %v1237 = vpop.permute.xlu0 %1236
      %1238 = vrot.lane.b32.xlu0 %v480, 24
      %v1239 = vpop.permute.xlu0 %1238
      %1240 = vrot.lane.b32.xlu0 %v481, 24
      %v1241 = vpop.permute.xlu0 %1240
      %1242 = vrot.lane.b32.xlu0 %v483, 24
      %v1243 = vpop.permute.xlu0 %1242
      %1244 = vrot.lane.b32.xlu0 %v484, 24
      %v1245 = vpop.permute.xlu0 %1244
      %1246 = vrot.lane.b32.xlu0 %v486, 24
      %v1247 = vpop.permute.xlu0 %1246
      %1248 = vrot.lane.b32.xlu0 %v487, 24
      %v1249 = vpop.permute.xlu0 %1248
      %1250 = vrot.lane.b32.xlu0 %v489, 24
      %v1251 = vpop.permute.xlu0 %1250
      %1252 = vrot.lane.b32.xlu0 %v490, 24
      %v1253 = vpop.permute.xlu0 %1252
      %1254 = vrot.lane.b32.xlu0 %v492, 24
      %v1255 = vpop.permute.xlu0 %1254
      %1256 = vrot.lane.b32.xlu0 %v493, 24
      %v1257 = vpop.permute.xlu0 %1256
      %1258 = vrot.lane.b32.xlu0 %v495, 24
      %v1259 = vpop.permute.xlu0 %1258
      %1260 = vrot.lane.b32.xlu0 %v496, 24
      %v1261 = vpop.permute.xlu0 %1260
      %1262 = vrot.lane.b32.xlu0 %v498, 24
      %v1263 = vpop.permute.xlu0 %1262
      %1264 = vrot.lane.b32.xlu0 %v499, 24
      %v1265 = vpop.permute.xlu0 %1264
      %1266 = vrot.lane.b32.xlu0 %v501, 24
      %v1267 = vpop.permute.xlu0 %1266
      %1268 = vrot.lane.b32.xlu0 %v502, 24
      %v1269 = vpop.permute.xlu0 %1268
      %1270 = vrot.lane.b32.xlu0 %v504, 24
      %v1271 = vpop.permute.xlu0 %1270
      %1272 = vrot.lane.b32.xlu0 %v505, 24
      %v1273 = vpop.permute.xlu0 %1272
      %1274 = vrot.lane.b32.xlu0 %v507, 24
      %v1275 = vpop.permute.xlu0 %1274
      %1276 = vrot.lane.b32.xlu0 %v508, 24
      %v1277 = vpop.permute.xlu0 %1276
      %1278 = vrot.lane.b32.xlu0 %v510, 24
      %v1279 = vpop.permute.xlu0 %1278
      %1280 = vrot.lane.b32.xlu0 %v511, 24
      %v1281 = vpop.permute.xlu0 %1280
      %v1315 = vrot.slane %v510, 1
      %v1316 = vrot.slane %v511, 1
      %v1317 = vsel %vm561, %v1315, %v1316
      %v1318 = vrot.slane %v512, 1
      %v1319 = vsel %vm561, %v1316, %v1318
      %1320 = vrot.lane.b32.xlu0 %v574, 28
      %v1321 = vpop.permute.xlu0 %1320
      %1322 = vrot.lane.b32.xlu0 %v576, 28
      %v1323 = vpop.permute.xlu0 %1322
      %1324 = vrot.lane.b32.xlu0 %v579, 28
      %v1325 = vpop.permute.xlu0 %1324
      %1326 = vrot.lane.b32.xlu0 %v581, 28
      %v1327 = vpop.permute.xlu0 %1326
      %1328 = vrot.lane.b32.xlu0 %v584, 28
      %v1329 = vpop.permute.xlu0 %1328
      %1330 = vrot.lane.b32.xlu0 %v586, 28
      %v1331 = vpop.permute.xlu0 %1330
      %1332 = vrot.lane.b32.xlu0 %v589, 28
      %v1333 = vpop.permute.xlu0 %1332
      %1334 = vrot.lane.b32.xlu0 %v591, 28
      %v1335 = vpop.permute.xlu0 %1334
      %1336 = vrot.lane.b32.xlu0 %v594, 28
      %v1337 = vpop.permute.xlu0 %1336
      %1338 = vrot.lane.b32.xlu0 %v596, 28
      %v1339 = vpop.permute.xlu0 %1338
      %1340 = vrot.lane.b32.xlu0 %v599, 28
      %v1341 = vpop.permute.xlu0 %1340
      %1342 = vrot.lane.b32.xlu0 %v601, 28
      %v1343 = vpop.permute.xlu0 %1342
      %1344 = vrot.lane.b32.xlu0 %v604, 28
      %v1345 = vpop.permute.xlu0 %1344
      %1346 = vrot.lane.b32.xlu0 %v606, 28
      %v1347 = vpop.permute.xlu0 %1346
      %1348 = vrot.lane.b32.xlu0 %v609, 28
      %v1349 = vpop.permute.xlu0 %1348
      %1350 = vrot.lane.b32.xlu0 %v611, 28
      %v1351 = vpop.permute.xlu0 %1350
      %1352 = vrot.lane.b32.xlu0 %v614, 28
      %v1353 = vpop.permute.xlu0 %1352
      %1354 = vrot.lane.b32.xlu0 %v616, 28
      %v1355 = vpop.permute.xlu0 %1354
      %1356 = vrot.lane.b32.xlu0 %v619, 28
      %v1357 = vpop.permute.xlu0 %1356
      %1358 = vrot.lane.b32.xlu0 %v621, 28
      %v1359 = vpop.permute.xlu0 %1358
      %1360 = vrot.lane.b32.xlu0 %v624, 28
      %v1361 = vpop.permute.xlu0 %1360
      %1362 = vrot.lane.b32.xlu0 %v626, 28
      %v1363 = vpop.permute.xlu0 %1362
      %1364 = vrot.lane.b32.xlu0 %v629, 28
      %v1365 = vpop.permute.xlu0 %1364
      %1366 = vrot.lane.b32.xlu0 %v631, 28
      %v1367 = vpop.permute.xlu0 %1366
      %1368 = vrot.lane.b32.xlu0 %v634, 28
      %v1369 = vpop.permute.xlu0 %1368
      %1370 = vrot.lane.b32.xlu0 %v636, 28
      %v1371 = vpop.permute.xlu0 %1370
      %1372 = vrot.lane.b32.xlu0 %v639, 28
      %v1373 = vpop.permute.xlu0 %1372
      %1374 = vrot.lane.b32.xlu0 %v641, 28
      %v1375 = vpop.permute.xlu0 %1374
      %1376 = vrot.lane.b32.xlu0 %v1016, 28
      %v1377 = vpop.permute.xlu0 %1376
      %1378 = vrot.lane.b32.xlu0 %v1018, 28
      %v1379 = vpop.permute.xlu0 %1378
      %1380 = vrot.lane.b32.xlu0 %v1317, 28
      %v1381 = vpop.permute.xlu0 %1380
      %1382 = vrot.lane.b32.xlu0 %v1319, 28
      %v1383 = vpop.permute.xlu0 %1382
      %v1416 = vrot.slane %v510, 2
      %v1417 = vrot.slane %v511, 2
      %v1418 = vsel %vm738, %v1416, %v1417
      %v1419 = vrot.slane %v512, 2
      %v1420 = vsel %vm738, %v1417, %v1419
      %1421 = vrot.lane.b32.xlu0 %v751, 32
      %v1422 = vpop.permute.xlu0 %1421
      %1423 = vrot.lane.b32.xlu0 %v753, 32
      %v1424 = vpop.permute.xlu0 %1423
      %1425 = vrot.lane.b32.xlu0 %v756, 32
      %v1426 = vpop.permute.xlu0 %1425
      %1427 = vrot.lane.b32.xlu0 %v758, 32
      %v1428 = vpop.permute.xlu0 %1427
      %1429 = vrot.lane.b32.xlu0 %v761, 32
      %v1430 = vpop.permute.xlu0 %1429
      %1431 = vrot.lane.b32.xlu0 %v763, 32
      %v1432 = vpop.permute.xlu0 %1431
      %1433 = vrot.lane.b32.xlu0 %v766, 32
      %v1434 = vpop.permute.xlu0 %1433
      %1435 = vrot.lane.b32.xlu0 %v768, 32
      %v1436 = vpop.permute.xlu0 %1435
      %1437 = vrot.lane.b32.xlu0 %v771, 32
      %v1438 = vpop.permute.xlu0 %1437
      %1439 = vrot.lane.b32.xlu0 %v773, 32
      %v1440 = vpop.permute.xlu0 %1439
      %1441 = vrot.lane.b32.xlu0 %v776, 32
      %v1442 = vpop.permute.xlu0 %1441
      %1443 = vrot.lane.b32.xlu0 %v778, 32
      %v1444 = vpop.permute.xlu0 %1443
      %1445 = vrot.lane.b32.xlu0 %v781, 32
      %v1446 = vpop.permute.xlu0 %1445
      %1447 = vrot.lane.b32.xlu0 %v783, 32
      %v1448 = vpop.permute.xlu0 %1447
      %1449 = vrot.lane.b32.xlu0 %v786, 32
      %v1450 = vpop.permute.xlu0 %1449
      %1451 = vrot.lane.b32.xlu0 %v788, 32
      %v1452 = vpop.permute.xlu0 %1451
      %1453 = vrot.lane.b32.xlu0 %v791, 32
      %v1454 = vpop.permute.xlu0 %1453
      %1455 = vrot.lane.b32.xlu0 %v793, 32
      %v1456 = vpop.permute.xlu0 %1455
      %1457 = vrot.lane.b32.xlu0 %v796, 32
      %v1458 = vpop.permute.xlu0 %1457
      %1459 = vrot.lane.b32.xlu0 %v798, 32
      %v1460 = vpop.permute.xlu0 %1459
      %1461 = vrot.lane.b32.xlu0 %v801, 32
      %v1462 = vpop.permute.xlu0 %1461
      %1463 = vrot.lane.b32.xlu0 %v803, 32
      %v1464 = vpop.permute.xlu0 %1463
      %1465 = vrot.lane.b32.xlu0 %v806, 32
      %v1466 = vpop.permute.xlu0 %1465
      %1467 = vrot.lane.b32.xlu0 %v808, 32
      %v1468 = vpop.permute.xlu0 %1467
      %1469 = vrot.lane.b32.xlu0 %v811, 32
      %v1470 = vpop.permute.xlu0 %1469
      %1471 = vrot.lane.b32.xlu0 %v813, 32
      %v1472 = vpop.permute.xlu0 %1471
      %1473 = vrot.lane.b32.xlu0 %v816, 32
      %v1474 = vpop.permute.xlu0 %1473
      %1475 = vrot.lane.b32.xlu0 %v818, 32
      %v1476 = vpop.permute.xlu0 %1475
      %1477 = vrot.lane.b32.xlu0 %v1117, 32
      %v1478 = vpop.permute.xlu0 %1477
      %1479 = vrot.lane.b32.xlu0 %v1119, 32
      %v1480 = vpop.permute.xlu0 %1479
      %1481 = vrot.lane.b32.xlu0 %v1418, 32
      %v1482 = vpop.permute.xlu0 %1481
      %1483 = vrot.lane.b32.xlu0 %v1420, 32
      %v1484 = vpop.permute.xlu0 %1483
      %v1517 = vsel %vm426, %v459, %v643
      %v1518 = vsel %vm426, %v460, %v645
      %v1519 = vsel %vm426, %v462, %v647
      %v1520 = vsel %vm426, %v463, %v649
      %v1521 = vsel %vm426, %v465, %v651
      %v1522 = vsel %vm426, %v466, %v653
      %v1523 = vsel %vm426, %v468, %v655
      %v1524 = vsel %vm426, %v469, %v657
      %v1525 = vsel %vm426, %v471, %v659
      %v1526 = vsel %vm426, %v472, %v661
      %v1527 = vsel %vm426, %v474, %v663
      %v1528 = vsel %vm426, %v475, %v665
      %v1529 = vsel %vm426, %v477, %v667
      %v1530 = vsel %vm426, %v478, %v669
      %v1531 = vsel %vm426, %v480, %v671
      %v1532 = vsel %vm426, %v481, %v673
      %v1533 = vsel %vm426, %v483, %v675
      %v1534 = vsel %vm426, %v484, %v677
      %v1535 = vsel %vm426, %v486, %v679
      %v1536 = vsel %vm426, %v487, %v681
      %v1537 = vsel %vm426, %v489, %v683
      %v1538 = vsel %vm426, %v490, %v685
      %v1539 = vsel %vm426, %v492, %v687
      %v1540 = vsel %vm426, %v493, %v689
      %v1541 = vsel %vm426, %v495, %v691
      %v1542 = vsel %vm426, %v496, %v693
      %v1543 = vsel %vm426, %v498, %v695
      %v1544 = vsel %vm426, %v499, %v697
      %v1545 = vsel %vm426, %v501, %v699
      %v1546 = vsel %vm426, %v502, %v701
      %v1547 = vsel %vm426, %v504, %v703
      %v1548 = vsel %vm426, %v505, %v705
      %vm1549 = vcmask 64512
      %v1550 = vsel %vm1549, %v1517, %v820
      %v1551 = vsel %vm1549, %v1518, %v822
      %v1552 = vsel %vm1549, %v1519, %v824
      %v1553 = vsel %vm1549, %v1520, %v826
      %v1554 = vsel %vm1549, %v1521, %v828
      %v1555 = vsel %vm1549, %v1522, %v830
      %v1556 = vsel %vm1549, %v1523, %v832
      %v1557 = vsel %vm1549, %v1524, %v834
      %v1558 = vsel %vm1549, %v1525, %v836
      %v1559 = vsel %vm1549, %v1526, %v838
      %v1560 = vsel %vm1549, %v1527, %v840
      %v1561 = vsel %vm1549, %v1528, %v842
      %v1562 = vsel %vm1549, %v1529, %v844
      %v1563 = vsel %vm1549, %v1530, %v846
      %v1564 = vsel %vm1549, %v1531, %v848
      %v1565 = vsel %vm1549, %v1532, %v850
      %v1566 = vsel %vm1549, %v1533, %v852
      %v1567 = vsel %vm1549, %v1534, %v854
      %v1568 = vsel %vm1549, %v1535, %v856
      %v1569 = vsel %vm1549, %v1536, %v858
      %v1570 = vsel %vm1549, %v1537, %v860
      %v1571 = vsel %vm1549, %v1538, %v862
      %v1572 = vsel %vm1549, %v1539, %v864
      %v1573 = vsel %vm1549, %v1540, %v866
      %v1574 = vsel %vm1549, %v1541, %v868
      %v1575 = vsel %vm1549, %v1542, %v870
      %v1576 = vsel %vm1549, %v1543, %v872
      %v1577 = vsel %vm1549, %v1544, %v874
      %v1578 = vsel %vm1549, %v1545, %v876
      %v1579 = vsel %vm1549, %v1546, %v878
      %v1580 = vsel %vm1549, %v1547, %v880
      %v1581 = vsel %vm1549, %v1548, %v882
      %vm1582 = vcmask 97280
      %v1583 = vsel %vm1582, %v1550, %v918
      %v1584 = vsel %vm1582, %v1551, %v920
      %v1585 = vsel %vm1582, %v1552, %v922
      %v1586 = vsel %vm1582, %v1553, %v924
      %v1587 = vsel %vm1582, %v1554, %v926
      %v1588 = vsel %vm1582, %v1555, %v928
      %v1589 = vsel %vm1582, %v1556, %v930
      %v1590 = vsel %vm1582, %v1557, %v932
      %v1591 = vsel %vm1582, %v1558, %v934
      %v1592 = vsel %vm1582, %v1559, %v936
      %v1593 = vsel %vm1582, %v1560, %v938
      %v1594 = vsel %vm1582, %v1561, %v940
      %v1595 = vsel %vm1582, %v1562, %v942
      %v1596 = vsel %vm1582, %v1563, %v944
      %v1597 = vsel %vm1582, %v1564, %v946
      %v1598 = vsel %vm1582, %v1565, %v948
      %v1599 = vsel %vm1582, %v1566, %v950
      %v1600 = vsel %vm1582, %v1567, %v952
      %v1601 = vsel %vm1582, %v1568, %v954
      %v1602 = vsel %vm1582, %v1569, %v956
      %v1603 = vsel %vm1582, %v1570, %v958
      %v1604 = vsel %vm1582, %v1571, %v960
      %v1605 = vsel %vm1582, %v1572, %v962
      %v1606 = vsel %vm1582, %v1573, %v964
      %v1607 = vsel %vm1582, %v1574, %v966
      %v1608 = vsel %vm1582, %v1575, %v968
      %v1609 = vsel %vm1582, %v1576, %v970
      %v1610 = vsel %vm1582, %v1577, %v972
      %v1611 = vsel %vm1582, %v1578, %v974
      %v1612 = vsel %vm1582, %v1579, %v976
      %v1613 = vsel %vm1582, %v1580, %v978
      %v1614 = vsel %vm1582, %v1581, %v980
      %vm1615 = vcmask 130048
      %v1616 = vsel %vm1615, %v1583, %v1020
      %v1617 = vsel %vm1615, %v1584, %v1022
      %v1618 = vsel %vm1615, %v1585, %v1024
      %v1619 = vsel %vm1615, %v1586, %v1026
      %v1620 = vsel %vm1615, %v1587, %v1028
      %v1621 = vsel %vm1615, %v1588, %v1030
      %v1622 = vsel %vm1615, %v1589, %v1032
      %v1623 = vsel %vm1615, %v1590, %v1034
      %v1624 = vsel %vm1615, %v1591, %v1036
      %v1625 = vsel %vm1615, %v1592, %v1038
      %v1626 = vsel %vm1615, %v1593, %v1040
      %v1627 = vsel %vm1615, %v1594, %v1042
      %v1628 = vsel %vm1615, %v1595, %v1044
      %v1629 = vsel %vm1615, %v1596, %v1046
      %v1630 = vsel %vm1615, %v1597, %v1048
      %v1631 = vsel %vm1615, %v1598, %v1050
      %v1632 = vsel %vm1615, %v1599, %v1052
      %v1633 = vsel %vm1615, %v1600, %v1054
      %v1634 = vsel %vm1615, %v1601, %v1056
      %v1635 = vsel %vm1615, %v1602, %v1058
      %v1636 = vsel %vm1615, %v1603, %v1060
      %v1637 = vsel %vm1615, %v1604, %v1062
      %v1638 = vsel %vm1615, %v1605, %v1064
      %v1639 = vsel %vm1615, %v1606, %v1066
      %v1640 = vsel %vm1615, %v1607, %v1068
      %v1641 = vsel %vm1615, %v1608, %v1070
      %v1642 = vsel %vm1615, %v1609, %v1072
      %v1643 = vsel %vm1615, %v1610, %v1074
      %v1644 = vsel %vm1615, %v1611, %v1076
      %v1645 = vsel %vm1615, %v1612, %v1078
      %v1646 = vsel %vm1615, %v1613, %v1080
      %v1647 = vsel %vm1615, %v1614, %v1082
      %vm1648 = vcmask 162816
      %v1649 = vsel %vm1648, %v1616, %v1121
      %v1650 = vsel %vm1648, %v1617, %v1123
      %v1651 = vsel %vm1648, %v1618, %v1125
      %v1652 = vsel %vm1648, %v1619, %v1127
      %v1653 = vsel %vm1648, %v1620, %v1129
      %v1654 = vsel %vm1648, %v1621, %v1131
      %v1655 = vsel %vm1648, %v1622, %v1133
      %v1656 = vsel %vm1648, %v1623, %v1135
      %v1657 = vsel %vm1648, %v1624, %v1137
      %v1658 = vsel %vm1648, %v1625, %v1139
      %v1659 = vsel %vm1648, %v1626, %v1141
      %v1660 = vsel %vm1648, %v1627, %v1143
      %v1661 = vsel %vm1648, %v1628, %v1145
      %v1662 = vsel %vm1648, %v1629, %v1147
      %v1663 = vsel %vm1648, %v1630, %v1149
      %v1664 = vsel %vm1648, %v1631, %v1151
      %v1665 = vsel %vm1648, %v1632, %v1153
      %v1666 = vsel %vm1648, %v1633, %v1155
      %v1667 = vsel %vm1648, %v1634, %v1157
      %v1668 = vsel %vm1648, %v1635, %v1159
      %v1669 = vsel %vm1648, %v1636, %v1161
      %v1670 = vsel %vm1648, %v1637, %v1163
      %v1671 = vsel %vm1648, %v1638, %v1165
      %v1672 = vsel %vm1648, %v1639, %v1167
      %v1673 = vsel %vm1648, %v1640, %v1169
      %v1674 = vsel %vm1648, %v1641, %v1171
      %v1675 = vsel %vm1648, %v1642, %v1173
      %v1676 = vsel %vm1648, %v1643, %v1175
      %v1677 = vsel %vm1648, %v1644, %v1177
      %v1678 = vsel %vm1648, %v1645, %v1179
      %v1679 = vsel %vm1648, %v1646, %v1181
      %v1680 = vsel %vm1648, %v1647, %v1183
      %vm1681 = vcmask 195584
      %v1682 = vsel %vm1681, %v1649, %v1219
      %v1683 = vsel %vm1681, %v1650, %v1221
      %v1684 = vsel %vm1681, %v1651, %v1223
      %v1685 = vsel %vm1681, %v1652, %v1225
      %v1686 = vsel %vm1681, %v1653, %v1227
      %v1687 = vsel %vm1681, %v1654, %v1229
      %v1688 = vsel %vm1681, %v1655, %v1231
      %v1689 = vsel %vm1681, %v1656, %v1233
      %v1690 = vsel %vm1681, %v1657, %v1235
      %v1691 = vsel %vm1681, %v1658, %v1237
      %v1692 = vsel %vm1681, %v1659, %v1239
      %v1693 = vsel %vm1681, %v1660, %v1241
      %v1694 = vsel %vm1681, %v1661, %v1243
      %v1695 = vsel %vm1681, %v1662, %v1245
      %v1696 = vsel %vm1681, %v1663, %v1247
      %v1697 = vsel %vm1681, %v1664, %v1249
      %v1698 = vsel %vm1681, %v1665, %v1251
      %v1699 = vsel %vm1681, %v1666, %v1253
      %v1700 = vsel %vm1681, %v1667, %v1255
      %v1701 = vsel %vm1681, %v1668, %v1257
      %v1702 = vsel %vm1681, %v1669, %v1259
      %v1703 = vsel %vm1681, %v1670, %v1261
      %v1704 = vsel %vm1681, %v1671, %v1263
      %v1705 = vsel %vm1681, %v1672, %v1265
      %v1706 = vsel %vm1681, %v1673, %v1267
      %v1707 = vsel %vm1681, %v1674, %v1269
      %v1708 = vsel %vm1681, %v1675, %v1271
      %v1709 = vsel %vm1681, %v1676, %v1273
      %v1710 = vsel %vm1681, %v1677, %v1275
      %v1711 = vsel %vm1681, %v1678, %v1277
      %v1712 = vsel %vm1681, %v1679, %v1279
      %v1713 = vsel %vm1681, %v1680, %v1281
      %vm1714 = vcmask 228352
      %v1715 = vsel %vm1714, %v1682, %v1321
      %v1716 = vsel %vm1714, %v1683, %v1323
      %v1717 = vsel %vm1714, %v1684, %v1325
      %v1718 = vsel %vm1714, %v1685, %v1327
      %v1719 = vsel %vm1714, %v1686, %v1329
      %v1720 = vsel %vm1714, %v1687, %v1331
      %v1721 = vsel %vm1714, %v1688, %v1333
      %v1722 = vsel %vm1714, %v1689, %v1335
      %v1723 = vsel %vm1714, %v1690, %v1337
      %v1724 = vsel %vm1714, %v1691, %v1339
      %v1725 = vsel %vm1714, %v1692, %v1341
      %v1726 = vsel %vm1714, %v1693, %v1343
      %v1727 = vsel %vm1714, %v1694, %v1345
      %v1728 = vsel %vm1714, %v1695, %v1347
      %v1729 = vsel %vm1714, %v1696, %v1349
      %v1730 = vsel %vm1714, %v1697, %v1351
      %v1731 = vsel %vm1714, %v1698, %v1353
      %v1732 = vsel %vm1714, %v1699, %v1355
      %v1733 = vsel %vm1714, %v1700, %v1357
      %v1734 = vsel %vm1714, %v1701, %v1359
      %v1735 = vsel %vm1714, %v1702, %v1361
      %v1736 = vsel %vm1714, %v1703, %v1363
      %v1737 = vsel %vm1714, %v1704, %v1365
      %v1738 = vsel %vm1714, %v1705, %v1367
      %v1739 = vsel %vm1714, %v1706, %v1369
      %v1740 = vsel %vm1714, %v1707, %v1371
      %v1741 = vsel %vm1714, %v1708, %v1373
      %v1742 = vsel %vm1714, %v1709, %v1375
      %v1743 = vsel %vm1714, %v1710, %v1377
      %v1744 = vsel %vm1714, %v1711, %v1379
      %v1745 = vsel %vm1714, %v1712, %v1381
      %v1746 = vsel %vm1714, %v1713, %v1383
      %vm1747 = vcmask 261120
      %v1748 = vsel %vm1747, %v1715, %v1422
      %v1749 = vsel %vm1747, %v1716, %v1424
      %v1750 = vsel %vm1747, %v1717, %v1426
      %v1751 = vsel %vm1747, %v1718, %v1428
      %v1752 = vsel %vm1747, %v1719, %v1430
      %v1753 = vsel %vm1747, %v1720, %v1432
      %v1754 = vsel %vm1747, %v1721, %v1434
      %v1755 = vsel %vm1747, %v1722, %v1436
      %v1756 = vsel %vm1747, %v1723, %v1438
      %v1757 = vsel %vm1747, %v1724, %v1440
      %v1758 = vsel %vm1747, %v1725, %v1442
      %v1759 = vsel %vm1747, %v1726, %v1444
      %v1760 = vsel %vm1747, %v1727, %v1446
      %v1761 = vsel %vm1747, %v1728, %v1448
      %v1762 = vsel %vm1747, %v1729, %v1450
      %v1763 = vsel %vm1747, %v1730, %v1452
      %v1764 = vsel %vm1747, %v1731, %v1454
      %v1765 = vsel %vm1747, %v1732, %v1456
      %v1766 = vsel %vm1747, %v1733, %v1458
      %v1767 = vsel %vm1747, %v1734, %v1460
      %v1768 = vsel %vm1747, %v1735, %v1462
      %v1769 = vsel %vm1747, %v1736, %v1464
      %v1770 = vsel %vm1747, %v1737, %v1466
      %v1771 = vsel %vm1747, %v1738, %v1468
      %v1772 = vsel %vm1747, %v1739, %v1470
      %v1773 = vsel %vm1747, %v1740, %v1472
      %v1774 = vsel %vm1747, %v1741, %v1474
      %v1775 = vsel %vm1747, %v1742, %v1476
      %v1776 = vsel %vm1747, %v1743, %v1478
      %v1777 = vsel %vm1747, %v1744, %v1480
      %v1778 = vsel %vm1747, %v1745, %v1482
      %v1779 = vsel %vm1747, %v1746, %v1484
      %v1780 = vld [vmem:[%s3] sm:$0xff]
      %v1781 = vld [vmem:[%s3 + $0x8] sm:$0xff]
      %v1782 = vld [vmem:[%s3 + $0x10] sm:$0xff]
      %v1783 = vld [vmem:[%s3 + $0x18] sm:$0xff]
      %v1784 = vld [vmem:[%s3 + $0x20] sm:$0xf]
      %vm1785 = vcmask 293888
      %v1787 = vsel %vm1785, %v1748, 0
      %v1790 = vsel %vm1785, %v1749, 0
      %v1793 = vsel %vm1785, %v1750, 0
      %v1796 = vsel %vm1785, %v1751, 0
      %v1799 = vsel %vm1785, %v1752, 0
      %v1802 = vsel %vm1785, %v1753, 0
      %v1805 = vsel %vm1785, %v1754, 0
      %v1808 = vsel %vm1785, %v1755, 0
      %v1811 = vsel %vm1785, %v1756, 0
      %v1814 = vsel %vm1785, %v1757, 0
      %v1817 = vsel %vm1785, %v1758, 0
      %v1820 = vsel %vm1785, %v1759, 0
      %v1823 = vsel %vm1785, %v1760, 0
      %v1826 = vsel %vm1785, %v1761, 0
      %v1829 = vsel %vm1785, %v1762, 0
      %v1832 = vsel %vm1785, %v1763, 0
      %v1835 = vsel %vm1785, %v1764, 0
      %v1838 = vsel %vm1785, %v1765, 0
      %v1841 = vsel %vm1785, %v1766, 0
      %v1844 = vsel %vm1785, %v1767, 0
      %v1847 = vsel %vm1785, %v1768, 0
      %v1850 = vsel %vm1785, %v1769, 0
      %v1853 = vsel %vm1785, %v1770, 0
      %v1856 = vsel %vm1785, %v1771, 0
      %v1859 = vsel %vm1785, %v1772, 0
      %v1862 = vsel %vm1785, %v1773, 0
      %v1865 = vsel %vm1785, %v1774, 0
      %v1868 = vsel %vm1785, %v1775, 0
      %v1871 = vsel %vm1785, %v1776, 0
      %v1874 = vsel %vm1785, %v1777, 0
      %v1877 = vsel %vm1785, %v1778, 0
      %v1880 = vsel %vm1785, %v1779, 0
      %vm1882 = vcmask 1043456
      %v1884 = vsel %vm1882, %v1784, 0
      %1886 = vmatprep.subr.mxu0 0.0
      %1887 = vmatpush1.msra.mxu0 %v1780
      %1888 = vmatprep.subr.mxu0 0.0
      %1889 = vmatpush1.msra.mxu0 %v1781
      %1890 = vmatprep.subr.mxu0 0.0
      %1891 = vmatpush1.msra.mxu0 %v1782
      %1892 = vmatprep.subr.mxu0 0.0
      %1893 = vmatpush1.msra.mxu0 %v1783
      %1894 = vmatprep.subr.mxu0 0.0
      %1895 = vmatpush1.msra.mxu0 %v1884
      %1896 = vmatprep.subr.mxu0 0.0
      %1897 = vmatpush1.msra.mxu0 0.0
      %1898 = vmatprep.subr.mxu0 0.0
      %1899 = vmatpush1.msra.mxu0 0.0
      %1900 = vmatprep.subr.mxu0 0.0
      %1901 = vmatpush1.msra.mxu0 0.0
      %1902 = vmatprep.subr.mxu0 0.0
      %1903 = vmatpush1.msra.mxu0 0.0
      %1904 = vmatprep.subr.mxu0 0.0
      %1905 = vmatpush1.msra.mxu0 0.0
      %1906 = vmatprep.subr.mxu0 0.0
      %1907 = vmatpush1.msra.mxu0 0.0
      %1908 = vmatprep.subr.mxu0 0.0
      %1909 = vmatpush1.msra.mxu0 0.0
      %1910 = vmatprep.subr.mxu0 0.0
      %1911 = vmatpush1.msra.mxu0 0.0
      %1912 = vmatprep.subr.mxu0 0.0
      %1913 = vmatpush1.msra.mxu0 0.0
      %1914 = vmatprep.subr.mxu0 0.0
      %1915 = vmatpush1.msra.mxu0 0.0
      %1916 = vmatprep.subr.mxu0 0.0
      %1917 = vmatpush1.msra.mxu0 0.0
      %1918 = vmatprep.subr.mxu0 0.0
      %1919 = vmatpush1.msra.mxu0 0.0
      %1920 = vmatprep.subr.mxu0 0.0
      %1921 = vmatpush1.msra.mxu0 0.0
      %1922 = vmatprep.subr.mxu0 0.0
      %1923 = vmatpush1.msra.mxu0 0.0
      %1924 = vmatprep.subr.mxu0 0.0
      %1925 = vmatpush1.msra.mxu0 0.0
      %1926 = vmatprep.subr.mxu0 0.0
      %1927 = vmatpush1.msra.mxu0 0.0
      %1928 = vmatprep.subr.mxu0 0.0
      %1929 = vmatpush1.msra.mxu0 0.0
      %1930 = vmatprep.subr.mxu0 0.0
      %1931 = vmatpush1.msra.mxu0 0.0
      %1932 = vmatprep.subr.mxu0 0.0
      %1933 = vmatpush1.msra.mxu0 0.0
      %1934 = vmatprep.subr.mxu0 0.0
      %1935 = vmatpush1.msra.mxu0 0.0
      %1936 = vmatprep.subr.mxu0 0.0
      %1937 = vmatpush1.msra.mxu0 0.0
      %1938 = vmatprep.subr.mxu0 0.0
      %1939 = vmatpush1.msra.mxu0 0.0
      %1940 = vmatprep.subr.mxu0 0.0
      %1941 = vmatpush1.msra.mxu0 0.0
      %1942 = vmatprep.subr.mxu0 0.0
      %1943 = vmatpush1.msra.mxu0 0.0
      %1944 = vmatprep.subr.mxu0 0.0
      %1945 = vmatpush1.msra.mxu0 0.0
      %1946 = vmatprep.subr.mxu0 0.0
      %1947 = vmatpush1.msra.mxu0 0.0
      %1948 = vmatprep.subr.mxu0 0.0
      %1949 = vmatpush1.msra.mxu0 0.0
      %1950 = vmatprep.mubr.f32.mxu0 0.0
      %1951 = vmatmul.mubr.f32.gmra.mrb[0].mxu0 %v1787
      %v1952 = vpop.f32.mrb[0].mxu0
      %v1953 = vadd.f32 0.0, %v1952
      %v1954 = vpop.f32.mrb[0].mxu0
      %1955 = vmatprep.mubr.f32.mxu0 0.0
      %1956 = vmatmul.mubr.f32.gmra.mrb[0].mxu0 %v1790
      %v1957 = vpop.f32.mrb[0].mxu0
      %v1958 = vadd.f32 0.0, %v1957
      %v1959 = vpop.f32.mrb[0].mxu0
      %1960 = vmatprep.mubr.f32.mxu0 0.0
      %1961 = vmatmul.mubr.f32.gmra.mrb[0].mxu0 %v1793
      %v1962 = vpop.f32.mrb[0].mxu0
      %v1963 = vadd.f32 0.0, %v1962
      %v1964 = vpop.f32.mrb[0].mxu0
      %1965 = vmatprep.mubr.f32.mxu0 0.0
      %1966 = vmatmul.mubr.f32.gmra.mrb[0].mxu0 %v1796
      %v1967 = vpop.f32.mrb[0].mxu0
      %v1968 = vadd.f32 0.0, %v1967
      %v1969 = vpop.f32.mrb[0].mxu0
      %1970 = vmatprep.mubr.f32.mxu0 0.0
      %1971 = vmatmul.mubr.f32.gmra.mrb[0].mxu0 %v1799
      %v1972 = vpop.f32.mrb[0].mxu0
      %v1973 = vadd.f32 0.0, %v1972
      %v1974 = vpop.f32.mrb[0].mxu0
      %1975 = vmatprep.mubr.f32.mxu0 0.0
      %1976 = vmatmul.mubr.f32.gmra.mrb[0].mxu0 %v1802
      %v1977 = vpop.f32.mrb[0].mxu0
      %v1978 = vadd.f32 0.0, %v1977
      %v1979 = vpop.f32.mrb[0].mxu0
      %1980 = vmatprep.mubr.f32.mxu0 0.0
      %1981 = vmatmul.mubr.f32.gmra.mrb[0].mxu0 %v1805
      %v1982 = vpop.f32.mrb[0].mxu0
      %v1983 = vadd.f32 0.0, %v1982
      %v1984 = vpop.f32.mrb[0].mxu0
      %1985 = vmatprep.mubr.f32.mxu0 0.0
      %1986 = vmatmul.mubr.f32.gmra.mrb[0].mxu0 %v1808
      %v1987 = vpop.f32.mrb[0].mxu0
      %v1988 = vadd.f32 0.0, %v1987
      %v1989 = vpop.f32.mrb[0].mxu0
      %1990 = vmatprep.mubr.f32.mxu0 0.0
      %1991 = vmatmul.mubr.f32.gmra.mrb[0].mxu0 %v1811
      %v1992 = vpop.f32.mrb[0].mxu0
      %v1993 = vadd.f32 0.0, %v1992
      %v1994 = vpop.f32.mrb[0].mxu0
      %1995 = vmatprep.mubr.f32.mxu0 0.0
      %1996 = vmatmul.mubr.f32.gmra.mrb[0].mxu0 %v1814
      %v1997 = vpop.f32.mrb[0].mxu0
      %v1998 = vadd.f32 0.0, %v1997
      %v1999 = vpop.f32.mrb[0].mxu0
      %2000 = vmatprep.mubr.f32.mxu0 0.0
      %2001 = vmatmul.mubr.f32.gmra.mrb[0].mxu0 %v1817
      %v2002 = vpop.f32.mrb[0].mxu0
      %v2003 = vadd.f32 0.0, %v2002
      %v2004 = vpop.f32.mrb[0].mxu0
      %2005 = vmatprep.mubr.f32.mxu0 0.0
      %2006 = vmatmul.mubr.f32.gmra.mrb[0].mxu0 %v1820
      %v2007 = vpop.f32.mrb[0].mxu0
      %v2008 = vadd.f32 0.0, %v2007
      %v2009 = vpop.f32.mrb[0].mxu0
      %2010 = vmatprep.mubr.f32.mxu0 0.0
      %2011 = vmatmul.mubr.f32.gmra.mrb[0].mxu0 %v1823
      %v2012 = vpop.f32.mrb[0].mxu0
      %v2013 = vadd.f32 0.0, %v2012
      %v2014 = vpop.f32.mrb[0].mxu0
      %2015 = vmatprep.mubr.f32.mxu0 0.0
      %2016 = vmatmul.mubr.f32.gmra.mrb[0].mxu0 %v1826
      %v2017 = vpop.f32.mrb[0].mxu0
      %v2018 = vadd.f32 0.0, %v2017
      %v2019 = vpop.f32.mrb[0].mxu0
      %2020 = vmatprep.mubr.f32.mxu0 0.0
      %2021 = vmatmul.mubr.f32.gmra.mrb[0].mxu0 %v1829
      %v2022 = vpop.f32.mrb[0].mxu0
      %v2023 = vadd.f32 0.0, %v2022
      %v2024 = vpop.f32.mrb[0].mxu0
      %2025 = vmatprep.mubr.f32.mxu0 0.0
      %2026 = vmatmul.mubr.f32.gmra.mrb[0].mxu0 %v1832
      %v2027 = vpop.f32.mrb[0].mxu0
      %v2028 = vadd.f32 0.0, %v2027
      %v2029 = vpop.f32.mrb[0].mxu0
      %2030 = vmatprep.mubr.f32.mxu0 0.0
      %2031 = vmatmul.mubr.f32.gmra.mrb[0].mxu0 %v1835
      %v2032 = vpop.f32.mrb[0].mxu0
      %v2033 = vadd.f32 0.0, %v2032
      %v2034 = vpop.f32.mrb[0].mxu0
      %2035 = vmatprep.mubr.f32.mxu0 0.0
      %2036 = vmatmul.mubr.f32.gmra.mrb[0].mxu0 %v1838
      %v2037 = vpop.f32.mrb[0].mxu0
      %v2038 = vadd.f32 0.0, %v2037
      %v2039 = vpop.f32.mrb[0].mxu0
      %2040 = vmatprep.mubr.f32.mxu0 0.0
      %2041 = vmatmul.mubr.f32.gmra.mrb[0].mxu0 %v1841
      %v2042 = vpop.f32.mrb[0].mxu0
      %v2043 = vadd.f32 0.0, %v2042
      %v2044 = vpop.f32.mrb[0].mxu0
      %2045 = vmatprep.mubr.f32.mxu0 0.0
      %2046 = vmatmul.mubr.f32.gmra.mrb[0].mxu0 %v1844
      %v2047 = vpop.f32.mrb[0].mxu0
      %v2048 = vadd.f32 0.0, %v2047
      %v2049 = vpop.f32.mrb[0].mxu0
      %2050 = vmatprep.mubr.f32.mxu0 0.0
      %2051 = vmatmul.mubr.f32.gmra.mrb[0].mxu0 %v1847
      %v2052 = vpop.f32.mrb[0].mxu0
      %v2053 = vadd.f32 0.0, %v2052
      %v2054 = vpop.f32.mrb[0].mxu0
      %2055 = vmatprep.mubr.f32.mxu0 0.0
      %2056 = vmatmul.mubr.f32.gmra.mrb[0].mxu0 %v1850
      %v2057 = vpop.f32.mrb[0].mxu0
      %v2058 = vadd.f32 0.0, %v2057
      %v2059 = vpop.f32.mrb[0].mxu0
      %2060 = vmatprep.mubr.f32.mxu0 0.0
      %2061 = vmatmul.mubr.f32.gmra.mrb[0].mxu0 %v1853
      %v2062 = vpop.f32.mrb[0].mxu0
      %v2063 = vadd.f32 0.0, %v2062
      %v2064 = vpop.f32.mrb[0].mxu0
      %2065 = vmatprep.mubr.f32.mxu0 0.0
      %2066 = vmatmul.mubr.f32.gmra.mrb[0].mxu0 %v1856
      %v2067 = vpop.f32.mrb[0].mxu0
      %v2068 = vadd.f32 0.0, %v2067
      %v2069 = vpop.f32.mrb[0].mxu0
      %2070 = vmatprep.mubr.f32.mxu0 0.0
      %2071 = vmatmul.mubr.f32.gmra.mrb[0].mxu0 %v1859
      %v2072 = vpop.f32.mrb[0].mxu0
      %v2073 = vadd.f32 0.0, %v2072
      %v2074 = vpop.f32.mrb[0].mxu0
      %2075 = vmatprep.mubr.f32.mxu0 0.0
      %2076 = vmatmul.mubr.f32.gmra.mrb[0].mxu0 %v1862
      %v2077 = vpop.f32.mrb[0].mxu0
      %v2078 = vadd.f32 0.0, %v2077
      %v2079 = vpop.f32.mrb[0].mxu0
      %2080 = vmatprep.mubr.f32.mxu0 0.0
      %2081 = vmatmul.mubr.f32.gmra.mrb[0].mxu0 %v1865
      %v2082 = vpop.f32.mrb[0].mxu0
      %v2083 = vadd.f32 0.0, %v2082
      %v2084 = vpop.f32.mrb[0].mxu0
      %2085 = vmatprep.mubr.f32.mxu0 0.0
      %2086 = vmatmul.mubr.f32.gmra.mrb[0].mxu0 %v1868
      %v2087 = vpop.f32.mrb[0].mxu0
      %v2088 = vadd.f32 0.0, %v2087
      %v2089 = vpop.f32.mrb[0].mxu0
      %2090 = vmatprep.mubr.f32.mxu0 0.0
      %2091 = vmatmul.mubr.f32.gmra.mrb[0].mxu0 %v1871
      %v2092 = vpop.f32.mrb[0].mxu0
      %v2093 = vadd.f32 0.0, %v2092
      %v2094 = vpop.f32.mrb[0].mxu0
      %2095 = vmatprep.mubr.f32.mxu0 0.0
      %2096 = vmatmul.mubr.f32.gmra.mrb[0].mxu0 %v1874
      %v2097 = vpop.f32.mrb[0].mxu0
      %v2098 = vadd.f32 0.0, %v2097
      %v2099 = vpop.f32.mrb[0].mxu0
      %2100 = vmatprep.mubr.f32.mxu0 0.0
      %2101 = vmatmul.mubr.f32.gmra.mrb[0].mxu0 %v1877
      %v2102 = vpop.f32.mrb[0].mxu0
      %v2103 = vadd.f32 0.0, %v2102
      %v2104 = vpop.f32.mrb[0].mxu0
      %2105 = vmatprep.mubr.f32.mxu0 0.0
      %2106 = vmatmul.mubr.f32.gmra.mrb[0].mxu0 %v1880
      %v2107 = vpop.f32.mrb[0].mxu0
      %v2108 = vadd.f32 0.0, %v2107
      %v2109 = vpop.f32.mrb[0].mxu0
      %2110 = vdwg.mxu0
      // Predicated region
      $region41: #{bottleneck_forward.5} parent=35 // pred_check
        %p2111 = pneg %p365
      $region42: #{bottleneck_forward.5} parent=35 // pred_check_branch
        %2113 = sbr.rel (%p2111) target = $region44
      $region43: #{bottleneck_forward.5} parent=35 // pred_region
        %vm2114 = vcmask 25600
        %2115 = vst.msk [vmem:[%s5] sm:$0x3] %vm2114, 0.0
      $region44: #{bottleneck_forward.5} parent=35 // pred_fallthru
        _
      %v2116 = vld [vmem:[%s5] sm:$0x3]
      %v2117 = vsel %vm426, %v1953, 0.0
      %v2118 = vsel %vm426, %v1958, 0.0
      %v2119 = vadd.f32 %v2117, %v2118
      %v2120 = vsel %vm426, %v1963, 0.0
      %v2121 = vadd.f32 %v2119, %v2120
      %v2122 = vsel %vm426, %v1968, 0.0
      %v2123 = vadd.f32 %v2121, %v2122
      %v2124 = vsel %vm426, %v1973, 0.0
      %v2125 = vadd.f32 %v2123, %v2124
      %v2126 = vsel %vm426, %v1978, 0.0
      %v2127 = vadd.f32 %v2125, %v2126
      %v2128 = vsel %vm426, %v1983, 0.0
      %v2129 = vadd.f32 %v2127, %v2128
      %v2130 = vsel %vm426, %v1988, 0.0
      %v2131 = vadd.f32 %v2129, %v2130
      %v2132 = vsel %vm426, %v1993, 0.0
      %v2133 = vadd.f32 %v2131, %v2132
      %v2134 = vsel %vm426, %v1998, 0.0
      %v2135 = vadd.f32 %v2133, %v2134
      %v2136 = vsel %vm426, %v2003, 0.0
      %v2137 = vadd.f32 %v2135, %v2136
      %v2138 = vsel %vm426, %v2008, 0.0
      %v2139 = vadd.f32 %v2137, %v2138
      %v2140 = vsel %vm426, %v2013, 0.0
      %v2141 = vadd.f32 %v2139, %v2140
      %v2142 = vsel %vm426, %v2018, 0.0
      %v2143 = vadd.f32 %v2141, %v2142
      %v2144 = vsel %vm426, %v2023, 0.0
      %v2145 = vadd.f32 %v2143, %v2144
      %v2146 = vsel %vm426, %v2028, 0.0
      %v2147 = vadd.f32 %v2145, %v2146
      %v2148 = vsel %vm426, %v2033, 0.0
      %v2149 = vadd.f32 %v2147, %v2148
      %v2150 = vsel %vm426, %v2038, 0.0
      %v2151 = vadd.f32 %v2149, %v2150
      %v2152 = vsel %vm426, %v2043, 0.0
      %v2153 = vadd.f32 %v2151, %v2152
      %v2154 = vsel %vm426, %v2048, 0.0
      %v2155 = vadd.f32 %v2153, %v2154
      %v2156 = vsel %vm426, %v2053, 0.0
      %v2157 = vadd.f32 %v2155, %v2156
      %v2158 = vsel %vm426, %v2058, 0.0
      %v2159 = vadd.f32 %v2157, %v2158
      %v2160 = vsel %vm426, %v2063, 0.0
      %v2161 = vadd.f32 %v2159, %v2160
      %v2162 = vsel %vm426, %v2068, 0.0
      %v2163 = vadd.f32 %v2161, %v2162
      %v2164 = vsel %vm426, %v2073, 0.0
      %v2165 = vadd.f32 %v2163, %v2164
      %v2166 = vsel %vm426, %v2078, 0.0
      %v2167 = vadd.f32 %v2165, %v2166
      %v2168 = vsel %vm426, %v2083, 0.0
      %v2169 = vadd.f32 %v2167, %v2168
      %v2170 = vsel %vm426, %v2088, 0.0
      %v2171 = vadd.f32 %v2169, %v2170
      %v2172 = vsel %vm426, %v2093, 0.0
      %v2173 = vadd.f32 %v2171, %v2172
      %v2174 = vsel %vm426, %v2098, 0.0
      %v2175 = vadd.f32 %v2173, %v2174
      %v2176 = vsel %vm426, %v2103, 0.0
      %v2177 = vadd.f32 %v2175, %v2176
      %v2178 = vsel %vm426, %v2108, 0.0
      %v2179 = vadd.f32 %v2177, %v2178
      %v2180 = vrot.slane %v2179, 4
      %v2181 = vadd.f32 %v2179, %v2180
      %v2182 = vrot.slane %v2181, 2
      %v2183 = vadd.f32 %v2181, %v2182
      %v2184 = vrot.slane %v2183, 1
      %v2185 = vadd.f32 %v2183, %v2184
      %v2186 = vmul.f32 %v1953, %v1953
      %v2187 = vmul.f32 %v1958, %v1958
      %v2188 = vmul.f32 %v1963, %v1963
      %v2189 = vmul.f32 %v1968, %v1968
      %v2190 = vmul.f32 %v1973, %v1973
      %v2191 = vmul.f32 %v1978, %v1978
      %v2192 = vmul.f32 %v1983, %v1983
      %v2193 = vmul.f32 %v1988, %v1988
      %v2194 = vmul.f32 %v1993, %v1993
      %v2195 = vmul.f32 %v1998, %v1998
      %v2196 = vmul.f32 %v2003, %v2003
      %v2197 = vmul.f32 %v2008, %v2008
      %v2198 = vmul.f32 %v2013, %v2013
      %v2199 = vmul.f32 %v2018, %v2018
      %v2200 = vmul.f32 %v2023, %v2023
      %v2201 = vmul.f32 %v2028, %v2028
      %v2202 = vmul.f32 %v2033, %v2033
      %v2203 = vmul.f32 %v2038, %v2038
      %v2204 = vmul.f32 %v2043, %v2043
      %v2205 = vmul.f32 %v2048, %v2048
      %v2206 = vmul.f32 %v2053, %v2053
      %v2207 = vmul.f32 %v2058, %v2058
      %v2208 = vmul.f32 %v2063, %v2063
      %v2209 = vmul.f32 %v2068, %v2068
      %v2210 = vmul.f32 %v2073, %v2073
      %v2211 = vmul.f32 %v2078, %v2078
      %v2212 = vmul.f32 %v2083, %v2083
      %v2213 = vmul.f32 %v2088, %v2088
      %v2214 = vmul.f32 %v2093, %v2093
      %v2215 = vmul.f32 %v2098, %v2098
      %v2216 = vmul.f32 %v2103, %v2103
      %v2217 = vmul.f32 %v2108, %v2108
      %v2218 = vsel %vm426, %v2186, 0.0
      %v2219 = vsel %vm426, %v2187, 0.0
      %v2220 = vadd.f32 %v2218, %v2219
      %v2221 = vsel %vm426, %v2188, 0.0
      %v2222 = vadd.f32 %v2220, %v2221
      %v2223 = vsel %vm426, %v2189, 0.0
      %v2224 = vadd.f32 %v2222, %v2223
      %v2225 = vsel %vm426, %v2190, 0.0
      %v2226 = vadd.f32 %v2224, %v2225
      %v2227 = vsel %vm426, %v2191, 0.0
      %v2228 = vadd.f32 %v2226, %v2227
      %v2229 = vsel %vm426, %v2192, 0.0
      %v2230 = vadd.f32 %v2228, %v2229
      %v2231 = vsel %vm426, %v2193, 0.0
      %v2232 = vadd.f32 %v2230, %v2231
      %v2233 = vsel %vm426, %v2194, 0.0
      %v2234 = vadd.f32 %v2232, %v2233
      %v2235 = vsel %vm426, %v2195, 0.0
      %v2236 = vadd.f32 %v2234, %v2235
      %v2237 = vsel %vm426, %v2196, 0.0
      %v2238 = vadd.f32 %v2236, %v2237
      %v2239 = vsel %vm426, %v2197, 0.0
      %v2240 = vadd.f32 %v2238, %v2239
      %v2241 = vsel %vm426, %v2198, 0.0
      %v2242 = vadd.f32 %v2240, %v2241
      %v2243 = vsel %vm426, %v2199, 0.0
      %v2244 = vadd.f32 %v2242, %v2243
      %v2245 = vsel %vm426, %v2200, 0.0
      %v2246 = vadd.f32 %v2244, %v2245
      %v2247 = vsel %vm426, %v2201, 0.0
      %v2248 = vadd.f32 %v2246, %v2247
      %v2249 = vsel %vm426, %v2202, 0.0
      %v2250 = vadd.f32 %v2248, %v2249
      %v2251 = vsel %vm426, %v2203, 0.0
      %v2252 = vadd.f32 %v2250, %v2251
      %v2253 = vsel %vm426, %v2204, 0.0
      %v2254 = vadd.f32 %v2252, %v2253
      %v2255 = vsel %vm426, %v2205, 0.0
      %v2256 = vadd.f32 %v2254, %v2255
      %v2257 = vsel %vm426, %v2206, 0.0
      %v2258 = vadd.f32 %v2256, %v2257
      %v2259 = vsel %vm426, %v2207, 0.0
      %v2260 = vadd.f32 %v2258, %v2259
      %v2261 = vsel %vm426, %v2208, 0.0
      %v2262 = vadd.f32 %v2260, %v2261
      %v2263 = vsel %vm426, %v2209, 0.0
      %v2264 = vadd.f32 %v2262, %v2263
      %v2265 = vsel %vm426, %v2210, 0.0
      %v2266 = vadd.f32 %v2264, %v2265
      %v2267 = vsel %vm426, %v2211, 0.0
      %v2268 = vadd.f32 %v2266, %v2267
      %v2269 = vsel %vm426, %v2212, 0.0
      %v2270 = vadd.f32 %v2268, %v2269
      %v2271 = vsel %vm426, %v2213, 0.0
      %v2272 = vadd.f32 %v2270, %v2271
      %v2273 = vsel %vm426, %v2214, 0.0
      %v2274 = vadd.f32 %v2272, %v2273
      %v2275 = vsel %vm426, %v2215, 0.0
      %v2276 = vadd.f32 %v2274, %v2275
      %v2277 = vsel %vm426, %v2216, 0.0
      %v2278 = vadd.f32 %v2276, %v2277
      %v2279 = vsel %vm426, %v2217, 0.0
      %v2280 = vadd.f32 %v2278, %v2279
      %v2281 = vrot.slane %v2280, 4
      %v2282 = vadd.f32 %v2280, %v2281
      %v2283 = vrot.slane %v2282, 2
      %v2284 = vadd.f32 %v2282, %v2283
      %v2285 = vrot.slane %v2284, 1
      %v2286 = vadd.f32 %v2284, %v2285
      %vm2287 = vcmask 1040384
      %v2288 = vsel %vm2287, %v2185, %v2286
      %v2289 = vadd.f32 %v2116, %v2288
      %vm2290 = vcmask 25600
      %2291 = vst.msk [vmem:[%s5] sm:$0x3] %vm2290, %v2289
      %2292 = vst.msk [vmem:[%s222] sm:$0xff] %vm426, %v1953
      %2293 = vst.msk [vmem:[%s222 + $0x8] sm:$0xff] %vm426, %v1958
      %2294 = vst.msk [vmem:[%s222 + $0x10] sm:$0xff] %vm426, %v1963
      %2295 = vst.msk [vmem:[%s222 + $0x18] sm:$0xff] %vm426, %v1968
      %2296 = vst.msk [vmem:[%s222 + $0x20] sm:$0xff] %vm426, %v1973
      %2297 = vst.msk [vmem:[%s222 + $0x28] sm:$0xff] %vm426, %v1978
      %2298 = vst.msk [vmem:[%s222 + $0x30] sm:$0xff] %vm426, %v1983
      %2299 = vst.msk [vmem:[%s222 + $0x38] sm:$0xff] %vm426, %v1988
      %2300 = vst.msk [vmem:[%s222 + $0x40] sm:$0xff] %vm426, %v1993
      %2301 = vst.msk [vmem:[%s222 + $0x48] sm:$0xff] %vm426, %v1998
      %2302 = vst.msk [vmem:[%s222 + $0x50] sm:$0xff] %vm426, %v2003
      %2303 = vst.msk [vmem:[%s222 + $0x58] sm:$0xff] %vm426, %v2008
      %2304 = vst.msk [vmem:[%s222 + $0x60] sm:$0xff] %vm426, %v2013
      %2305 = vst.msk [vmem:[%s222 + $0x68] sm:$0xff] %vm426, %v2018
      %2306 = vst.msk [vmem:[%s222 + $0x70] sm:$0xff] %vm426, %v2023
      %2307 = vst.msk [vmem:[%s222 + $0x78] sm:$0xff] %vm426, %v2028
      %2308 = vst.msk [vmem:[%s222 + $0x80] sm:$0xff] %vm426, %v2033
      %2309 = vst.msk [vmem:[%s222 + $0x88] sm:$0xff] %vm426, %v2038
      %2310 = vst.msk [vmem:[%s222 + $0x90] sm:$0xff] %vm426, %v2043
      %2311 = vst.msk [vmem:[%s222 + $0x98] sm:$0xff] %vm426, %v2048
      %2312 = vst.msk [vmem:[%s222 + $0xa0] sm:$0xff] %vm426, %v2053
      %2313 = vst.msk [vmem:[%s222 + $0xa8] sm:$0xff] %vm426, %v2058
      %2314 = vst.msk [vmem:[%s222 + $0xb0] sm:$0xff] %vm426, %v2063
      %2315 = vst.msk [vmem:[%s222 + $0xb8] sm:$0xff] %vm426, %v2068
      %2316 = vst.msk [vmem:[%s222 + $0xc0] sm:$0xff] %vm426, %v2073
      %2317 = vst.msk [vmem:[%s222 + $0xc8] sm:$0xff] %vm426, %v2078
      %2318 = vst.msk [vmem:[%s222 + $0xd0] sm:$0xff] %vm426, %v2083
      %2319 = vst.msk [vmem:[%s222 + $0xd8] sm:$0xff] %vm426, %v2088
      %2320 = vst.msk [vmem:[%s222 + $0xe0] sm:$0xff] %vm426, %v2093
      %2321 = vst.msk [vmem:[%s222 + $0xe8] sm:$0xff] %vm426, %v2098
      %2322 = vst.msk [vmem:[%s222 + $0xf0] sm:$0xff] %vm426, %v2103
      %2323 = vst.msk [vmem:[%s222 + $0xf8] sm:$0xff] %vm426, %v2108
      %p2324 = scmp.lt.s32.totalorder %s17, 1
      %s2325 = scalar_select %p2324, %s17, 1
      %s2326 = smul.addr %s2325, 32
      %s2327 = smul.addr %s2326, 8
      %s2328 = scalar_lea.vmem %s4, %s2327
      // Predicated region
      $region45: #{bottleneck_forward.5} parent=35 // pred_check
        %p2329 = pneg %p124
      $region46: #{bottleneck_forward.5} parent=35 // pred_check_branch
        %2331 = sbr.rel (%p2329) target = $region48
      $region47: #{bottleneck_forward.5} parent=35 // pred_region
        _
      $region48: #{bottleneck_forward.5} parent=35 // pred_fallthru
        _
      // Predicated region
      $region49: #{bottleneck_forward.5} parent=35 // pred_check
        %p2332 = pneg %p145
      $region50: #{bottleneck_forward.5} parent=35 // pred_check_branch
        %2334 = sbr.rel (%p2332) target = $region52
      $region51: #{bottleneck_forward.5} parent=35 // pred_region
        _
      $region52: #{bottleneck_forward.5} parent=35 // pred_fallthru
        _
      // Predicated region
      $region53: #{bottleneck_forward.5} parent=35 // pred_check
        %p2335 = pneg %p145
      $region54: #{bottleneck_forward.5} parent=35 // pred_check_branch
        %2337 = sbr.rel (%p2335) target = $region56
      $region55: #{bottleneck_forward.5} parent=35 // pred_region
        _
      $region56: #{bottleneck_forward.5} parent=35 // pred_fallthru
        _
    $region36: #{bottleneck_forward.5} parent=5 // pred_fallthru
      _
    %p2338 = scmp.le.s32.totalorder 2, %s12
    // Predicated region
    $region57: #{bottleneck_forward.5} parent=5 // pred_check
      %p2339 = pneg %p2338
    $region58: #{bottleneck_forward.5} parent=5 // pred_check_branch
      %2341 = sbr.rel (%p2339) target = $region60
    $region59: #{bottleneck_forward.5} parent=5 // pred_region
      %s2342 = ssub.s32 %s12, 2
      // Predicated region
      $region61: #{bottleneck_forward.5} parent=59 // pred_check
        %p2343 = pneg %p130
      $region62: #{bottleneck_forward.5} parent=59 // pred_check_branch
        %2345 = sbr.rel (%p2343) target = $region64
      $region63: #{bottleneck_forward.5} parent=59 // pred_region
        %p2346 = scmp.lt.s32.totalorder %s18, 1
        %s2347 = scalar_select %p2346, %s18, 1
        %s2348 = smul.addr %s2347, 32
        %s2349 = smul.addr %s2348, 8
        %s2350 = scalar_lea.vmem %s4, %s2349
      $region64: #{bottleneck_forward.5} parent=59 // pred_fallthru
        _
    $region60: #{bottleneck_forward.5} parent=5 // pred_fallthru
      _
  $region6: #{bottleneck_forward.5} parent=0 // loop_footer
    %s16 = sadd.s32 1, %s12
  $region7: #{bottleneck_forward.5} parent=0 // loop_footer_branch
    %11 = sbr.rel target = $region3
  $region8: #{bottleneck_forward.5} parent=0 // loop_exit
    _

</llo_original>
